<compile_context>
chip_gen: v7x
topology: tpu7x:2x2x1
jax: 0.10.0
libtpu: 0.0.40
codegen_flags: <defaults>
</compile_context>

<pallas_src>
import jax
import jax.numpy as jnp
from jax.experimental import pallas as pl
from jax.experimental.pallas import tpu as pltpu


# ----------------------------------------------------------------------------
# Kernel 1: fused single-layer bidirectional LSTM (batch-major).
# ----------------------------------------------------------------------------
def bilstm_kernel(x_ref, wih_f_ref, whh_f_ref, b_f_ref,
                  wih_b_ref, whh_b_ref, b_b_ref, h0_ref, c0_ref, out_ref):
    Bb, L, E = x_ref.shape
    H = h0_ref.shape[-1]
    H4 = 4 * H
    f32 = jnp.float32

    # Hoisted input projection: one big (Bb*L, E) x (E, 4H) matmul per direction,
    # with the (b_ih + b_hh) bias folded in (no per-step broadcast in the loop).
    x_flat = x_ref[...].reshape(Bb * L, E)
    xg_f = (jnp.dot(x_flat, wih_f_ref[...], preferred_element_type=f32)
            + b_f_ref[...]).reshape(Bb, L, H4)
    xg_b = (jnp.dot(x_flat, wih_b_ref[...], preferred_element_type=f32)
            + b_b_ref[...]).reshape(Bb, L, H4)

    whh_f = whh_f_ref[...]
    whh_b = whh_b_ref[...]

    def cell(pre, h, c):
        # pre already contains x@Wih + bias; gate columns are pre-permuted to
        # (i, f, o | g): one sigmoid over a contiguous 3H block, one tanh over H.
        gates = pre[0] + jnp.dot(h, pre[1], preferred_element_type=f32)
        sig = jax.nn.sigmoid(gates[:, :3 * H])
        i = sig[:, :H]
        f = sig[:, H:2 * H]
        o = sig[:, 2 * H:3 * H]
        g = jnp.tanh(gates[:, 3 * H:])
        c_new = f * c + i * g
        h_new = o * jnp.tanh(c_new)
        return h_new, c_new

    h_f = h0_ref[:, 0, :]
    c_f = c0_ref[:, 0, :]
    h_b = h0_ref[:, 1, :]
    c_b = c0_ref[:, 1, :]

    # Fused fwd/bwd recurrence, fully unrolled (L is a small static length) so
    # the scheduler can interleave the two independent directions. All stores
    # use static indices into the fused batch-major (Bb, L, 2H) output.
    for t in range(L):
        s = L - 1 - t
        h_f, c_f = cell((xg_f[:, t, :], whh_f), h_f, c_f)
        h_b, c_b = cell((xg_b[:, s, :], whh_b), h_b, c_b)
        out_ref[:, t, :H] = h_f
        out_ref[:, s, H:] = h_b


# ----------------------------------------------------------------------------
# Kernel 2: self-attention + label attention + adaptive fusion
#           (a block of batch rows per grid step).
# ----------------------------------------------------------------------------
def lwa_attention_kernel(out_ref, lab_ref, w1_ref, b1_ref, w2_ref, b2_ref,
                         wg1_ref, bg1_ref, wg2_ref, bg2_ref, tok_ref):
    Bb, L, H2 = out_ref.shape
    H = H2 // 2
    f32 = jnp.float32

    outs = out_ref[...]          # (Bb, L, 2H)
    lab = lab_ref[...]           # (C, H)
    wg1 = wg1_ref[...]           # (2H, 1)
    wg2 = wg2_ref[...]           # (2H, 1)
    bg1 = bg1_ref[...]           # (1, 1)
    bg2 = bg2_ref[...]           # (1, 1)

    # linear_first / linear_second over all Bb*L rows at once (amortizes the
    # grid-step overhead and gives the MXU a taller M dimension).
    flat = outs.reshape(Bb * L, H2)
    s = jnp.tanh(jnp.dot(flat, w1_ref[...], preferred_element_type=f32) + b1_ref[...])
    s = jnp.dot(s, w2_ref[...], preferred_element_type=f32) + b2_ref[...]     # (Bb*L, C)
    s3 = s.reshape(Bb, L, Ck := s.shape[-1])

    # Per-row attention math (small static inner loop over the batch block).
    for j in range(Bb):
        outs_j = outs[j]                                  # (L, 2H)
        sm = jax.nn.softmax(s3[j], axis=0)                # softmax over sequence dim
        self_att = jax.lax.dot_general(sm, outs_j, (((0,), (0,)), ((), ())),
                                       preferred_element_type=f32)            # (C, 2H)
        h1 = outs_j[:, :H]                                # (L, H)
        h2 = outs_j[:, H:]                                # (L, H)
        m1 = jax.lax.dot_general(lab, h1, (((1,), (1,)), ((), ())),
                                 preferred_element_type=f32)                  # (C, L)
        m2 = jax.lax.dot_general(lab, h2, (((1,), (1,)), ((), ())),
                                 preferred_element_type=f32)                  # (C, L)
        la1 = jnp.dot(m1, h1, preferred_element_type=f32)                     # (C, H)
        la2 = jnp.dot(m2, h2, preferred_element_type=f32)                     # (C, H)

        # Adaptive fusion. label_att is never materialized/concatenated: its
        # gating logit is the sum of two half-width dots, and tok is written
        # directly into the two halves of the output block.
        g1 = jax.nn.sigmoid(jnp.dot(la1, wg1[:H], preferred_element_type=f32)
                            + jnp.dot(la2, wg1[H:], preferred_element_type=f32)
                            + bg1)                                            # (C, 1)
        g2 = jax.nn.sigmoid(jnp.dot(self_att, wg2, preferred_element_type=f32)
                            + bg2)                                            # (C, 1)
        a1 = g1 / (g1 + g2)
        a2 = 1.0 - a1
        tok_ref[j, :, :H] = a1 * la1 + a2 * self_att[:, :H]
        tok_ref[j, :, H:] = a1 * la2 + a2 * self_att[:, H:]


# ----------------------------------------------------------------------------
# Parameter init (deterministic, synthetic) and forward wrapper.
# ----------------------------------------------------------------------------
def init_params(key, vocab_size, emb_dim, lstm_hdim, d_a, token_classes):
    ks = jax.random.split(key, 16)

    def rnd(k, shape, scale=0.1):
        return scale * jax.random.normal(k, shape, dtype=jnp.float32)

    H = lstm_hdim
    return dict(
        embeddings=rnd(ks[0], (vocab_size, emb_dim), 1.0),
        token_label_embeddings=rnd(ks[1], (token_classes, H), 1.0),
        # LSTM weights, pre-transposed to (in, 4H), PyTorch gate order (i,f,g,o);
        # combined bias b_ih + b_hh.
        wih_f=rnd(ks[2], (emb_dim, 4 * H)),
        whh_f=rnd(ks[3], (H, 4 * H)),
        b_f=rnd(ks[4], (1, 4 * H)),
        wih_b=rnd(ks[5], (emb_dim, 4 * H)),
        whh_b=rnd(ks[6], (H, 4 * H)),
        b_b=rnd(ks[7], (1, 4 * H)),
        # linear_first (2H -> d_a), linear_second (d_a -> C), stored transposed.
        w1=rnd(ks[8], (2 * H, d_a)),
        b1=rnd(ks[9], (1, d_a)),
        w2=rnd(ks[10], (d_a, token_classes)),
        b2=rnd(ks[11], (1, token_classes)),
        # weight1 / weight2 gating linears (2H -> 1), stored transposed.
        wg1=rnd(ks[12], (2 * H, 1)),
        bg1=rnd(ks[13], (1, 1)),
        wg2=rnd(ks[14], (2 * H, 1)),
        bg2=rnd(ks[15], (1, 1)),
    )


def _reorder_gates(w):
    """Permute LSTM gate columns from PyTorch (i, f, g, o) to (i, f, o, g)."""
    H = w.shape[-1] // 4
    return jnp.concatenate([w[..., :2 * H], w[..., 3 * H:], w[..., 2 * H:3 * H]],
                           axis=-1)


def _pick_block(n, target):
    bb = max(1, min(n, target))
    while n % bb:
        bb -= 1
    return bb


def label_word_attention_forward(params, x_tokens, h0, c0):
    """x_tokens: (B, L) int32; h0/c0: (2, B, H). Returns tok (B,C,2H), pred (B,C)."""
    B, L = x_tokens.shape
    H = params['whh_f'].shape[0]
    H2 = 2 * H
    E = params['embeddings'].shape[1]
    C = params['token_label_embeddings'].shape[0]
    d_a = params['w1'].shape[1]

    emb = params['embeddings'][x_tokens]          # (B, L, E) gather (plain-JAX glue)
    # embedding_dropout: identity (deterministic / eval mode).

    # Gate-reordered weights (i,f,o,g) -> contiguous sigmoid block inside the kernel.
    wih_f = _reorder_gates(params['wih_f'])
    whh_f = _reorder_gates(params['whh_f'])
    b_f = _reorder_gates(params['b_f'])
    wih_b = _reorder_gates(params['wih_b'])
    whh_b = _reorder_gates(params['whh_b'])
    b_b = _reorder_gates(params['b_b'])

    # Batch-major initial states (B, 2, H) so batch tiling of the grid is clean.
    h0_bm = jnp.transpose(h0, (1, 0, 2))
    c0_bm = jnp.transpose(c0, (1, 0, 2))

    # Batch tile for the LSTM: "parallel" grid axis lets v7x's 2 TensorCores
    # each take a block; on v5e/v6e the grid just iterates.
    bb_lstm = _pick_block(B, max(1, B // 2))
    vmem_cp = pltpu.CompilerParams(
        dimension_semantics=("parallel",),
        vmem_limit_bytes=32 * 1024 * 1024,   # explicit scoped-VMEM limit (safe incl. v7x)
    )

    # Fused batch-major (B, L, 2H) output: no wrapper transpose/concat needed.
    outputs = pl.pallas_call(
        bilstm_kernel,
        grid=(B // bb_lstm,),
        in_specs=[
            pl.BlockSpec((bb_lstm, L, E), lambda b: (b, 0, 0)),     # embeddings
            pl.BlockSpec((E, 4 * H), lambda b: (0, 0)),             # Wih fwd
            pl.BlockSpec((H, 4 * H), lambda b: (0, 0)),             # Whh fwd
            pl.BlockSpec((1, 4 * H), lambda b: (0, 0)),             # bias fwd
            pl.BlockSpec((E, 4 * H), lambda b: (0, 0)),             # Wih bwd
            pl.BlockSpec((H, 4 * H), lambda b: (0, 0)),             # Whh bwd
            pl.BlockSpec((1, 4 * H), lambda b: (0, 0)),             # bias bwd
            pl.BlockSpec((bb_lstm, 2, H), lambda b: (b, 0, 0)),     # h0 (B,2,H)
            pl.BlockSpec((bb_lstm, 2, H), lambda b: (b, 0, 0)),     # c0 (B,2,H)
        ],
        out_specs=pl.BlockSpec((bb_lstm, L, H2), lambda b: (b, 0, 0)),
        out_shape=jax.ShapeDtypeStruct((B, L, H2), jnp.float32),
        compiler_params=vmem_cp,
    )(emb, wih_f, whh_f, b_f, wih_b, whh_b, b_b, h0_bm, c0_bm)

    # `abstract` from the reference is undefined -> treated as zero bias.

    bb_att = _pick_block(B, 8)   # block several batch rows per grid step
    tok = pl.pallas_call(
        lwa_attention_kernel,
        grid=(B // bb_att,),
        in_specs=[
            pl.BlockSpec((bb_att, L, H2), lambda b: (b, 0, 0)),     # lstm outputs
            pl.BlockSpec((C, H), lambda b: (0, 0)),                 # label embeddings
            pl.BlockSpec((H2, d_a), lambda b: (0, 0)),              # linear_first W^T
            pl.BlockSpec((1, d_a), lambda b: (0, 0)),               # linear_first b
            pl.BlockSpec((d_a, C), lambda b: (0, 0)),               # linear_second W^T
            pl.BlockSpec((1, C), lambda b: (0, 0)),                 # linear_second b
            pl.BlockSpec((H2, 1), lambda b: (0, 0)),                # weight1 W^T
            pl.BlockSpec((1, 1), lambda b: (0, 0)),                 # weight1 b
            pl.BlockSpec((H2, 1), lambda b: (0, 0)),                # weight2 W^T
            pl.BlockSpec((1, 1), lambda b: (0, 0)),                 # weight2 b
        ],
        out_specs=pl.BlockSpec((bb_att, C, H2), lambda b: (b, 0, 0)),
        out_shape=jax.ShapeDtypeStruct((B, C, H2), jnp.float32),
        compiler_params=vmem_cp,
    )(outputs, params['token_label_embeddings'],
      params['w1'], params['b1'], params['w2'], params['b2'],
      params['wg1'], params['bg1'], params['wg2'], params['bg2'])

    # pred computed in the wrapper (avoids a (B, C, 1) masked-store kernel output).
    pred = jax.nn.sigmoid(jnp.sum(tok, axis=-1) / C)
    return tok, pred


# ----------------------------------------------------------------------------
# Pure-JAX reference (same math, original gate order) for a correctness check.
# ----------------------------------------------------------------------------
def reference_forward(params, x_tokens, h0, c0):
    emb = params['embeddings'][x_tokens]
    H = params['whh_f'].shape[0]

    def lstm_scan(wih, whh, b, h0d, c0d, xs):
        def step(carry, x_t):
            h, c = carry
            gates = x_t @ wih + h @ whh + b
            i = jax.nn.sigmoid(gates[:, :H])
            f = jax.nn.sigmoid(gates[:, H:2 * H])
            g = jnp.tanh(gates[:, 2 * H:3 * H])
            o = jax.nn.sigmoid(gates[:, 3 * H:])
            c = f * c + i * g
            h = o * jnp.tanh(c)
            return (h, c), h
        _, hs = jax.lax.scan(step, (h0d, c0d), xs)
        return hs

    xs = jnp.transpose(emb, (1, 0, 2))
    hs_f = lstm_scan(params['wih_f'], params['whh_f'], params['b_f'], h0[0], c0[0], xs)
    hs_b = lstm_scan(params['wih_b'], params['whh_b'], params['b_b'], h0[1], c0[1], xs[::-1])[::-1]
    outputs = jnp.transpose(jnp.concatenate([hs_f, hs_b], axis=-1), (1, 0, 2))

    lab = params['token_label_embeddings']
    C = lab.shape[0]
    s = jnp.tanh(outputs @ params['w1'] + params['b1'])
    s = s @ params['w2'] + params['b2']
    s = jax.nn.softmax(s, axis=1)
    self_att = jnp.einsum('blc,bld->bcd', s, outputs)
    h1 = outputs[:, :, :H]
    h2 = outputs[:, :, H:]
    m1 = jnp.einsum('ch,blh->bcl', lab, h1)
    m2 = jnp.einsum('ch,blh->bcl', lab, h2)
    label_att = jnp.concatenate([jnp.einsum('bcl,blh->bch', m1, h1),
                                 jnp.einsum('bcl,blh->bch', m2, h2)], axis=-1)
    w1 = jax.nn.sigmoid(label_att @ params['wg1'] + params['bg1'])
    w2 = jax.nn.sigmoid(self_att @ params['wg2'] + params['bg2'])
    w1 = w1 / (w1 + w2)
    w2 = 1.0 - w1
    tok = w1 * label_att + w2 * self_att
    pred = jax.nn.sigmoid(jnp.sum(tok, axis=2) / C)
    return tok, pred


if __name__ == "__main__":
    B, L = 4, 8
    emb_dim, lstm_hdim, d_a = 32, 16, 24
    vocab_size, token_classes = 50, 10

    key = jax.random.PRNGKey(0)
    k_params, k_x, k_h, k_c = jax.random.split(key, 4)
    params = init_params(k_params, vocab_size, emb_dim, lstm_hdim, d_a, token_classes)
    x_tokens = jax.random.randint(k_x, (B, L), 0, vocab_size, dtype=jnp.int32)
    # init_hidden in the reference draws random initial LSTM states (deterministic here).
    h0 = 0.1 * jax.random.normal(k_h, (2, B, lstm_hdim), dtype=jnp.float32)
    c0 = 0.1 * jax.random.normal(k_c, (2, B, lstm_hdim), dtype=jnp.float32)

    tok, pred = label_word_attention_forward(params, x_tokens, h0, c0)
    jax.block_until_ready((tok, pred))

    tok_ref, pred_ref = reference_forward(params, x_tokens, h0, c0)
    assert tok.shape == (B, token_classes, 2 * lstm_hdim)
    assert pred.shape == (B, token_classes)
    assert jnp.allclose(tok, tok_ref, atol=1e-4, rtol=1e-4)
    assert jnp.allclose(pred, pred_ref, atol=1e-4, rtol=1e-4)
    print("KERNEL_OK")
</pallas_src>

<mosaic_0001>
module attributes {stable_mosaic.version = 11 : i64} {
  func.func @bilstm_kernel(%arg0: i32, %arg1: memref<2x8x32xf32, #tpu.memory_space<vmem>>, %arg2: memref<32x64xf32, #tpu.memory_space<vmem>>, %arg3: memref<16x64xf32, #tpu.memory_space<vmem>>, %arg4: memref<1x64xf32, #tpu.memory_space<vmem>>, %arg5: memref<32x64xf32, #tpu.memory_space<vmem>>, %arg6: memref<16x64xf32, #tpu.memory_space<vmem>>, %arg7: memref<1x64xf32, #tpu.memory_space<vmem>>, %arg8: memref<2x2x16xf32, #tpu.memory_space<vmem>>, %arg9: memref<2x2x16xf32, #tpu.memory_space<vmem>>, %arg10: memref<2x8x32xf32, #tpu.memory_space<vmem>>) attributes {dimension_semantics = [#tpu.dimension_semantics<parallel>], iteration_bounds = array<i64: 2>, scalar_prefetch = 0 : i64, scratch_operands = 0 : i64, tpu.core_type = #tpu.core_type<tc>, window_params = [{transform_indices = @transform_0, window_bounds = array<i64: 2, 8, 32>}, {pipeline_mode = #tpu.pipeline_mode<synchronous>, transform_indices = @transform_1, window_bounds = array<i64: 32, 64>}, {pipeline_mode = #tpu.pipeline_mode<synchronous>, transform_indices = @transform_2, window_bounds = array<i64: 16, 64>}, {pipeline_mode = #tpu.pipeline_mode<synchronous>, transform_indices = @transform_3, window_bounds = array<i64: 1, 64>}, {pipeline_mode = #tpu.pipeline_mode<synchronous>, transform_indices = @transform_4, window_bounds = array<i64: 32, 64>}, {pipeline_mode = #tpu.pipeline_mode<synchronous>, transform_indices = @transform_5, window_bounds = array<i64: 16, 64>}, {pipeline_mode = #tpu.pipeline_mode<synchronous>, transform_indices = @transform_6, window_bounds = array<i64: 1, 64>}, {transform_indices = @transform_7, window_bounds = array<i64: 2, 2, 16>}, {transform_indices = @transform_8, window_bounds = array<i64: 2, 2, 16>}, {transform_indices = @transform_9, window_bounds = array<i64: 2, 8, 32>}]} {
    %c0 = arith.constant 0 : index
    %c0_0 = arith.constant 0 : index
    %c0_1 = arith.constant 0 : index
    %0 = vector.load %arg1[%c0, %c0_0, %c0_1] : memref<2x8x32xf32, #tpu.memory_space<vmem>>, vector<2x8x32xf32>
    %1 = vector.shape_cast %0 : vector<2x8x32xf32> to vector<16x32xf32>
    %c0_2 = arith.constant 0 : index
    %c0_3 = arith.constant 0 : index
    %2 = vector.load %arg2[%c0_2, %c0_3] : memref<32x64xf32, #tpu.memory_space<vmem>>, vector<32x64xf32>
    %cst = arith.constant dense<0.000000e+00> : vector<16x64xf32>
    %3 = tpu.matmul %1, %2, %cst {dimension_numbers = #tpu.dot_dimension_numbers<[1], [0], [0], [1], [0, 0, 1, 1], [], []>} : vector<16x32xf32>, vector<32x64xf32>, vector<16x64xf32> -> vector<16x64xf32>
    %c0_4 = arith.constant 0 : index
    %c0_5 = arith.constant 0 : index
    %4 = vector.load %arg4[%c0_4, %c0_5] : memref<1x64xf32, #tpu.memory_space<vmem>>, vector<1x64xf32>
    %5 = vector.broadcast %4 : vector<1x64xf32> to vector<16x64xf32>
    %6 = arith.addf %3, %5 : vector<16x64xf32>
    %7 = vector.shape_cast %6 : vector<16x64xf32> to vector<2x8x64xf32>
    %c0_6 = arith.constant 0 : index
    %c0_7 = arith.constant 0 : index
    %8 = vector.load %arg5[%c0_6, %c0_7] : memref<32x64xf32, #tpu.memory_space<vmem>>, vector<32x64xf32>
    %cst_8 = arith.constant dense<0.000000e+00> : vector<16x64xf32>
    %9 = tpu.matmul %1, %8, %cst_8 {dimension_numbers = #tpu.dot_dimension_numbers<[1], [0], [0], [1], [0, 0, 1, 1], [], []>} : vector<16x32xf32>, vector<32x64xf32>, vector<16x64xf32> -> vector<16x64xf32>
    %c0_9 = arith.constant 0 : index
    %c0_10 = arith.constant 0 : index
    %10 = vector.load %arg7[%c0_9, %c0_10] : memref<1x64xf32, #tpu.memory_space<vmem>>, vector<1x64xf32>
    %11 = vector.broadcast %10 : vector<1x64xf32> to vector<16x64xf32>
    %12 = arith.addf %9, %11 : vector<16x64xf32>
    %13 = vector.shape_cast %12 : vector<16x64xf32> to vector<2x8x64xf32>
    %c0_11 = arith.constant 0 : index
    %c0_12 = arith.constant 0 : index
    %14 = vector.load %arg3[%c0_11, %c0_12] : memref<16x64xf32, #tpu.memory_space<vmem>>, vector<16x64xf32>
    %c0_13 = arith.constant 0 : index
    %c0_14 = arith.constant 0 : index
    %15 = vector.load %arg6[%c0_13, %c0_14] : memref<16x64xf32, #tpu.memory_space<vmem>>, vector<16x64xf32>
    %c0_15 = arith.constant 0 : index
    %c0_16 = arith.constant 0 : index
    %c0_17 = arith.constant 0 : index
    %16 = vector.load %arg8[%c0_15, %c0_16, %c0_17] : memref<2x2x16xf32, #tpu.memory_space<vmem>>, vector<2x1x16xf32>
    %17 = vector.shape_cast %16 : vector<2x1x16xf32> to vector<2x16xf32>
    %c0_18 = arith.constant 0 : index
    %c0_19 = arith.constant 0 : index
    %c0_20 = arith.constant 0 : index
    %18 = vector.load %arg9[%c0_18, %c0_19, %c0_20] : memref<2x2x16xf32, #tpu.memory_space<vmem>>, vector<2x1x16xf32>
    %19 = vector.shape_cast %18 : vector<2x1x16xf32> to vector<2x16xf32>
    %c0_21 = arith.constant 0 : index
    %c1 = arith.constant 1 : index
    %c0_22 = arith.constant 0 : index
    %20 = vector.load %arg8[%c0_21, %c1, %c0_22] : memref<2x2x16xf32, #tpu.memory_space<vmem>>, vector<2x1x16xf32>
    %21 = vector.shape_cast %20 : vector<2x1x16xf32> to vector<2x16xf32>
    %c0_23 = arith.constant 0 : index
    %c1_24 = arith.constant 1 : index
    %c0_25 = arith.constant 0 : index
    %22 = vector.load %arg9[%c0_23, %c1_24, %c0_25] : memref<2x2x16xf32, #tpu.memory_space<vmem>>, vector<2x1x16xf32>
    %23 = vector.shape_cast %22 : vector<2x1x16xf32> to vector<2x16xf32>
    %24 = vector.extract_strided_slice %7 {offsets = [0, 0, 0], sizes = [2, 1, 64], strides = [1, 1, 1]} : vector<2x8x64xf32> to vector<2x1x64xf32>
    %25 = vector.shape_cast %24 : vector<2x1x64xf32> to vector<2x64xf32>
    %cst_26 = arith.constant dense<0.000000e+00> : vector<2x64xf32>
    %26 = tpu.matmul %17, %14, %cst_26 {dimension_numbers = #tpu.dot_dimension_numbers<[1], [0], [0], [1], [0, 0, 1, 1], [], []>} : vector<2x16xf32>, vector<16x64xf32>, vector<2x64xf32> -> vector<2x64xf32>
    %27 = arith.addf %25, %26 : vector<2x64xf32>
    %28 = vector.extract_strided_slice %27 {offsets = [0, 0], sizes = [2, 48], strides = [1, 1]} : vector<2x64xf32> to vector<2x48xf32>
    %29 = arith.negf %28 : vector<2x48xf32>
    %30 = math.exp %29 : vector<2x48xf32>
    %cst_27 = arith.constant 1.000000e+00 : f32
    %31 = vector.broadcast %cst_27 : f32 to vector<2x48xf32>
    %32 = arith.addf %31, %30 : vector<2x48xf32>
    %33 = arith.divf %31, %32 : vector<2x48xf32>
    %34 = vector.extract_strided_slice %33 {offsets = [0, 0], sizes = [2, 16], strides = [1, 1]} : vector<2x48xf32> to vector<2x16xf32>
    %35 = vector.extract_strided_slice %33 {offsets = [0, 16], sizes = [2, 16], strides = [1, 1]} : vector<2x48xf32> to vector<2x16xf32>
    %36 = vector.extract_strided_slice %33 {offsets = [0, 32], sizes = [2, 16], strides = [1, 1]} : vector<2x48xf32> to vector<2x16xf32>
    %37 = vector.extract_strided_slice %27 {offsets = [0, 48], sizes = [2, 16], strides = [1, 1]} : vector<2x64xf32> to vector<2x16xf32>
    %38 = math.tanh %37 : vector<2x16xf32>
    %39 = arith.mulf %35, %19 : vector<2x16xf32>
    %40 = arith.mulf %34, %38 : vector<2x16xf32>
    %41 = arith.addf %39, %40 : vector<2x16xf32>
    %42 = math.tanh %41 : vector<2x16xf32>
    %43 = arith.mulf %36, %42 : vector<2x16xf32>
    %44 = vector.extract_strided_slice %13 {offsets = [0, 7, 0], sizes = [2, 1, 64], strides = [1, 1, 1]} : vector<2x8x64xf32> to vector<2x1x64xf32>
    %45 = vector.shape_cast %44 : vector<2x1x64xf32> to vector<2x64xf32>
    %cst_28 = arith.constant dense<0.000000e+00> : vector<2x64xf32>
    %46 = tpu.matmul %21, %15, %cst_28 {dimension_numbers = #tpu.dot_dimension_numbers<[1], [0], [0], [1], [0, 0, 1, 1], [], []>} : vector<2x16xf32>, vector<16x64xf32>, vector<2x64xf32> -> vector<2x64xf32>
    %47 = arith.addf %45, %46 : vector<2x64xf32>
    %48 = vector.extract_strided_slice %47 {offsets = [0, 0], sizes = [2, 48], strides = [1, 1]} : vector<2x64xf32> to vector<2x48xf32>
    %49 = arith.negf %48 : vector<2x48xf32>
    %50 = math.exp %49 : vector<2x48xf32>
    %cst_29 = arith.constant 1.000000e+00 : f32
    %51 = vector.broadcast %cst_29 : f32 to vector<2x48xf32>
    %52 = arith.addf %51, %50 : vector<2x48xf32>
    %53 = arith.divf %51, %52 : vector<2x48xf32>
    %54 = vector.extract_strided_slice %53 {offsets = [0, 0], sizes = [2, 16], strides = [1, 1]} : vector<2x48xf32> to vector<2x16xf32>
    %55 = vector.extract_strided_slice %53 {offsets = [0, 16], sizes = [2, 16], strides = [1, 1]} : vector<2x48xf32> to vector<2x16xf32>
    %56 = vector.extract_strided_slice %53 {offsets = [0, 32], sizes = [2, 16], strides = [1, 1]} : vector<2x48xf32> to vector<2x16xf32>
    %57 = vector.extract_strided_slice %47 {offsets = [0, 48], sizes = [2, 16], strides = [1, 1]} : vector<2x64xf32> to vector<2x16xf32>
    %58 = math.tanh %57 : vector<2x16xf32>
    %59 = arith.mulf %55, %23 : vector<2x16xf32>
    %60 = arith.mulf %54, %58 : vector<2x16xf32>
    %61 = arith.addf %59, %60 : vector<2x16xf32>
    %62 = math.tanh %61 : vector<2x16xf32>
    %63 = arith.mulf %56, %62 : vector<2x16xf32>
    %c0_30 = arith.constant 0 : index
    %c0_31 = arith.constant 0 : index
    %c0_32 = arith.constant 0 : index
    %64 = vector.load %arg10[%c0_30, %c0_31, %c0_32] : memref<2x8x32xf32, #tpu.memory_space<vmem>>, vector<2x1x16xf32>
    %65 = vector.shape_cast %64 : vector<2x1x16xf32> to vector<2x16xf32>
    %66 = vector.shape_cast %43 : vector<2x16xf32> to vector<2x1x16xf32>
    tpu.vector_store %arg10[%c0_30, %c0_31, %c0_32], %66 {strides = array<i32>} : memref<2x8x32xf32, #tpu.memory_space<vmem>>, vector<2x1x16xf32>,
    %c0_33 = arith.constant 0 : index
    %c7 = arith.constant 7 : index
    %c16 = arith.constant 16 : index
    %67 = vector.load %arg10[%c0_33, %c7, %c16] : memref<2x8x32xf32, #tpu.memory_space<vmem>>, vector<2x1x16xf32>
    %68 = vector.shape_cast %67 : vector<2x1x16xf32> to vector<2x16xf32>
    %69 = vector.shape_cast %63 : vector<2x16xf32> to vector<2x1x16xf32>
    tpu.vector_store %arg10[%c0_33, %c7, %c16], %69 {strides = array<i32>} : memref<2x8x32xf32, #tpu.memory_space<vmem>>, vector<2x1x16xf32>,
    %70 = vector.extract_strided_slice %7 {offsets = [0, 1, 0], sizes = [2, 1, 64], strides = [1, 1, 1]} : vector<2x8x64xf32> to vector<2x1x64xf32>
    %71 = vector.shape_cast %70 : vector<2x1x64xf32> to vector<2x64xf32>
    %cst_34 = arith.constant dense<0.000000e+00> : vector<2x64xf32>
    %72 = tpu.matmul %43, %14, %cst_34 {dimension_numbers = #tpu.dot_dimension_numbers<[1], [0], [0], [1], [0, 0, 1, 1], [], []>} : vector<2x16xf32>, vector<16x64xf32>, vector<2x64xf32> -> vector<2x64xf32>
    %73 = arith.addf %71, %72 : vector<2x64xf32>
    %74 = vector.extract_strided_slice %73 {offsets = [0, 0], sizes = [2, 48], strides = [1, 1]} : vector<2x64xf32> to vector<2x48xf32>
    %75 = arith.negf %74 : vector<2x48xf32>
    %76 = math.exp %75 : vector<2x48xf32>
    %cst_35 = arith.constant 1.000000e+00 : f32
    %77 = vector.broadcast %cst_35 : f32 to vector<2x48xf32>
    %78 = arith.addf %77, %76 : vector<2x48xf32>
    %79 = arith.divf %77, %78 : vector<2x48xf32>
    %80 = vector.extract_strided_slice %79 {offsets = [0, 0], sizes = [2, 16], strides = [1, 1]} : vector<2x48xf32> to vector<2x16xf32>
    %81 = vector.extract_strided_slice %79 {offsets = [0, 16], sizes = [2, 16], strides = [1, 1]} : vector<2x48xf32> to vector<2x16xf32>
    %82 = vector.extract_strided_slice %79 {offsets = [0, 32], sizes = [2, 16], strides = [1, 1]} : vector<2x48xf32> to vector<2x16xf32>
    %83 = vector.extract_strided_slice %73 {offsets = [0, 48], sizes = [2, 16], strides = [1, 1]} : vector<2x64xf32> to vector<2x16xf32>
    %84 = math.tanh %83 : vector<2x16xf32>
    %85 = arith.mulf %81, %41 : vector<2x16xf32>
    %86 = arith.mulf %80, %84 : vector<2x16xf32>
    %87 = arith.addf %85, %86 : vector<2x16xf32>
    %88 = math.tanh %87 : vector<2x16xf32>
    %89 = arith.mulf %82, %88 : vector<2x16xf32>
    %90 = vector.extract_strided_slice %13 {offsets = [0, 6, 0], sizes = [2, 1, 64], strides = [1, 1, 1]} : vector<2x8x64xf32> to vector<2x1x64xf32>
    %91 = vector.shape_cast %90 : vector<2x1x64xf32> to vector<2x64xf32>
    %cst_36 = arith.constant dense<0.000000e+00> : vector<2x64xf32>
    %92 = tpu.matmul %63, %15, %cst_36 {dimension_numbers = #tpu.dot_dimension_numbers<[1], [0], [0], [1], [0, 0, 1, 1], [], []>} : vector<2x16xf32>, vector<16x64xf32>, vector<2x64xf32> -> vector<2x64xf32>
    %93 = arith.addf %91, %92 : vector<2x64xf32>
    %94 = vector.extract_strided_slice %93 {offsets = [0, 0], sizes = [2, 48], strides = [1, 1]} : vector<2x64xf32> to vector<2x48xf32>
    %95 = arith.negf %94 : vector<2x48xf32>
    %96 = math.exp %95 : vector<2x48xf32>
    %cst_37 = arith.constant 1.000000e+00 : f32
    %97 = vector.broadcast %cst_37 : f32 to vector<2x48xf32>
    %98 = arith.addf %97, %96 : vector<2x48xf32>
    %99 = arith.divf %97, %98 : vector<2x48xf32>
    %100 = vector.extract_strided_slice %99 {offsets = [0, 0], sizes = [2, 16], strides = [1, 1]} : vector<2x48xf32> to vector<2x16xf32>
    %101 = vector.extract_strided_slice %99 {offsets = [0, 16], sizes = [2, 16], strides = [1, 1]} : vector<2x48xf32> to vector<2x16xf32>
    %102 = vector.extract_strided_slice %99 {offsets = [0, 32], sizes = [2, 16], strides = [1, 1]} : vector<2x48xf32> to vector<2x16xf32>
    %103 = vector.extract_strided_slice %93 {offsets = [0, 48], sizes = [2, 16], strides = [1, 1]} : vector<2x64xf32> to vector<2x16xf32>
    %104 = math.tanh %103 : vector<2x16xf32>
    %105 = arith.mulf %101, %61 : vector<2x16xf32>
    %106 = arith.mulf %100, %104 : vector<2x16xf32>
    %107 = arith.addf %105, %106 : vector<2x16xf32>
    %108 = math.tanh %107 : vector<2x16xf32>
    %109 = arith.mulf %102, %108 : vector<2x16xf32>
    %c0_38 = arith.constant 0 : index
    %c1_39 = arith.constant 1 : index
    %c0_40 = arith.constant 0 : index
    %110 = vector.load %arg10[%c0_38, %c1_39, %c0_40] : memref<2x8x32xf32, #tpu.memory_space<vmem>>, vector<2x1x16xf32>
    %111 = vector.shape_cast %110 : vector<2x1x16xf32> to vector<2x16xf32>
    %112 = vector.shape_cast %89 : vector<2x16xf32> to vector<2x1x16xf32>
    tpu.vector_store %arg10[%c0_38, %c1_39, %c0_40], %112 {strides = array<i32>} : memref<2x8x32xf32, #tpu.memory_space<vmem>>, vector<2x1x16xf32>,
    %c0_41 = arith.constant 0 : index
    %c6 = arith.constant 6 : index
    %c16_42 = arith.constant 16 : index
    %113 = vector.load %arg10[%c0_41, %c6, %c16_42] : memref<2x8x32xf32, #tpu.memory_space<vmem>>, vector<2x1x16xf32>
    %114 = vector.shape_cast %113 : vector<2x1x16xf32> to vector<2x16xf32>
    %115 = vector.shape_cast %109 : vector<2x16xf32> to vector<2x1x16xf32>
    tpu.vector_store %arg10[%c0_41, %c6, %c16_42], %115 {strides = array<i32>} : memref<2x8x32xf32, #tpu.memory_space<vmem>>, vector<2x1x16xf32>,
    %116 = vector.extract_strided_slice %7 {offsets = [0, 2, 0], sizes = [2, 1, 64], strides = [1, 1, 1]} : vector<2x8x64xf32> to vector<2x1x64xf32>
    %117 = vector.shape_cast %116 : vector<2x1x64xf32> to vector<2x64xf32>
    %cst_43 = arith.constant dense<0.000000e+00> : vector<2x64xf32>
    %118 = tpu.matmul %89, %14, %cst_43 {dimension_numbers = #tpu.dot_dimension_numbers<[1], [0], [0], [1], [0, 0, 1, 1], [], []>} : vector<2x16xf32>, vector<16x64xf32>, vector<2x64xf32> -> vector<2x64xf32>
    %119 = arith.addf %117, %118 : vector<2x64xf32>
    %120 = vector.extract_strided_slice %119 {offsets = [0, 0], sizes = [2, 48], strides = [1, 1]} : vector<2x64xf32> to vector<2x48xf32>
    %121 = arith.negf %120 : vector<2x48xf32>
    %122 = math.exp %121 : vector<2x48xf32>
    %cst_44 = arith.constant 1.000000e+00 : f32
    %123 = vector.broadcast %cst_44 : f32 to vector<2x48xf32>
    %124 = arith.addf %123, %122 : vector<2x48xf32>
    %125 = arith.divf %123, %124 : vector<2x48xf32>
    %126 = vector.extract_strided_slice %125 {offsets = [0, 0], sizes = [2, 16], strides = [1, 1]} : vector<2x48xf32> to vector<2x16xf32>
    %127 = vector.extract_strided_slice %125 {offsets = [0, 16], sizes = [2, 16], strides = [1, 1]} : vector<2x48xf32> to vector<2x16xf32>
    %128 = vector.extract_strided_slice %125 {offsets = [0, 32], sizes = [2, 16], strides = [1, 1]} : vector<2x48xf32> to vector<2x16xf32>
    %129 = vector.extract_strided_slice %119 {offsets = [0, 48], sizes = [2, 16], strides = [1, 1]} : vector<2x64xf32> to vector<2x16xf32>
    %130 = math.tanh %129 : vector<2x16xf32>
    %131 = arith.mulf %127, %87 : vector<2x16xf32>
    %132 = arith.mulf %126, %130 : vector<2x16xf32>
    %133 = arith.addf %131, %132 : vector<2x16xf32>
    %134 = math.tanh %133 : vector<2x16xf32>
    %135 = arith.mulf %128, %134 : vector<2x16xf32>
    %136 = vector.extract_strided_slice %13 {offsets = [0, 5, 0], sizes = [2, 1, 64], strides = [1, 1, 1]} : vector<2x8x64xf32> to vector<2x1x64xf32>
    %137 = vector.shape_cast %136 : vector<2x1x64xf32> to vector<2x64xf32>
    %cst_45 = arith.constant dense<0.000000e+00> : vector<2x64xf32>
    %138 = tpu.matmul %109, %15, %cst_45 {dimension_numbers = #tpu.dot_dimension_numbers<[1], [0], [0], [1], [0, 0, 1, 1], [], []>} : vector<2x16xf32>, vector<16x64xf32>, vector<2x64xf32> -> vector<2x64xf32>
    %139 = arith.addf %137, %138 : vector<2x64xf32>
    %140 = vector.extract_strided_slice %139 {offsets = [0, 0], sizes = [2, 48], strides = [1, 1]} : vector<2x64xf32> to vector<2x48xf32>
    %141 = arith.negf %140 : vector<2x48xf32>
    %142 = math.exp %141 : vector<2x48xf32>
    %cst_46 = arith.constant 1.000000e+00 : f32
    %143 = vector.broadcast %cst_46 : f32 to vector<2x48xf32>
    %144 = arith.addf %143, %142 : vector<2x48xf32>
    %145 = arith.divf %143, %144 : vector<2x48xf32>
    %146 = vector.extract_strided_slice %145 {offsets = [0, 0], sizes = [2, 16], strides = [1, 1]} : vector<2x48xf32> to vector<2x16xf32>
    %147 = vector.extract_strided_slice %145 {offsets = [0, 16], sizes = [2, 16], strides = [1, 1]} : vector<2x48xf32> to vector<2x16xf32>
    %148 = vector.extract_strided_slice %145 {offsets = [0, 32], sizes = [2, 16], strides = [1, 1]} : vector<2x48xf32> to vector<2x16xf32>
    %149 = vector.extract_strided_slice %139 {offsets = [0, 48], sizes = [2, 16], strides = [1, 1]} : vector<2x64xf32> to vector<2x16xf32>
    %150 = math.tanh %149 : vector<2x16xf32>
    %151 = arith.mulf %147, %107 : vector<2x16xf32>
    %152 = arith.mulf %146, %150 : vector<2x16xf32>
    %153 = arith.addf %151, %152 : vector<2x16xf32>
    %154 = math.tanh %153 : vector<2x16xf32>
    %155 = arith.mulf %148, %154 : vector<2x16xf32>
    %c0_47 = arith.constant 0 : index
    %c2 = arith.constant 2 : index
    %c0_48 = arith.constant 0 : index
    %156 = vector.load %arg10[%c0_47, %c2, %c0_48] : memref<2x8x32xf32, #tpu.memory_space<vmem>>, vector<2x1x16xf32>
    %157 = vector.shape_cast %156 : vector<2x1x16xf32> to vector<2x16xf32>
    %158 = vector.shape_cast %135 : vector<2x16xf32> to vector<2x1x16xf32>
    tpu.vector_store %arg10[%c0_47, %c2, %c0_48], %158 {strides = array<i32>} : memref<2x8x32xf32, #tpu.memory_space<vmem>>, vector<2x1x16xf32>,
    %c0_49 = arith.constant 0 : index
    %c5 = arith.constant 5 : index
    %c16_50 = arith.constant 16 : index
    %159 = vector.load %arg10[%c0_49, %c5, %c16_50] : memref<2x8x32xf32, #tpu.memory_space<vmem>>, vector<2x1x16xf32>
    %160 = vector.shape_cast %159 : vector<2x1x16xf32> to vector<2x16xf32>
    %161 = vector.shape_cast %155 : vector<2x16xf32> to vector<2x1x16xf32>
    tpu.vector_store %arg10[%c0_49, %c5, %c16_50], %161 {strides = array<i32>} : memref<2x8x32xf32, #tpu.memory_space<vmem>>, vector<2x1x16xf32>,
    %162 = vector.extract_strided_slice %7 {offsets = [0, 3, 0], sizes = [2, 1, 64], strides = [1, 1, 1]} : vector<2x8x64xf32> to vector<2x1x64xf32>
    %163 = vector.shape_cast %162 : vector<2x1x64xf32> to vector<2x64xf32>
    %cst_51 = arith.constant dense<0.000000e+00> : vector<2x64xf32>
    %164 = tpu.matmul %135, %14, %cst_51 {dimension_numbers = #tpu.dot_dimension_numbers<[1], [0], [0], [1], [0, 0, 1, 1], [], []>} : vector<2x16xf32>, vector<16x64xf32>, vector<2x64xf32> -> vector<2x64xf32>
    %165 = arith.addf %163, %164 : vector<2x64xf32>
    %166 = vector.extract_strided_slice %165 {offsets = [0, 0], sizes = [2, 48], strides = [1, 1]} : vector<2x64xf32> to vector<2x48xf32>
    %167 = arith.negf %166 : vector<2x48xf32>
    %168 = math.exp %167 : vector<2x48xf32>
    %cst_52 = arith.constant 1.000000e+00 : f32
    %169 = vector.broadcast %cst_52 : f32 to vector<2x48xf32>
    %170 = arith.addf %169, %168 : vector<2x48xf32>
    %171 = arith.divf %169, %170 : vector<2x48xf32>
    %172 = vector.extract_strided_slice %171 {offsets = [0, 0], sizes = [2, 16], strides = [1, 1]} : vector<2x48xf32> to vector<2x16xf32>
    %173 = vector.extract_strided_slice %171 {offsets = [0, 16], sizes = [2, 16], strides = [1, 1]} : vector<2x48xf32> to vector<2x16xf32>
    %174 = vector.extract_strided_slice %171 {offsets = [0, 32], sizes = [2, 16], strides = [1, 1]} : vector<2x48xf32> to vector<2x16xf32>
    %175 = vector.extract_strided_slice %165 {offsets = [0, 48], sizes = [2, 16], strides = [1, 1]} : vector<2x64xf32> to vector<2x16xf32>
    %176 = math.tanh %175 : vector<2x16xf32>
    %177 = arith.mulf %173, %133 : vector<2x16xf32>
    %178 = arith.mulf %172, %176 : vector<2x16xf32>
    %179 = arith.addf %177, %178 : vector<2x16xf32>
    %180 = math.tanh %179 : vector<2x16xf32>
    %181 = arith.mulf %174, %180 : vector<2x16xf32>
    %182 = vector.extract_strided_slice %13 {offsets = [0, 4, 0], sizes = [2, 1, 64], strides = [1, 1, 1]} : vector<2x8x64xf32> to vector<2x1x64xf32>
    %183 = vector.shape_cast %182 : vector<2x1x64xf32> to vector<2x64xf32>
    %cst_53 = arith.constant dense<0.000000e+00> : vector<2x64xf32>
    %184 = tpu.matmul %155, %15, %cst_53 {dimension_numbers = #tpu.dot_dimension_numbers<[1], [0], [0], [1], [0, 0, 1, 1], [], []>} : vector<2x16xf32>, vector<16x64xf32>, vector<2x64xf32> -> vector<2x64xf32>
    %185 = arith.addf %183, %184 : vector<2x64xf32>
    %186 = vector.extract_strided_slice %185 {offsets = [0, 0], sizes = [2, 48], strides = [1, 1]} : vector<2x64xf32> to vector<2x48xf32>
    %187 = arith.negf %186 : vector<2x48xf32>
    %188 = math.exp %187 : vector<2x48xf32>
    %cst_54 = arith.constant 1.000000e+00 : f32
    %189 = vector.broadcast %cst_54 : f32 to vector<2x48xf32>
    %190 = arith.addf %189, %188 : vector<2x48xf32>
    %191 = arith.divf %189, %190 : vector<2x48xf32>
    %192 = vector.extract_strided_slice %191 {offsets = [0, 0], sizes = [2, 16], strides = [1, 1]} : vector<2x48xf32> to vector<2x16xf32>
    %193 = vector.extract_strided_slice %191 {offsets = [0, 16], sizes = [2, 16], strides = [1, 1]} : vector<2x48xf32> to vector<2x16xf32>
    %194 = vector.extract_strided_slice %191 {offsets = [0, 32], sizes = [2, 16], strides = [1, 1]} : vector<2x48xf32> to vector<2x16xf32>
    %195 = vector.extract_strided_slice %185 {offsets = [0, 48], sizes = [2, 16], strides = [1, 1]} : vector<2x64xf32> to vector<2x16xf32>
    %196 = math.tanh %195 : vector<2x16xf32>
    %197 = arith.mulf %193, %153 : vector<2x16xf32>
    %198 = arith.mulf %192, %196 : vector<2x16xf32>
    %199 = arith.addf %197, %198 : vector<2x16xf32>
    %200 = math.tanh %199 : vector<2x16xf32>
    %201 = arith.mulf %194, %200 : vector<2x16xf32>
    %c0_55 = arith.constant 0 : index
    %c3 = arith.constant 3 : index
    %c0_56 = arith.constant 0 : index
    %202 = vector.load %arg10[%c0_55, %c3, %c0_56] : memref<2x8x32xf32, #tpu.memory_space<vmem>>, vector<2x1x16xf32>
    %203 = vector.shape_cast %202 : vector<2x1x16xf32> to vector<2x16xf32>
    %204 = vector.shape_cast %181 : vector<2x16xf32> to vector<2x1x16xf32>
    tpu.vector_store %arg10[%c0_55, %c3, %c0_56], %204 {strides = array<i32>} : memref<2x8x32xf32, #tpu.memory_space<vmem>>, vector<2x1x16xf32>,
    %c0_57 = arith.constant 0 : index
    %c4 = arith.constant 4 : index
    %c16_58 = arith.constant 16 : index
    %205 = vector.load %arg10[%c0_57, %c4, %c16_58] : memref<2x8x32xf32, #tpu.memory_space<vmem>>, vector<2x1x16xf32>
    %206 = vector.shape_cast %205 : vector<2x1x16xf32> to vector<2x16xf32>
    %207 = vector.shape_cast %201 : vector<2x16xf32> to vector<2x1x16xf32>
    tpu.vector_store %arg10[%c0_57, %c4, %c16_58], %207 {strides = array<i32>} : memref<2x8x32xf32, #tpu.memory_space<vmem>>, vector<2x1x16xf32>,
    %208 = vector.extract_strided_slice %7 {offsets = [0, 4, 0], sizes = [2, 1, 64], strides = [1, 1, 1]} : vector<2x8x64xf32> to vector<2x1x64xf32>
    %209 = vector.shape_cast %208 : vector<2x1x64xf32> to vector<2x64xf32>
    %cst_59 = arith.constant dense<0.000000e+00> : vector<2x64xf32>
    %210 = tpu.matmul %181, %14, %cst_59 {dimension_numbers = #tpu.dot_dimension_numbers<[1], [0], [0], [1], [0, 0, 1, 1], [], []>} : vector<2x16xf32>, vector<16x64xf32>, vector<2x64xf32> -> vector<2x64xf32>
    %211 = arith.addf %209, %210 : vector<2x64xf32>
    %212 = vector.extract_strided_slice %211 {offsets = [0, 0], sizes = [2, 48], strides = [1, 1]} : vector<2x64xf32> to vector<2x48xf32>
    %213 = arith.negf %212 : vector<2x48xf32>
    %214 = math.exp %213 : vector<2x48xf32>
    %cst_60 = arith.constant 1.000000e+00 : f32
    %215 = vector.broadcast %cst_60 : f32 to vector<2x48xf32>
    %216 = arith.addf %215, %214 : vector<2x48xf32>
    %217 = arith.divf %215, %216 : vector<2x48xf32>
    %218 = vector.extract_strided_slice %217 {offsets = [0, 0], sizes = [2, 16], strides = [1, 1]} : vector<2x48xf32> to vector<2x16xf32>
    %219 = vector.extract_strided_slice %217 {offsets = [0, 16], sizes = [2, 16], strides = [1, 1]} : vector<2x48xf32> to vector<2x16xf32>
    %220 = vector.extract_strided_slice %217 {offsets = [0, 32], sizes = [2, 16], strides = [1, 1]} : vector<2x48xf32> to vector<2x16xf32>
    %221 = vector.extract_strided_slice %211 {offsets = [0, 48], sizes = [2, 16], strides = [1, 1]} : vector<2x64xf32> to vector<2x16xf32>
    %222 = math.tanh %221 : vector<2x16xf32>
    %223 = arith.mulf %219, %179 : vector<2x16xf32>
    %224 = arith.mulf %218, %222 : vector<2x16xf32>
    %225 = arith.addf %223, %224 : vector<2x16xf32>
    %226 = math.tanh %225 : vector<2x16xf32>
    %227 = arith.mulf %220, %226 : vector<2x16xf32>
    %228 = vector.extract_strided_slice %13 {offsets = [0, 3, 0], sizes = [2, 1, 64], strides = [1, 1, 1]} : vector<2x8x64xf32> to vector<2x1x64xf32>
    %229 = vector.shape_cast %228 : vector<2x1x64xf32> to vector<2x64xf32>
    %cst_61 = arith.constant dense<0.000000e+00> : vector<2x64xf32>
    %230 = tpu.matmul %201, %15, %cst_61 {dimension_numbers = #tpu.dot_dimension_numbers<[1], [0], [0], [1], [0, 0, 1, 1], [], []>} : vector<2x16xf32>, vector<16x64xf32>, vector<2x64xf32> -> vector<2x64xf32>
    %231 = arith.addf %229, %230 : vector<2x64xf32>
    %232 = vector.extract_strided_slice %231 {offsets = [0, 0], sizes = [2, 48], strides = [1, 1]} : vector<2x64xf32> to vector<2x48xf32>
    %233 = arith.negf %232 : vector<2x48xf32>
    %234 = math.exp %233 : vector<2x48xf32>
    %cst_62 = arith.constant 1.000000e+00 : f32
    %235 = vector.broadcast %cst_62 : f32 to vector<2x48xf32>
    %236 = arith.addf %235, %234 : vector<2x48xf32>
    %237 = arith.divf %235, %236 : vector<2x48xf32>
    %238 = vector.extract_strided_slice %237 {offsets = [0, 0], sizes = [2, 16], strides = [1, 1]} : vector<2x48xf32> to vector<2x16xf32>
    %239 = vector.extract_strided_slice %237 {offsets = [0, 16], sizes = [2, 16], strides = [1, 1]} : vector<2x48xf32> to vector<2x16xf32>
    %240 = vector.extract_strided_slice %237 {offsets = [0, 32], sizes = [2, 16], strides = [1, 1]} : vector<2x48xf32> to vector<2x16xf32>
    %241 = vector.extract_strided_slice %231 {offsets = [0, 48], sizes = [2, 16], strides = [1, 1]} : vector<2x64xf32> to vector<2x16xf32>
    %242 = math.tanh %241 : vector<2x16xf32>
    %243 = arith.mulf %239, %199 : vector<2x16xf32>
    %244 = arith.mulf %238, %242 : vector<2x16xf32>
    %245 = arith.addf %243, %244 : vector<2x16xf32>
    %246 = math.tanh %245 : vector<2x16xf32>
    %247 = arith.mulf %240, %246 : vector<2x16xf32>
    %c0_63 = arith.constant 0 : index
    %c4_64 = arith.constant 4 : index
    %c0_65 = arith.constant 0 : index
    %248 = vector.load %arg10[%c0_63, %c4_64, %c0_65] : memref<2x8x32xf32, #tpu.memory_space<vmem>>, vector<2x1x16xf32>
    %249 = vector.shape_cast %248 : vector<2x1x16xf32> to vector<2x16xf32>
    %250 = vector.shape_cast %227 : vector<2x16xf32> to vector<2x1x16xf32>
    tpu.vector_store %arg10[%c0_63, %c4_64, %c0_65], %250 {strides = array<i32>} : memref<2x8x32xf32, #tpu.memory_space<vmem>>, vector<2x1x16xf32>,
    %c0_66 = arith.constant 0 : index
    %c3_67 = arith.constant 3 : index
    %c16_68 = arith.constant 16 : index
    %251 = vector.load %arg10[%c0_66, %c3_67, %c16_68] : memref<2x8x32xf32, #tpu.memory_space<vmem>>, vector<2x1x16xf32>
    %252 = vector.shape_cast %251 : vector<2x1x16xf32> to vector<2x16xf32>
    %253 = vector.shape_cast %247 : vector<2x16xf32> to vector<2x1x16xf32>
    tpu.vector_store %arg10[%c0_66, %c3_67, %c16_68], %253 {strides = array<i32>} : memref<2x8x32xf32, #tpu.memory_space<vmem>>, vector<2x1x16xf32>,
    %254 = vector.extract_strided_slice %7 {offsets = [0, 5, 0], sizes = [2, 1, 64], strides = [1, 1, 1]} : vector<2x8x64xf32> to vector<2x1x64xf32>
    %255 = vector.shape_cast %254 : vector<2x1x64xf32> to vector<2x64xf32>
    %cst_69 = arith.constant dense<0.000000e+00> : vector<2x64xf32>
    %256 = tpu.matmul %227, %14, %cst_69 {dimension_numbers = #tpu.dot_dimension_numbers<[1], [0], [0], [1], [0, 0, 1, 1], [], []>} : vector<2x16xf32>, vector<16x64xf32>, vector<2x64xf32> -> vector<2x64xf32>
    %257 = arith.addf %255, %256 : vector<2x64xf32>
    %258 = vector.extract_strided_slice %257 {offsets = [0, 0], sizes = [2, 48], strides = [1, 1]} : vector<2x64xf32> to vector<2x48xf32>
    %259 = arith.negf %258 : vector<2x48xf32>
    %260 = math.exp %259 : vector<2x48xf32>
    %cst_70 = arith.constant 1.000000e+00 : f32
    %261 = vector.broadcast %cst_70 : f32 to vector<2x48xf32>
    %262 = arith.addf %261, %260 : vector<2x48xf32>
    %263 = arith.divf %261, %262 : vector<2x48xf32>
    %264 = vector.extract_strided_slice %263 {offsets = [0, 0], sizes = [2, 16], strides = [1, 1]} : vector<2x48xf32> to vector<2x16xf32>
    %265 = vector.extract_strided_slice %263 {offsets = [0, 16], sizes = [2, 16], strides = [1, 1]} : vector<2x48xf32> to vector<2x16xf32>
    %266 = vector.extract_strided_slice %263 {offsets = [0, 32], sizes = [2, 16], strides = [1, 1]} : vector<2x48xf32> to vector<2x16xf32>
    %267 = vector.extract_strided_slice %257 {offsets = [0, 48], sizes = [2, 16], strides = [1, 1]} : vector<2x64xf32> to vector<2x16xf32>
    %268 = math.tanh %267 : vector<2x16xf32>
    %269 = arith.mulf %265, %225 : vector<2x16xf32>
    %270 = arith.mulf %264, %268 : vector<2x16xf32>
    %271 = arith.addf %269, %270 : vector<2x16xf32>
    %272 = math.tanh %271 : vector<2x16xf32>
    %273 = arith.mulf %266, %272 : vector<2x16xf32>
    %274 = vector.extract_strided_slice %13 {offsets = [0, 2, 0], sizes = [2, 1, 64], strides = [1, 1, 1]} : vector<2x8x64xf32> to vector<2x1x64xf32>
    %275 = vector.shape_cast %274 : vector<2x1x64xf32> to vector<2x64xf32>
    %cst_71 = arith.constant dense<0.000000e+00> : vector<2x64xf32>
    %276 = tpu.matmul %247, %15, %cst_71 {dimension_numbers = #tpu.dot_dimension_numbers<[1], [0], [0], [1], [0, 0, 1, 1], [], []>} : vector<2x16xf32>, vector<16x64xf32>, vector<2x64xf32> -> vector<2x64xf32>
    %277 = arith.addf %275, %276 : vector<2x64xf32>
    %278 = vector.extract_strided_slice %277 {offsets = [0, 0], sizes = [2, 48], strides = [1, 1]} : vector<2x64xf32> to vector<2x48xf32>
    %279 = arith.negf %278 : vector<2x48xf32>
    %280 = math.exp %279 : vector<2x48xf32>
    %cst_72 = arith.constant 1.000000e+00 : f32
    %281 = vector.broadcast %cst_72 : f32 to vector<2x48xf32>
    %282 = arith.addf %281, %280 : vector<2x48xf32>
    %283 = arith.divf %281, %282 : vector<2x48xf32>
    %284 = vector.extract_strided_slice %283 {offsets = [0, 0], sizes = [2, 16], strides = [1, 1]} : vector<2x48xf32> to vector<2x16xf32>
    %285 = vector.extract_strided_slice %283 {offsets = [0, 16], sizes = [2, 16], strides = [1, 1]} : vector<2x48xf32> to vector<2x16xf32>
    %286 = vector.extract_strided_slice %283 {offsets = [0, 32], sizes = [2, 16], strides = [1, 1]} : vector<2x48xf32> to vector<2x16xf32>
    %287 = vector.extract_strided_slice %277 {offsets = [0, 48], sizes = [2, 16], strides = [1, 1]} : vector<2x64xf32> to vector<2x16xf32>
    %288 = math.tanh %287 : vector<2x16xf32>
    %289 = arith.mulf %285, %245 : vector<2x16xf32>
    %290 = arith.mulf %284, %288 : vector<2x16xf32>
    %291 = arith.addf %289, %290 : vector<2x16xf32>
    %292 = math.tanh %291 : vector<2x16xf32>
    %293 = arith.mulf %286, %292 : vector<2x16xf32>
    %c0_73 = arith.constant 0 : index
    %c5_74 = arith.constant 5 : index
    %c0_75 = arith.constant 0 : index
    %294 = vector.load %arg10[%c0_73, %c5_74, %c0_75] : memref<2x8x32xf32, #tpu.memory_space<vmem>>, vector<2x1x16xf32>
    %295 = vector.shape_cast %294 : vector<2x1x16xf32> to vector<2x16xf32>
    %296 = vector.shape_cast %273 : vector<2x16xf32> to vector<2x1x16xf32>
    tpu.vector_store %arg10[%c0_73, %c5_74, %c0_75], %296 {strides = array<i32>} : memref<2x8x32xf32, #tpu.memory_space<vmem>>, vector<2x1x16xf32>,
    %c0_76 = arith.constant 0 : index
    %c2_77 = arith.constant 2 : index
    %c16_78 = arith.constant 16 : index
    %297 = vector.load %arg10[%c0_76, %c2_77, %c16_78] : memref<2x8x32xf32, #tpu.memory_space<vmem>>, vector<2x1x16xf32>
    %298 = vector.shape_cast %297 : vector<2x1x16xf32> to vector<2x16xf32>
    %299 = vector.shape_cast %293 : vector<2x16xf32> to vector<2x1x16xf32>
    tpu.vector_store %arg10[%c0_76, %c2_77, %c16_78], %299 {strides = array<i32>} : memref<2x8x32xf32, #tpu.memory_space<vmem>>, vector<2x1x16xf32>,
    %300 = vector.extract_strided_slice %7 {offsets = [0, 6, 0], sizes = [2, 1, 64], strides = [1, 1, 1]} : vector<2x8x64xf32> to vector<2x1x64xf32>
    %301 = vector.shape_cast %300 : vector<2x1x64xf32> to vector<2x64xf32>
    %cst_79 = arith.constant dense<0.000000e+00> : vector<2x64xf32>
    %302 = tpu.matmul %273, %14, %cst_79 {dimension_numbers = #tpu.dot_dimension_numbers<[1], [0], [0], [1], [0, 0, 1, 1], [], []>} : vector<2x16xf32>, vector<16x64xf32>, vector<2x64xf32> -> vector<2x64xf32>
    %303 = arith.addf %301, %302 : vector<2x64xf32>
    %304 = vector.extract_strided_slice %303 {offsets = [0, 0], sizes = [2, 48], strides = [1, 1]} : vector<2x64xf32> to vector<2x48xf32>
    %305 = arith.negf %304 : vector<2x48xf32>
    %306 = math.exp %305 : vector<2x48xf32>
    %cst_80 = arith.constant 1.000000e+00 : f32
    %307 = vector.broadcast %cst_80 : f32 to vector<2x48xf32>
    %308 = arith.addf %307, %306 : vector<2x48xf32>
    %309 = arith.divf %307, %308 : vector<2x48xf32>
    %310 = vector.extract_strided_slice %309 {offsets = [0, 0], sizes = [2, 16], strides = [1, 1]} : vector<2x48xf32> to vector<2x16xf32>
    %311 = vector.extract_strided_slice %309 {offsets = [0, 16], sizes = [2, 16], strides = [1, 1]} : vector<2x48xf32> to vector<2x16xf32>
    %312 = vector.extract_strided_slice %309 {offsets = [0, 32], sizes = [2, 16], strides = [1, 1]} : vector<2x48xf32> to vector<2x16xf32>
    %313 = vector.extract_strided_slice %303 {offsets = [0, 48], sizes = [2, 16], strides = [1, 1]} : vector<2x64xf32> to vector<2x16xf32>
    %314 = math.tanh %313 : vector<2x16xf32>
    %315 = arith.mulf %311, %271 : vector<2x16xf32>
    %316 = arith.mulf %310, %314 : vector<2x16xf32>
    %317 = arith.addf %315, %316 : vector<2x16xf32>
    %318 = math.tanh %317 : vector<2x16xf32>
    %319 = arith.mulf %312, %318 : vector<2x16xf32>
    %320 = vector.extract_strided_slice %13 {offsets = [0, 1, 0], sizes = [2, 1, 64], strides = [1, 1, 1]} : vector<2x8x64xf32> to vector<2x1x64xf32>
    %321 = vector.shape_cast %320 : vector<2x1x64xf32> to vector<2x64xf32>
    %cst_81 = arith.constant dense<0.000000e+00> : vector<2x64xf32>
    %322 = tpu.matmul %293, %15, %cst_81 {dimension_numbers = #tpu.dot_dimension_numbers<[1], [0], [0], [1], [0, 0, 1, 1], [], []>} : vector<2x16xf32>, vector<16x64xf32>, vector<2x64xf32> -> vector<2x64xf32>
    %323 = arith.addf %321, %322 : vector<2x64xf32>
    %324 = vector.extract_strided_slice %323 {offsets = [0, 0], sizes = [2, 48], strides = [1, 1]} : vector<2x64xf32> to vector<2x48xf32>
    %325 = arith.negf %324 : vector<2x48xf32>
    %326 = math.exp %325 : vector<2x48xf32>
    %cst_82 = arith.constant 1.000000e+00 : f32
    %327 = vector.broadcast %cst_82 : f32 to vector<2x48xf32>
    %328 = arith.addf %327, %326 : vector<2x48xf32>
    %329 = arith.divf %327, %328 : vector<2x48xf32>
    %330 = vector.extract_strided_slice %329 {offsets = [0, 0], sizes = [2, 16], strides = [1, 1]} : vector<2x48xf32> to vector<2x16xf32>
    %331 = vector.extract_strided_slice %329 {offsets = [0, 16], sizes = [2, 16], strides = [1, 1]} : vector<2x48xf32> to vector<2x16xf32>
    %332 = vector.extract_strided_slice %329 {offsets = [0, 32], sizes = [2, 16], strides = [1, 1]} : vector<2x48xf32> to vector<2x16xf32>
    %333 = vector.extract_strided_slice %323 {offsets = [0, 48], sizes = [2, 16], strides = [1, 1]} : vector<2x64xf32> to vector<2x16xf32>
    %334 = math.tanh %333 : vector<2x16xf32>
    %335 = arith.mulf %331, %291 : vector<2x16xf32>
    %336 = arith.mulf %330, %334 : vector<2x16xf32>
    %337 = arith.addf %335, %336 : vector<2x16xf32>
    %338 = math.tanh %337 : vector<2x16xf32>
    %339 = arith.mulf %332, %338 : vector<2x16xf32>
    %c0_83 = arith.constant 0 : index
    %c6_84 = arith.constant 6 : index
    %c0_85 = arith.constant 0 : index
    %340 = vector.load %arg10[%c0_83, %c6_84, %c0_85] : memref<2x8x32xf32, #tpu.memory_space<vmem>>, vector<2x1x16xf32>
    %341 = vector.shape_cast %340 : vector<2x1x16xf32> to vector<2x16xf32>
    %342 = vector.shape_cast %319 : vector<2x16xf32> to vector<2x1x16xf32>
    tpu.vector_store %arg10[%c0_83, %c6_84, %c0_85], %342 {strides = array<i32>} : memref<2x8x32xf32, #tpu.memory_space<vmem>>, vector<2x1x16xf32>,
    %c0_86 = arith.constant 0 : index
    %c1_87 = arith.constant 1 : index
    %c16_88 = arith.constant 16 : index
    %343 = vector.load %arg10[%c0_86, %c1_87, %c16_88] : memref<2x8x32xf32, #tpu.memory_space<vmem>>, vector<2x1x16xf32>
    %344 = vector.shape_cast %343 : vector<2x1x16xf32> to vector<2x16xf32>
    %345 = vector.shape_cast %339 : vector<2x16xf32> to vector<2x1x16xf32>
    tpu.vector_store %arg10[%c0_86, %c1_87, %c16_88], %345 {strides = array<i32>} : memref<2x8x32xf32, #tpu.memory_space<vmem>>, vector<2x1x16xf32>,
    %346 = vector.extract_strided_slice %7 {offsets = [0, 7, 0], sizes = [2, 1, 64], strides = [1, 1, 1]} : vector<2x8x64xf32> to vector<2x1x64xf32>
    %347 = vector.shape_cast %346 : vector<2x1x64xf32> to vector<2x64xf32>
    %cst_89 = arith.constant dense<0.000000e+00> : vector<2x64xf32>
    %348 = tpu.matmul %319, %14, %cst_89 {dimension_numbers = #tpu.dot_dimension_numbers<[1], [0], [0], [1], [0, 0, 1, 1], [], []>} : vector<2x16xf32>, vector<16x64xf32>, vector<2x64xf32> -> vector<2x64xf32>
    %349 = arith.addf %347, %348 : vector<2x64xf32>
    %350 = vector.extract_strided_slice %349 {offsets = [0, 0], sizes = [2, 48], strides = [1, 1]} : vector<2x64xf32> to vector<2x48xf32>
    %351 = arith.negf %350 : vector<2x48xf32>
    %352 = math.exp %351 : vector<2x48xf32>
    %cst_90 = arith.constant 1.000000e+00 : f32
    %353 = vector.broadcast %cst_90 : f32 to vector<2x48xf32>
    %354 = arith.addf %353, %352 : vector<2x48xf32>
    %355 = arith.divf %353, %354 : vector<2x48xf32>
    %356 = vector.extract_strided_slice %355 {offsets = [0, 0], sizes = [2, 16], strides = [1, 1]} : vector<2x48xf32> to vector<2x16xf32>
    %357 = vector.extract_strided_slice %355 {offsets = [0, 16], sizes = [2, 16], strides = [1, 1]} : vector<2x48xf32> to vector<2x16xf32>
    %358 = vector.extract_strided_slice %355 {offsets = [0, 32], sizes = [2, 16], strides = [1, 1]} : vector<2x48xf32> to vector<2x16xf32>
    %359 = vector.extract_strided_slice %349 {offsets = [0, 48], sizes = [2, 16], strides = [1, 1]} : vector<2x64xf32> to vector<2x16xf32>
    %360 = math.tanh %359 : vector<2x16xf32>
    %361 = arith.mulf %357, %317 : vector<2x16xf32>
    %362 = arith.mulf %356, %360 : vector<2x16xf32>
    %363 = arith.addf %361, %362 : vector<2x16xf32>
    %364 = math.tanh %363 : vector<2x16xf32>
    %365 = arith.mulf %358, %364 : vector<2x16xf32>
    %366 = vector.extract_strided_slice %13 {offsets = [0, 0, 0], sizes = [2, 1, 64], strides = [1, 1, 1]} : vector<2x8x64xf32> to vector<2x1x64xf32>
    %367 = vector.shape_cast %366 : vector<2x1x64xf32> to vector<2x64xf32>
    %cst_91 = arith.constant dense<0.000000e+00> : vector<2x64xf32>
    %368 = tpu.matmul %339, %15, %cst_91 {dimension_numbers = #tpu.dot_dimension_numbers<[1], [0], [0], [1], [0, 0, 1, 1], [], []>} : vector<2x16xf32>, vector<16x64xf32>, vector<2x64xf32> -> vector<2x64xf32>
    %369 = arith.addf %367, %368 : vector<2x64xf32>
    %370 = vector.extract_strided_slice %369 {offsets = [0, 0], sizes = [2, 48], strides = [1, 1]} : vector<2x64xf32> to vector<2x48xf32>
    %371 = arith.negf %370 : vector<2x48xf32>
    %372 = math.exp %371 : vector<2x48xf32>
    %cst_92 = arith.constant 1.000000e+00 : f32
    %373 = vector.broadcast %cst_92 : f32 to vector<2x48xf32>
    %374 = arith.addf %373, %372 : vector<2x48xf32>
    %375 = arith.divf %373, %374 : vector<2x48xf32>
    %376 = vector.extract_strided_slice %375 {offsets = [0, 0], sizes = [2, 16], strides = [1, 1]} : vector<2x48xf32> to vector<2x16xf32>
    %377 = vector.extract_strided_slice %375 {offsets = [0, 16], sizes = [2, 16], strides = [1, 1]} : vector<2x48xf32> to vector<2x16xf32>
    %378 = vector.extract_strided_slice %375 {offsets = [0, 32], sizes = [2, 16], strides = [1, 1]} : vector<2x48xf32> to vector<2x16xf32>
    %379 = vector.extract_strided_slice %369 {offsets = [0, 48], sizes = [2, 16], strides = [1, 1]} : vector<2x64xf32> to vector<2x16xf32>
    %380 = math.tanh %379 : vector<2x16xf32>
    %381 = arith.mulf %377, %337 : vector<2x16xf32>
    %382 = arith.mulf %376, %380 : vector<2x16xf32>
    %383 = arith.addf %381, %382 : vector<2x16xf32>
    %384 = math.tanh %383 : vector<2x16xf32>
    %385 = arith.mulf %378, %384 : vector<2x16xf32>
    %c0_93 = arith.constant 0 : index
    %c7_94 = arith.constant 7 : index
    %c0_95 = arith.constant 0 : index
    %386 = vector.load %arg10[%c0_93, %c7_94, %c0_95] : memref<2x8x32xf32, #tpu.memory_space<vmem>>, vector<2x1x16xf32>
    %387 = vector.shape_cast %386 : vector<2x1x16xf32> to vector<2x16xf32>
    %388 = vector.shape_cast %365 : vector<2x16xf32> to vector<2x1x16xf32>
    tpu.vector_store %arg10[%c0_93, %c7_94, %c0_95], %388 {strides = array<i32>} : memref<2x8x32xf32, #tpu.memory_space<vmem>>, vector<2x1x16xf32>,
    %c0_96 = arith.constant 0 : index
    %c0_97 = arith.constant 0 : index
    %c16_98 = arith.constant 16 : index
    %389 = vector.load %arg10[%c0_96, %c0_97, %c16_98] : memref<2x8x32xf32, #tpu.memory_space<vmem>>, vector<2x1x16xf32>
    %390 = vector.shape_cast %389 : vector<2x1x16xf32> to vector<2x16xf32>
    %391 = vector.shape_cast %385 : vector<2x16xf32> to vector<2x1x16xf32>
    tpu.vector_store %arg10[%c0_96, %c0_97, %c16_98], %391 {strides = array<i32>} : memref<2x8x32xf32, #tpu.memory_space<vmem>>, vector<2x1x16xf32>,
    return
  }
  func.func @transform_0(%arg0: i32) -> (i32, i32, i32) {
    %c0_i32 = arith.constant 0 : i32
    %c0_i32_0 = arith.constant 0 : i32
    %c0_i32_1 = arith.constant 0 : i32
    return %arg0, %c0_i32, %c0_i32_0 : i32, i32, i32
  }
  func.func @transform_1(%arg0: i32) -> (i32, i32) {
    %c0_i32 = arith.constant 0 : i32
    %c0_i32_0 = arith.constant 0 : i32
    %c0_i32_1 = arith.constant 0 : i32
    return %c0_i32, %c0_i32_0 : i32, i32
  }
  func.func @transform_2(%arg0: i32) -> (i32, i32) {
    %c0_i32 = arith.constant 0 : i32
    %c0_i32_0 = arith.constant 0 : i32
    %c0_i32_1 = arith.constant 0 : i32
    return %c0_i32, %c0_i32_0 : i32, i32
  }
  func.func @transform_3(%arg0: i32) -> (i32, i32) {
    %c0_i32 = arith.constant 0 : i32
    %c0_i32_0 = arith.constant 0 : i32
    %c0_i32_1 = arith.constant 0 : i32
    return %c0_i32, %c0_i32_0 : i32, i32
  }
  func.func @transform_4(%arg0: i32) -> (i32, i32) {
    %c0_i32 = arith.constant 0 : i32
    %c0_i32_0 = arith.constant 0 : i32
    %c0_i32_1 = arith.constant 0 : i32
    return %c0_i32, %c0_i32_0 : i32, i32
  }
  func.func @transform_5(%arg0: i32) -> (i32, i32) {
    %c0_i32 = arith.constant 0 : i32
    %c0_i32_0 = arith.constant 0 : i32
    %c0_i32_1 = arith.constant 0 : i32
    return %c0_i32, %c0_i32_0 : i32, i32
  }
  func.func @transform_6(%arg0: i32) -> (i32, i32) {
    %c0_i32 = arith.constant 0 : i32
    %c0_i32_0 = arith.constant 0 : i32
    %c0_i32_1 = arith.constant 0 : i32
    return %c0_i32, %c0_i32_0 : i32, i32
  }
  func.func @transform_7(%arg0: i32) -> (i32, i32, i32) {
    %c0_i32 = arith.constant 0 : i32
    %c0_i32_0 = arith.constant 0 : i32
    %c0_i32_1 = arith.constant 0 : i32
    return %arg0, %c0_i32, %c0_i32_0 : i32, i32, i32
  }
  func.func @transform_8(%arg0: i32) -> (i32, i32, i32) {
    %c0_i32 = arith.constant 0 : i32
    %c0_i32_0 = arith.constant 0 : i32
    %c0_i32_1 = arith.constant 0 : i32
    return %arg0, %c0_i32, %c0_i32_0 : i32, i32, i32
  }
  func.func @transform_9(%arg0: i32) -> (i32, i32, i32) {
    %c0_i32 = arith.constant 0 : i32
    %c0_i32_0 = arith.constant 0 : i32
    %c0_i32_1 = arith.constant 0 : i32
    return %arg0, %c0_i32, %c0_i32_0 : i32, i32, i32
  }
}

</mosaic_0001>

<llo_original>
// kernel: tpu_custom_call.1
$region0: #{tpu_custom_call.1}
  #allocation0 [shape = 'u32[]', space=smem, size = 0x4, offset = 0x4, fixed_abs, tag = 'smem constant byte address 0x4 - core index']
  #allocation1 [shape = 'u32[144,128]{1,0:T(1,128)}', space=vmem, size = 0x12000, scoped, tag = 'internal scratch']
  %s0 = inlined_call_operand.hbm [shape: f32[4,8,32], index: 0, kind: input, shape index: {}]
  %s1 = inlined_call_operand.hbm [shape: f32[32,64], index: 1, kind: input, shape index: {}]
  %s2 = inlined_call_operand.hbm [shape: f32[16,64], index: 2, kind: input, shape index: {}]
  %s3 = inlined_call_operand.vmem [shape: f32[1,64], index: 3, kind: input, shape index: {}]
  %s4 = inlined_call_operand.hbm [shape: f32[32,64], index: 4, kind: input, shape index: {}]
  %s5 = inlined_call_operand.vmem [shape: f32[16,64], index: 5, kind: input, shape index: {}]
  %s6 = inlined_call_operand.vmem [shape: f32[1,64], index: 6, kind: input, shape index: {}]
  %s7 = inlined_call_operand.vmem [shape: f32[4,2,16], index: 7, kind: input, shape index: {}]
  %s8 = inlined_call_operand.hbm [shape: f32[4,2,16], index: 8, kind: input, shape index: {}]
  %s9 = inlined_call_operand.hbm [shape: f32[4,8,32], index: 9, kind: output, shape index: {}]
  %s10 = sld [smem:[#allocation0]]
  $region89: #{tpu_custom_call.1} parent=0
    _
  %s12 = ssub.s32 1, %s10
  %s13 = scalar_select 0, %s12, %s10
  $region1: #{tpu_custom_call.1} parent=0
    #allocation2 [shape = 'u8[16384]{0}', space=vmem, size = 0x4000, scoped, tag = 'input window, operand 0']
    #allocation3 [shape = 's32[2]{0}', space=sflag, size = 0x8, scoped, tag = 'scoped memory for tpu_custom_call.1']
    #allocation4 [shape = 's32[2]{0}', space=sflag, size = 0x8, scoped, tag = 'scoped memory for tpu_custom_call.1']
    #allocation5 [shape = 'u8[16384]{0}', space=vmem, size = 0x4000, scoped, tag = 'input window, operand 1, single buffered']
    #allocation6 [shape = 's32[1]{0}', space=sflag, size = 0x4, scoped, tag = 'scoped memory for tpu_custom_call.1']
    #allocation7 [shape = 'u8[8192]{0}', space=vmem, size = 0x2000, scoped, tag = 'input window, operand 2, single buffered']
    #allocation8 [shape = 'u8[16384]{0}', space=vmem, size = 0x4000, scoped, tag = 'input window, operand 4, single buffered']
    #allocation9 [shape = 's32[1]{0}', space=sflag, size = 0x4, scoped, tag = 'scoped memory for tpu_custom_call.1']
    #allocation10 [shape = 'u8[4096]{0}', space=vmem, size = 0x1000, scoped, tag = 'input window, operand 8']
    #allocation11 [shape = 'u8[16384]{0}', space=vmem, size = 0x4000, scoped, tag = 'output window, operand 0']
    %14 = vsyncpa [#allocation3], 0
    %s15 = scalar_lea.sflag [#allocation3], 1
    %16 = vsyncpa %s15, 0
    %17 = vsyncpa [#allocation6], 0
    %18 = vsyncpa [#allocation9], 0
    %19 = vsyncpa [#allocation4], 0
    %s20 = scalar_lea.sflag [#allocation4], 1
    %21 = vsyncpa %s20, 0
    loop: start=0, step=1, limit=4
    $region2: #{tpu_custom_call.1} parent=1 // loop_pre_header
      _
    $region3: #{tpu_custom_call.1} parent=1 // loop_header
      %s23 = sphi 0, %s27
      %p24 = scmp.ge.s32.totalorder %s23, 4
      %s33 = sphi 0, %s35
      %s36 = sphi 0, %s33
      %s37 = sphi 0, %s36
      %s53 = sphi 0, %s37
      %s57 = sphi 0, %s57
      %s59 = sphi 0, %s57
      %s60 = sphi 0, %s59
      %s74 = sphi 0, %s60
      %s78 = sphi 0, %s78
      %s80 = sphi 0, %s78
      %s81 = sphi 0, %s80
      %s95 = sphi 0, %s81
      %s99 = sphi 0, %s99
      %s101 = sphi 0, %s99
      %s102 = sphi 0, %s101
      %s116 = sphi 0, %s102
      %s120 = sphi 0, %s120
      %s122 = sphi 0, %s120
      %s123 = sphi 0, %s122
      %s137 = sphi 0, %s123
      %s141 = sphi 0, %s141
      %s143 = sphi 0, %s141
      %s144 = sphi 0, %s143
      %s158 = sphi 0, %s144
      %s162 = sphi 0, %s162
      %s164 = sphi 0, %s162
      %s165 = sphi 0, %s164
      %s179 = sphi 0, %s165
      %s185 = sphi 0, %s187
      %s188 = sphi 0, %s185
      %s189 = sphi 0, %s188
      %s205 = sphi 0, %s189
      %s211 = sphi 0, %s213
      %s214 = sphi 0, %s211
      %s215 = sphi 0, %s214
      %s231 = sphi 0, %s215
      %s237 = sphi 0, %s239
      %s240 = sphi 0, %s237
      %s241 = sphi 0, %s240
      %s257 = sphi 0, %s241
    $region4: #{tpu_custom_call.1} parent=1 // loop_header_branch
      %26 = sbr.rel (%p24) target = $region8
    $region5: #{tpu_custom_call.1} parent=1 // loop_body
      %s28 = ssub.s32 %s23, 1
      %s29 = ssub.s32 %s23, 2
      %s30 = sadd.s32 %s23, 1
      %s31 = ssub.s32 %s23, %s30
      %p32 = scmp.eq.s32.totalorder %s31, 0
      %s34 = sadd.s32 %s33, 1
      %s35 = scalar_select %p32, %s33, %s34
      %p38 = pneg %p32
      %p39 = scmp.eq.s32.totalorder %s23, 1
      %p40 = por %p38, %p39
      %p41 = scmp.ne.s32.totalorder %s33, %s36
      %p42 = scmp.eq.s32.totalorder %s23, 0
      %p43 = por %p41, %p42
      %p44 = scmp.ne.s32.totalorder %s33, %s36
      %p45 = scmp.eq.s32.totalorder %s28, 1
      %p46 = por %p44, %p45
      %p47 = scmp.ne.s32.totalorder %s36, %s37
      %p48 = scmp.eq.s32.totalorder %s28, 0
      %p49 = por %p47, %p48
      %p50 = scmp.ne.s32.totalorder %s36, %s37
      %p51 = scmp.eq.s32.totalorder %s29, 1
      %p52 = por %p50, %p51
      %p54 = scmp.ne.s32.totalorder %s37, %s53
      %p55 = scmp.eq.s32.totalorder %s29, 0
      %p56 = por %p54, %p55
      %s58 = sadd.s32 %s57, 1
      %p61 = scmp.eq.s32.totalorder %s23, 1
      %p62 = scmp.ne.s32.totalorder %s57, %s59
      %p63 = scmp.eq.s32.totalorder %s23, 0
      %p64 = por %p62, %p63
      %p65 = scmp.ne.s32.totalorder %s57, %s59
      %p66 = scmp.eq.s32.totalorder %s28, 1
      %p67 = por %p65, %p66
      %p68 = scmp.ne.s32.totalorder %s59, %s60
      %p69 = scmp.eq.s32.totalorder %s28, 0
      %p70 = por %p68, %p69
      %p71 = scmp.ne.s32.totalorder %s59, %s60
      %p72 = scmp.eq.s32.totalorder %s29, 1
      %p73 = por %p71, %p72
      %p75 = scmp.ne.s32.totalorder %s60, %s74
      %p76 = scmp.eq.s32.totalorder %s29, 0
      %p77 = por %p75, %p76
      %s79 = sadd.s32 %s78, 1
      %p82 = scmp.eq.s32.totalorder %s23, 1
      %p83 = scmp.ne.s32.totalorder %s78, %s80
      %p84 = scmp.eq.s32.totalorder %s23, 0
      %p85 = por %p83, %p84
      %p86 = scmp.ne.s32.totalorder %s78, %s80
      %p87 = scmp.eq.s32.totalorder %s28, 1
      %p88 = por %p86, %p87
      %p89 = scmp.ne.s32.totalorder %s80, %s81
      %p90 = scmp.eq.s32.totalorder %s28, 0
      %p91 = por %p89, %p90
      %p92 = scmp.ne.s32.totalorder %s80, %s81
      %p93 = scmp.eq.s32.totalorder %s29, 1
      %p94 = por %p92, %p93
      %p96 = scmp.ne.s32.totalorder %s81, %s95
      %p97 = scmp.eq.s32.totalorder %s29, 0
      %p98 = por %p96, %p97
      %s100 = sadd.s32 %s99, 1
      %p103 = scmp.eq.s32.totalorder %s23, 1
      %p104 = scmp.ne.s32.totalorder %s99, %s101
      %p105 = scmp.eq.s32.totalorder %s23, 0
      %p106 = por %p104, %p105
      %p107 = scmp.ne.s32.totalorder %s99, %s101
      %p108 = scmp.eq.s32.totalorder %s28, 1
      %p109 = por %p107, %p108
      %p110 = scmp.ne.s32.totalorder %s101, %s102
      %p111 = scmp.eq.s32.totalorder %s28, 0
      %p112 = por %p110, %p111
      %p113 = scmp.ne.s32.totalorder %s101, %s102
      %p114 = scmp.eq.s32.totalorder %s29, 1
      %p115 = por %p113, %p114
      %p117 = scmp.ne.s32.totalorder %s102, %s116
      %p118 = scmp.eq.s32.totalorder %s29, 0
      %p119 = por %p117, %p118
      %s121 = sadd.s32 %s120, 1
      %p124 = scmp.eq.s32.totalorder %s23, 1
      %p125 = scmp.ne.s32.totalorder %s120, %s122
      %p126 = scmp.eq.s32.totalorder %s23, 0
      %p127 = por %p125, %p126
      %p128 = scmp.ne.s32.totalorder %s120, %s122
      %p129 = scmp.eq.s32.totalorder %s28, 1
      %p130 = por %p128, %p129
      %p131 = scmp.ne.s32.totalorder %s122, %s123
      %p132 = scmp.eq.s32.totalorder %s28, 0
      %p133 = por %p131, %p132
      %p134 = scmp.ne.s32.totalorder %s122, %s123
      %p135 = scmp.eq.s32.totalorder %s29, 1
      %p136 = por %p134, %p135
      %p138 = scmp.ne.s32.totalorder %s123, %s137
      %p139 = scmp.eq.s32.totalorder %s29, 0
      %p140 = por %p138, %p139
      %s142 = sadd.s32 %s141, 1
      %p145 = scmp.eq.s32.totalorder %s23, 1
      %p146 = scmp.ne.s32.totalorder %s141, %s143
      %p147 = scmp.eq.s32.totalorder %s23, 0
      %p148 = por %p146, %p147
      %p149 = scmp.ne.s32.totalorder %s141, %s143
      %p150 = scmp.eq.s32.totalorder %s28, 1
      %p151 = por %p149, %p150
      %p152 = scmp.ne.s32.totalorder %s143, %s144
      %p153 = scmp.eq.s32.totalorder %s28, 0
      %p154 = por %p152, %p153
      %p155 = scmp.ne.s32.totalorder %s143, %s144
      %p156 = scmp.eq.s32.totalorder %s29, 1
      %p157 = por %p155, %p156
      %p159 = scmp.ne.s32.totalorder %s144, %s158
      %p160 = scmp.eq.s32.totalorder %s29, 0
      %p161 = por %p159, %p160
      %s163 = sadd.s32 %s162, 1
      %p166 = scmp.eq.s32.totalorder %s23, 1
      %p167 = scmp.ne.s32.totalorder %s162, %s164
      %p168 = scmp.eq.s32.totalorder %s23, 0
      %p169 = por %p167, %p168
      %p170 = scmp.ne.s32.totalorder %s162, %s164
      %p171 = scmp.eq.s32.totalorder %s28, 1
      %p172 = por %p170, %p171
      %p173 = scmp.ne.s32.totalorder %s164, %s165
      %p174 = scmp.eq.s32.totalorder %s28, 0
      %p175 = por %p173, %p174
      %p176 = scmp.ne.s32.totalorder %s164, %s165
      %p177 = scmp.eq.s32.totalorder %s29, 1
      %p178 = por %p176, %p177
      %p180 = scmp.ne.s32.totalorder %s165, %s179
      %p181 = scmp.eq.s32.totalorder %s29, 0
      %p182 = por %p180, %p181
      %s183 = ssub.s32 %s23, %s30
      %p184 = scmp.eq.s32.totalorder %s183, 0
      %s186 = sadd.s32 %s185, 1
      %s187 = scalar_select %p184, %s185, %s186
      %p190 = pneg %p184
      %p191 = scmp.eq.s32.totalorder %s23, 1
      %p192 = por %p190, %p191
      %p193 = scmp.ne.s32.totalorder %s185, %s188
      %p194 = scmp.eq.s32.totalorder %s23, 0
      %p195 = por %p193, %p194
      %p196 = scmp.ne.s32.totalorder %s185, %s188
      %p197 = scmp.eq.s32.totalorder %s28, 1
      %p198 = por %p196, %p197
      %p199 = scmp.ne.s32.totalorder %s188, %s189
      %p200 = scmp.eq.s32.totalorder %s28, 0
      %p201 = por %p199, %p200
      %p202 = scmp.ne.s32.totalorder %s188, %s189
      %p203 = scmp.eq.s32.totalorder %s29, 1
      %p204 = por %p202, %p203
      %p206 = scmp.ne.s32.totalorder %s189, %s205
      %p207 = scmp.eq.s32.totalorder %s29, 0
      %p208 = por %p206, %p207
      %s209 = ssub.s32 %s23, %s30
      %p210 = scmp.eq.s32.totalorder %s209, 0
      %s212 = sadd.s32 %s211, 1
      %s213 = scalar_select %p210, %s211, %s212
      %p216 = pneg %p210
      %p217 = scmp.eq.s32.totalorder %s23, 1
      %p218 = por %p216, %p217
      %p219 = scmp.ne.s32.totalorder %s211, %s214
      %p220 = scmp.eq.s32.totalorder %s23, 0
      %p221 = por %p219, %p220
      %p222 = scmp.ne.s32.totalorder %s211, %s214
      %p223 = scmp.eq.s32.totalorder %s28, 1
      %p224 = por %p222, %p223
      %p225 = scmp.ne.s32.totalorder %s214, %s215
      %p226 = scmp.eq.s32.totalorder %s28, 0
      %p227 = por %p225, %p226
      %p228 = scmp.ne.s32.totalorder %s214, %s215
      %p229 = scmp.eq.s32.totalorder %s29, 1
      %p230 = por %p228, %p229
      %p232 = scmp.ne.s32.totalorder %s215, %s231
      %p233 = scmp.eq.s32.totalorder %s29, 0
      %p234 = por %p232, %p233
      %s235 = ssub.s32 %s23, %s30
      %p236 = scmp.eq.s32.totalorder %s235, 0
      %s238 = sadd.s32 %s237, 1
      %s239 = scalar_select %p236, %s237, %s238
      %p242 = pneg %p236
      %p243 = scmp.eq.s32.totalorder %s23, 1
      %p244 = por %p242, %p243
      %p245 = scmp.ne.s32.totalorder %s237, %s240
      %p246 = scmp.eq.s32.totalorder %s23, 0
      %p247 = por %p245, %p246
      %p248 = scmp.ne.s32.totalorder %s237, %s240
      %p249 = scmp.eq.s32.totalorder %s28, 1
      %p250 = por %p248, %p249
      %p251 = scmp.ne.s32.totalorder %s240, %s241
      %p252 = scmp.eq.s32.totalorder %s28, 0
      %p253 = por %p251, %p252
      %p254 = scmp.ne.s32.totalorder %s240, %s241
      %p255 = scmp.eq.s32.totalorder %s29, 1
      %p256 = por %p254, %p255
      %p258 = scmp.ne.s32.totalorder %s241, %s257
      %p259 = scmp.eq.s32.totalorder %s29, 0
      %p260 = por %p258, %p259
      %p261 = scmp.le.s32.totalorder 1, %s23
      %p262 = scmp.lt.s32.totalorder %s23, 3
      %p263 = pnand %p261, %p262
      %p264 = pneg %p263
      // Predicated region
      $region9: #{tpu_custom_call.1} parent=5 // pred_check
        _
      $region10: #{tpu_custom_call.1} parent=5 // pred_check_branch
        %266 = sbr.rel (%p263) target = $region12
      $region11: #{tpu_custom_call.1} parent=5 // pred_region
        %s267 = ssub.s32 %s23, 1
        // Predicated region
        $region13: #{tpu_custom_call.1} parent=11 // pred_check
          %p268 = pneg %p70
        $region14: #{tpu_custom_call.1} parent=11 // pred_check_branch
          %270 = sbr.rel (%p268) target = $region16
        $region15: #{tpu_custom_call.1} parent=11 // pred_region
          %s272 = ssub.s32 512, 512
          %273 = vsyncadd [#allocation6], %s272
          %s274 = sshll.u32 [#allocation5], 4
          %s275 = int_to_ptr.vmem [resolvable:$true] %s274
          %280 = dma.hbm_to_vmem [thread:$0]  %s1, 512, %s275, [#allocation6], 128, 128, 8
        $region16: #{tpu_custom_call.1} parent=11 // pred_fallthru
          _
        // Predicated region
        $region17: #{tpu_custom_call.1} parent=11 // pred_check
          %p281 = pneg %p91
        $region18: #{tpu_custom_call.1} parent=11 // pred_check_branch
          %283 = sbr.rel (%p281) target = $region20
        $region19: #{tpu_custom_call.1} parent=11 // pred_region
          %s285 = ssub.s32 256, 256
          %286 = vsyncadd [#allocation6], %s285
          %s287 = sshll.u32 [#allocation7], 4
          %s288 = int_to_ptr.vmem [resolvable:$true] %s287
          %293 = dma.hbm_to_vmem [thread:$0]  %s2, 256, %s288, [#allocation6], 128, 128, 8
        $region20: #{tpu_custom_call.1} parent=11 // pred_fallthru
          _
        // Predicated region
        $region21: #{tpu_custom_call.1} parent=11 // pred_check
          %p294 = pneg %p112
        $region22: #{tpu_custom_call.1} parent=11 // pred_check_branch
          %296 = sbr.rel (%p294) target = $region24
        $region23: #{tpu_custom_call.1} parent=11 // pred_region
          _
        $region24: #{tpu_custom_call.1} parent=11 // pred_fallthru
          _
        // Predicated region
        $region25: #{tpu_custom_call.1} parent=11 // pred_check
          %p297 = pneg %p133
        $region26: #{tpu_custom_call.1} parent=11 // pred_check_branch
          %299 = sbr.rel (%p297) target = $region28
        $region27: #{tpu_custom_call.1} parent=11 // pred_region
          %s301 = ssub.s32 512, 512
          %302 = vsyncadd [#allocation9], %s301
          %s303 = sshll.u32 [#allocation8], 4
          %s304 = int_to_ptr.vmem [resolvable:$true] %s303
          %309 = dma.hbm_to_vmem [thread:$0]  %s4, 512, %s304, [#allocation9], 128, 128, 8
        $region28: #{tpu_custom_call.1} parent=11 // pred_fallthru
          _
        // Predicated region
        $region29: #{tpu_custom_call.1} parent=11 // pred_check
          %p310 = pneg %p154
        $region30: #{tpu_custom_call.1} parent=11 // pred_check_branch
          %312 = sbr.rel (%p310) target = $region32
        $region31: #{tpu_custom_call.1} parent=11 // pred_region
          _
        $region32: #{tpu_custom_call.1} parent=11 // pred_fallthru
          _
        // Predicated region
        $region33: #{tpu_custom_call.1} parent=11 // pred_check
          %p313 = pneg %p175
        $region34: #{tpu_custom_call.1} parent=11 // pred_check_branch
          %315 = sbr.rel (%p313) target = $region36
        $region35: #{tpu_custom_call.1} parent=11 // pred_region
          _
        $region36: #{tpu_custom_call.1} parent=11 // pred_fallthru
          _
      $region12: #{tpu_custom_call.1} parent=5 // pred_fallthru
        _
      %p316 = scmp.lt.s32.totalorder %s23, 2
      // Predicated region
      $region37: #{tpu_custom_call.1} parent=5 // pred_check
        %p317 = pneg %p316
      $region38: #{tpu_custom_call.1} parent=5 // pred_check_branch
        %319 = sbr.rel (%p317) target = $region40
      $region39: #{tpu_custom_call.1} parent=5 // pred_region
        // Predicated region
        $region41: #{tpu_custom_call.1} parent=39 // pred_check
          %p320 = pneg %p43
        $region42: #{tpu_custom_call.1} parent=39 // pred_check_branch
          %322 = sbr.rel (%p320) target = $region44
        $region43: #{tpu_custom_call.1} parent=39 // pred_region
          %s323 = sand.u32 %s23, 1
          %s324 = scalar_lea.sflag [#allocation3], %s323
          %s325 = sand.u32 %s33, 1
          %s326 = smul.addr %s325, 16
          %s327 = scalar_lea.vmem [#allocation2], %s326
          %s328 = smul.u32 2, %s23
          %s330 = ssub.s32 256, 256
          %331 = vsyncadd %s324, %s330
          %s332 = smul.addr %s328, 128
          %s333 = scalar_lea.hbm %s0, %s332
          %s334 = sshll.u32 %s327, 4
          %s335 = int_to_ptr.vmem [resolvable:$true] %s334
          %340 = dma.hbm_to_vmem [thread:$0]  %s333, 256, %s335, %s324, 128, 128, 8
        $region44: #{tpu_custom_call.1} parent=39 // pred_fallthru
          _
        // Predicated region
        $region45: #{tpu_custom_call.1} parent=39 // pred_check
          %p341 = pneg %p195
        $region46: #{tpu_custom_call.1} parent=39 // pred_check_branch
          %343 = sbr.rel (%p341) target = $region48
        $region47: #{tpu_custom_call.1} parent=39 // pred_region
          %s344 = smul.u32 2, %s23
          %p345 = scmp.lt.s32.totalorder %s344, 3
          %s346 = scalar_select %p345, %s344, 3
          %s347 = smul.addr %s346, 2
          %s348 = scalar_lea.vmem %s7, %s347
          %s349 = smul.u32 2, %s23
        $region48: #{tpu_custom_call.1} parent=39 // pred_fallthru
          _
        // Predicated region
        $region49: #{tpu_custom_call.1} parent=39 // pred_check
          %p350 = pneg %p221
        $region50: #{tpu_custom_call.1} parent=39 // pred_check_branch
          %352 = sbr.rel (%p350) target = $region52
        $region51: #{tpu_custom_call.1} parent=39 // pred_region
          %s353 = sand.u32 %s23, 1
          %s354 = scalar_lea.sflag [#allocation3], %s353
          %s355 = sand.u32 %s211, 1
          %s356 = smul.addr %s355, 4
          %s357 = scalar_lea.vmem [#allocation10], %s356
          %s358 = smul.u32 2, %s23
          %s360 = ssub.s32 64, 64
          %361 = vsyncadd %s354, %s360
          %s362 = smul.addr %s358, 32
          %s363 = scalar_lea.hbm %s8, %s362
          %s364 = sshll.u32 %s357, 4
          %s365 = int_to_ptr.vmem [resolvable:$true] %s364
          %370 = dma.hbm_to_vmem [thread:$0]  %s363, 64, %s365, %s354, 32, 32, 2
        $region52: #{tpu_custom_call.1} parent=39 // pred_fallthru
          _
      $region40: #{tpu_custom_call.1} parent=5 // pred_fallthru
        _
      %p371 = scmp.le.s32.totalorder 1, %s23
      %p372 = scmp.lt.s32.totalorder %s23, 3
      %p373 = pnand %p371, %p372
      %p374 = pneg %p373
      // Predicated region
      $region53: #{tpu_custom_call.1} parent=5 // pred_check
        _
      $region54: #{tpu_custom_call.1} parent=5 // pred_check_branch
        %376 = sbr.rel (%p373) target = $region56
      $region55: #{tpu_custom_call.1} parent=5 // pred_region
        %s377 = ssub.s32 %s23, 1
        %s378 = sand.u32 %s28, 1
        %s379 = scalar_lea.sflag [#allocation3], %s378
        %s380 = sand.u32 %s36, 1
        %s381 = smul.addr %s380, 16
        %s382 = scalar_lea.vmem [#allocation2], %s381
        // Predicated region
        $region57: #{tpu_custom_call.1} parent=55 // pred_check
          %p383 = pneg %p49
        $region58: #{tpu_custom_call.1} parent=55 // pred_check_branch
          %385 = sbr.rel (%p383) target = $region60
        $region59: #{tpu_custom_call.1} parent=55 // pred_region
          %386 = dma.done %s379, 256
        $region60: #{tpu_custom_call.1} parent=55 // pred_fallthru
          _
        // Predicated region
        $region61: #{tpu_custom_call.1} parent=55 // pred_check
          %p387 = pneg %p70
        $region62: #{tpu_custom_call.1} parent=55 // pred_check_branch
          %389 = sbr.rel (%p387) target = $region64
        $region63: #{tpu_custom_call.1} parent=55 // pred_region
          %390 = dma.done [#allocation6], 512
        $region64: #{tpu_custom_call.1} parent=55 // pred_fallthru
          _
        // Predicated region
        $region65: #{tpu_custom_call.1} parent=55 // pred_check
          %p391 = pneg %p91
        $region66: #{tpu_custom_call.1} parent=55 // pred_check_branch
          %393 = sbr.rel (%p391) target = $region68
        $region67: #{tpu_custom_call.1} parent=55 // pred_region
          %394 = dma.done [#allocation6], 256
        $region68: #{tpu_custom_call.1} parent=55 // pred_fallthru
          _
        // Predicated region
        $region69: #{tpu_custom_call.1} parent=55 // pred_check
          %p395 = pneg %p133
        $region70: #{tpu_custom_call.1} parent=55 // pred_check_branch
          %397 = sbr.rel (%p395) target = $region72
        $region71: #{tpu_custom_call.1} parent=55 // pred_region
          %398 = dma.done [#allocation9], 512
        $region72: #{tpu_custom_call.1} parent=55 // pred_fallthru
          _
        %s399 = sand.u32 %s28, 1
        %s400 = scalar_lea.sflag [#allocation3], %s399
        %s401 = sand.u32 %s214, 1
        %s402 = smul.addr %s401, 4
        %s403 = scalar_lea.vmem [#allocation10], %s402
        // Predicated region
        $region73: #{tpu_custom_call.1} parent=55 // pred_check
          %p404 = pneg %p227
        $region74: #{tpu_custom_call.1} parent=55 // pred_check_branch
          %406 = sbr.rel (%p404) target = $region76
        $region75: #{tpu_custom_call.1} parent=55 // pred_region
          %407 = dma.done %s400, 64
        $region76: #{tpu_custom_call.1} parent=55 // pred_fallthru
          _
        %s408 = sand.u32 %s28, 1
        %s409 = scalar_lea.sflag [#allocation3], %s408
        %s410 = sand.u32 %s36, 1
        %s411 = smul.addr %s410, 16
        %s412 = scalar_lea.vmem [#allocation2], %s411
        %p413 = pneg %p49
        %p414 = pneg %p46
        %p415 = pneg %p70
        %p416 = pneg %p67
        %p417 = pneg %p91
        %p418 = pneg %p88
        %p419 = pneg %p112
        %p420 = pneg %p109
        %p421 = pneg %p133
        %p422 = pneg %p130
        %p423 = pneg %p154
        %p424 = pneg %p151
        %p425 = pneg %p175
        %p426 = pneg %p172
        %s427 = smul.u32 2, %s28
        %p428 = scmp.lt.s32.totalorder %s427, 3
        %s429 = scalar_select %p428, %s427, 3
        %s430 = smul.addr %s429, 2
        %s431 = scalar_lea.vmem %s7, %s430
        %p432 = pneg %p201
        %p433 = pneg %p198
        %s434 = sand.u32 %s28, 1
        %s435 = scalar_lea.sflag [#allocation3], %s434
        %s436 = sand.u32 %s214, 1
        %s437 = smul.addr %s436, 4
        %s438 = scalar_lea.vmem [#allocation10], %s437
        %p439 = pneg %p227
        %p440 = pneg %p224
        %p441 = pneg %p253
        %p442 = pneg %p250
        %s443 = sand.u32 %s240, 1
        %s444 = scalar_lea.sflag [#allocation4], %s443
        %s445 = sand.u32 %s240, 1
        %s446 = smul.addr %s445, 16
        %s447 = scalar_lea.vmem [#allocation11], %s446
        %s448 = smul.u32 2, %s28
        %s449 = smul.u32 2, %s28
        %p450 = scmp.lt.s32.totalorder %s449, 3
        %s451 = scalar_select %p450, %s449, 3
        %s452 = smul.addr %s451, 2
        %s453 = scalar_lea.vmem %s7, %s452
        %s454 = smul.u32 2, %s28
        %s455 = smul.u32 2, %s28
        %s456 = smul.u32 2, %s28
        %v457 = vld [vmem:[%s382] sm:$0xff]
        %v458 = vld [vmem:[%s382 + $0x8] sm:$0xff]
        %v459 = vld [vmem:[#allocation5] sm:$0xff]
        %v460 = vld [vmem:[#allocation5 + $0x8] sm:$0xff]
        %v461 = vld [vmem:[#allocation5 + $0x10] sm:$0xff]
        %v462 = vld [vmem:[#allocation5 + $0x18] sm:$0xff]
        %v463 = vld [vmem:[%s3] sm:$0x1]
        %v465 = vlaneseq
        %v466 = vshrl.u32 %v465, 7
        %v467 = vsub.s32 0, %v466
        %v468 = vrot.slane %v463, %v467
        %vm470 = vcmask 261120
        %v472 = vsel %vm470, %v457, 0
        %v475 = vsel %vm470, %v458, 0
        %477 = vmatprep.subr.mxu0 0.0
        %478 = vmatpush1.msra.mxu0 %v459
        %479 = vmatprep.subr.mxu0 0.0
        %480 = vmatpush1.msra.mxu0 %v460
        %481 = vmatprep.subr.mxu0 0.0
        %482 = vmatpush1.msra.mxu0 %v461
        %483 = vmatprep.subr.mxu0 0.0
        %484 = vmatpush1.msra.mxu0 %v462
        %485 = vmatprep.subr.mxu0 0.0
        %486 = vmatpush1.msra.mxu0 0.0
        %487 = vmatprep.subr.mxu0 0.0
        %488 = vmatpush1.msra.mxu0 0.0
        %489 = vmatprep.subr.mxu0 0.0
        %490 = vmatpush1.msra.mxu0 0.0
        %491 = vmatprep.subr.mxu0 0.0
        %492 = vmatpush1.msra.mxu0 0.0
        %493 = vmatprep.subr.mxu0 0.0
        %494 = vmatpush1.msra.mxu0 0.0
        %495 = vmatprep.subr.mxu0 0.0
        %496 = vmatpush1.msra.mxu0 0.0
        %497 = vmatprep.subr.mxu0 0.0
        %498 = vmatpush1.msra.mxu0 0.0
        %499 = vmatprep.subr.mxu0 0.0
        %500 = vmatpush1.msra.mxu0 0.0
        %501 = vmatprep.subr.mxu0 0.0
        %502 = vmatpush1.msra.mxu0 0.0
        %503 = vmatprep.subr.mxu0 0.0
        %504 = vmatpush1.msra.mxu0 0.0
        %505 = vmatprep.subr.mxu0 0.0
        %506 = vmatpush1.msra.mxu0 0.0
        %507 = vmatprep.subr.mxu0 0.0
        %508 = vmatpush1.msra.mxu0 0.0
        %509 = vmatprep.subr.mxu0 0.0
        %510 = vmatpush1.msra.mxu0 0.0
        %511 = vmatprep.subr.mxu0 0.0
        %512 = vmatpush1.msra.mxu0 0.0
        %513 = vmatprep.subr.mxu0 0.0
        %514 = vmatpush1.msra.mxu0 0.0
        %515 = vmatprep.subr.mxu0 0.0
        %516 = vmatpush1.msra.mxu0 0.0
        %517 = vmatprep.subr.mxu0 0.0
        %518 = vmatpush1.msra.mxu0 0.0
        %519 = vmatprep.subr.mxu0 0.0
        %520 = vmatpush1.msra.mxu0 0.0
        %521 = vmatprep.subr.mxu0 0.0
        %522 = vmatpush1.msra.mxu0 0.0
        %523 = vmatprep.subr.mxu0 0.0
        %524 = vmatpush1.msra.mxu0 0.0
        %525 = vmatprep.subr.mxu0 0.0
        %526 = vmatpush1.msra.mxu0 0.0
        %527 = vmatprep.subr.mxu0 0.0
        %528 = vmatpush1.msra.mxu0 0.0
        %529 = vmatprep.subr.mxu0 0.0
        %530 = vmatpush1.msra.mxu0 0.0
        %531 = vmatprep.subr.mxu0 0.0
        %532 = vmatpush1.msra.mxu0 0.0
        %533 = vmatprep.subr.mxu0 0.0
        %534 = vmatpush1.msra.mxu0 0.0
        %535 = vmatprep.subr.mxu0 0.0
        %536 = vmatpush1.msra.mxu0 0.0
        %537 = vmatprep.subr.mxu0 0.0
        %538 = vmatpush1.msra.mxu0 0.0
        %539 = vmatprep.subr.mxu0 0.0
        %540 = vmatpush1.msra.mxu0 0.0
        %541 = vmatprep.mubr.f32.mxu0 0.0
        %542 = vmatmul.mubr.f32.gmra.mrb[0].mxu0 %v472
        %v543 = vpop.f32.mrb[0].mxu0
        %v544 = vadd.f32 %v468, %v543
        %v545 = vpop.f32.mrb[0].mxu0
        %546 = vmatprep.mubr.f32.mxu0 0.0
        %547 = vmatmul.mubr.f32.gmra.mrb[0].mxu0 %v475
        %v548 = vpop.f32.mrb[0].mxu0
        %v549 = vadd.f32 %v468, %v548
        %v550 = vpop.f32.mrb[0].mxu0
        %551 = vdwg.mxu0
        %v552 = vld [vmem:[#allocation8] sm:$0xff]
        %v553 = vld [vmem:[#allocation8 + $0x8] sm:$0xff]
        %v554 = vld [vmem:[#allocation8 + $0x10] sm:$0xff]
        %v555 = vld [vmem:[#allocation8 + $0x18] sm:$0xff]
        %v556 = vld [vmem:[%s6] sm:$0x1]
        %v558 = vlaneseq
        %v559 = vshrl.u32 %v558, 7
        %v560 = vsub.s32 0, %v559
        %v561 = vrot.slane %v556, %v560
        %563 = vmatprep.subr.mxu0 0.0
        %564 = vmatpush1.msra.mxu0 %v552
        %565 = vmatprep.subr.mxu0 0.0
        %566 = vmatpush1.msra.mxu0 %v553
        %567 = vmatprep.subr.mxu0 0.0
        %568 = vmatpush1.msra.mxu0 %v554
        %569 = vmatprep.subr.mxu0 0.0
        %570 = vmatpush1.msra.mxu0 %v555
        %571 = vmatprep.subr.mxu0 0.0
        %572 = vmatpush1.msra.mxu0 0.0
        %573 = vmatprep.subr.mxu0 0.0
        %574 = vmatpush1.msra.mxu0 0.0
        %575 = vmatprep.subr.mxu0 0.0
        %576 = vmatpush1.msra.mxu0 0.0
        %577 = vmatprep.subr.mxu0 0.0
        %578 = vmatpush1.msra.mxu0 0.0
        %579 = vmatprep.subr.mxu0 0.0
        %580 = vmatpush1.msra.mxu0 0.0
        %581 = vmatprep.subr.mxu0 0.0
        %582 = vmatpush1.msra.mxu0 0.0
        %583 = vmatprep.subr.mxu0 0.0
        %584 = vmatpush1.msra.mxu0 0.0
        %585 = vmatprep.subr.mxu0 0.0
        %586 = vmatpush1.msra.mxu0 0.0
        %587 = vmatprep.subr.mxu0 0.0
        %588 = vmatpush1.msra.mxu0 0.0
        %589 = vmatprep.subr.mxu0 0.0
        %590 = vmatpush1.msra.mxu0 0.0
        %591 = vmatprep.subr.mxu0 0.0
        %592 = vmatpush1.msra.mxu0 0.0
        %593 = vmatprep.subr.mxu0 0.0
        %594 = vmatpush1.msra.mxu0 0.0
        %595 = vmatprep.subr.mxu0 0.0
        %596 = vmatpush1.msra.mxu0 0.0
        %597 = vmatprep.subr.mxu0 0.0
        %598 = vmatpush1.msra.mxu0 0.0
        %599 = vmatprep.subr.mxu0 0.0
        %600 = vmatpush1.msra.mxu0 0.0
        %601 = vmatprep.subr.mxu0 0.0
        %602 = vmatpush1.msra.mxu0 0.0
        %603 = vmatprep.subr.mxu0 0.0
        %604 = vmatpush1.msra.mxu0 0.0
        %605 = vmatprep.subr.mxu0 0.0
        %606 = vmatpush1.msra.mxu0 0.0
        %607 = vmatprep.subr.mxu0 0.0
        %608 = vmatpush1.msra.mxu0 0.0
        %609 = vmatprep.subr.mxu0 0.0
        %610 = vmatpush1.msra.mxu0 0.0
        %611 = vmatprep.subr.mxu0 0.0
        %612 = vmatpush1.msra.mxu0 0.0
        %613 = vmatprep.subr.mxu0 0.0
        %614 = vmatpush1.msra.mxu0 0.0
        %615 = vmatprep.subr.mxu0 0.0
        %616 = vmatpush1.msra.mxu0 0.0
        %617 = vmatprep.subr.mxu0 0.0
        %618 = vmatpush1.msra.mxu0 0.0
        %619 = vmatprep.subr.mxu0 0.0
        %620 = vmatpush1.msra.mxu0 0.0
        %621 = vmatprep.subr.mxu0 0.0
        %622 = vmatpush1.msra.mxu0 0.0
        %623 = vmatprep.subr.mxu0 0.0
        %624 = vmatpush1.msra.mxu0 0.0
        %625 = vmatprep.subr.mxu0 0.0
        %626 = vmatpush1.msra.mxu0 0.0
        %627 = vmatprep.mubr.f32.mxu0 0.0
        %628 = vmatmul.mubr.f32.gmra.mrb[0].mxu0 %v472
        %v629 = vpop.f32.mrb[0].mxu0
        %v630 = vadd.f32 %v561, %v629
        %v631 = vpop.f32.mrb[0].mxu0
        %632 = vmatprep.mubr.f32.mxu0 0.0
        %633 = vmatmul.mubr.f32.gmra.mrb[0].mxu0 %v475
        %v634 = vpop.f32.mrb[0].mxu0
        %v635 = vadd.f32 %v561, %v634
        %v636 = vpop.f32.mrb[0].mxu0
        %637 = vdwg.mxu0
        %v638 = vld [vmem:[#allocation7] sm:$0xff]
        %v639 = vld [vmem:[#allocation7 + $0x8] sm:$0xff]
        %v640 = vld [vmem:[%s5] sm:$0xff]
        %v641 = vld [vmem:[%s5 + $0x8] sm:$0xff]
        %v642 = vld [vmem:[%s453] sm:$0x1]
        %v643 = vld [vmem:[%s453 + $0x2] sm:$0x1]
        %v644 = vld [vmem:[%s403] sm:$0x1]
        %v645 = vld [vmem:[%s403 + $0x2] sm:$0x1]
        %v646 = vld [vmem:[%s453 + $0x1] sm:$0x1]
        %v647 = vld [vmem:[%s453 + $0x3] sm:$0x1]
        %v648 = vld [vmem:[%s403 + $0x1] sm:$0x1]
        %v649 = vld [vmem:[%s403 + $0x3] sm:$0x1]
        %v652 = vrot.slane %v643, 7
        %vm653 = vcmask 1041409
        %v654 = vsel %vm653, %v652, %v642
        %vm655 = vcmask 130048
        %v656 = vsel %vm655, %v654, 0
        %658 = vmatprep.subr.mxu0 0.0
        %659 = vmatpush1.msra.mxu0 %v638
        %660 = vmatprep.subr.mxu0 0.0
        %661 = vmatpush1.msra.mxu0 %v639
        %662 = vmatprep.subr.mxu0 0.0
        %663 = vmatpush1.msra.mxu0 0.0
        %664 = vmatprep.subr.mxu0 0.0
        %665 = vmatpush1.msra.mxu0 0.0
        %666 = vmatprep.subr.mxu0 0.0
        %667 = vmatpush1.msra.mxu0 0.0
        %668 = vmatprep.subr.mxu0 0.0
        %669 = vmatpush1.msra.mxu0 0.0
        %670 = vmatprep.subr.mxu0 0.0
        %671 = vmatpush1.msra.mxu0 0.0
        %672 = vmatprep.subr.mxu0 0.0
        %673 = vmatpush1.msra.mxu0 0.0
        %674 = vmatprep.subr.mxu0 0.0
        %675 = vmatpush1.msra.mxu0 0.0
        %676 = vmatprep.subr.mxu0 0.0
        %677 = vmatpush1.msra.mxu0 0.0
        %678 = vmatprep.subr.mxu0 0.0
        %679 = vmatpush1.msra.mxu0 0.0
        %680 = vmatprep.subr.mxu0 0.0
        %681 = vmatpush1.msra.mxu0 0.0
        %682 = vmatprep.subr.mxu0 0.0
        %683 = vmatpush1.msra.mxu0 0.0
        %684 = vmatprep.subr.mxu0 0.0
        %685 = vmatpush1.msra.mxu0 0.0
        %686 = vmatprep.subr.mxu0 0.0
        %687 = vmatpush1.msra.mxu0 0.0
        %688 = vmatprep.subr.mxu0 0.0
        %689 = vmatpush1.msra.mxu0 0.0
        %690 = vmatprep.subr.mxu0 0.0
        %691 = vmatpush1.msra.mxu0 0.0
        %692 = vmatprep.subr.mxu0 0.0
        %693 = vmatpush1.msra.mxu0 0.0
        %694 = vmatprep.subr.mxu0 0.0
        %695 = vmatpush1.msra.mxu0 0.0
        %696 = vmatprep.subr.mxu0 0.0
        %697 = vmatpush1.msra.mxu0 0.0
        %698 = vmatprep.subr.mxu0 0.0
        %699 = vmatpush1.msra.mxu0 0.0
        %700 = vmatprep.subr.mxu0 0.0
        %701 = vmatpush1.msra.mxu0 0.0
        %702 = vmatprep.subr.mxu0 0.0
        %703 = vmatpush1.msra.mxu0 0.0
        %704 = vmatprep.subr.mxu0 0.0
        %705 = vmatpush1.msra.mxu0 0.0
        %706 = vmatprep.subr.mxu0 0.0
        %707 = vmatpush1.msra.mxu0 0.0
        %708 = vmatprep.subr.mxu0 0.0
        %709 = vmatpush1.msra.mxu0 0.0
        %710 = vmatprep.subr.mxu0 0.0
        %711 = vmatpush1.msra.mxu0 0.0
        %712 = vmatprep.subr.mxu0 0.0
        %713 = vmatpush1.msra.mxu0 0.0
        %714 = vmatprep.subr.mxu0 0.0
        %715 = vmatpush1.msra.mxu0 0.0
        %716 = vmatprep.subr.mxu0 0.0
        %717 = vmatpush1.msra.mxu0 0.0
        %718 = vmatprep.subr.mxu0 0.0
        %719 = vmatpush1.msra.mxu0 0.0
        %720 = vmatprep.subr.mxu0 0.0
        %721 = vmatpush1.msra.mxu0 0.0
        %722 = vmatprep.mubr.f32.mxu0 0.0
        %723 = vmatmul.mubr.f32.gmra.mrb[0].mxu0 %v656
        %v724 = vpop.f32.mrb[0].mxu0
        %v725 = vadd.f32 0.0, %v724
        %v726 = vpop.f32.mrb[0].mxu0
        %727 = vdwg.mxu0
        %v729 = vrot.slane %v725, 1
        %v732 = vadd.f32 %v544, %v725
        %v733 = vadd.f32 %v549, %v729
        %v734 = vxor.u32 %v732, 2147483648
        %v735 = vxor.u32 %v733, 2147483648
        %v736 = vmul.f32 %v734, 1.442695
        %v737 = vpow.pop %v736
        %v738 = vmul.f32 %v735, 1.442695
        %v739 = vpow.pop %v738
        %v740 = vadd.f32 %v737, 1.0
        %v741 = vadd.f32 %v739, 1.0
        %v742 = vrcp.pop %v740
        %v743 = vmul.f32 1.0, %v742
        %v744 = vrcp.pop %v741
        %v745 = vmul.f32 1.0, %v744
        %v746 = vtanh.pop %v732
        %v747 = vtanh.pop %v733
        %750 = vrot.lane.b32.xlu0 %v644, 16
        %v751 = vpop.permute.xlu0 %750
        %752 = vrot.lane.b32.xlu0 %v645, 16
        %v753 = vpop.permute.xlu0 %752
        %v756 = vmul.f32 %v743, %v751
        %v757 = vmul.f32 %v745, %v753
        %760 = vrot.lane.b32.xlu0 %v746, 80
        %v761 = vpop.permute.xlu0 %760
        %762 = vrot.lane.b32.xlu0 %v747, 80
        %v763 = vpop.permute.xlu0 %762
        %v766 = vmul.f32 %v743, %v761
        %v767 = vmul.f32 %v745, %v763
        %770 = vrot.lane.b32.xlu0 %v766, 16
        %v771 = vpop.permute.xlu0 %770
        %772 = vrot.lane.b32.xlu0 %v767, 16
        %v773 = vpop.permute.xlu0 %772
        %v776 = vadd.f32 %v756, %v771
        %v777 = vadd.f32 %v757, %v773
        %v778 = vtanh.pop %v776
        %v779 = vtanh.pop %v777
        %782 = vrot.lane.b32.xlu0 %v778, 16
        %v783 = vpop.permute.xlu0 %782
        %784 = vrot.lane.b32.xlu0 %v779, 16
        %v785 = vpop.permute.xlu0 %784
        %v788 = vmul.f32 %v743, %v783
        %v789 = vmul.f32 %v745, %v785
        %v792 = vrot.slane %v647, 7
        %v793 = vsel %vm653, %v792, %v646
        %v794 = vsel %vm655, %v793, 0
        %796 = vmatprep.subr.mxu0 0.0
        %797 = vmatpush1.msra.mxu0 %v640
        %798 = vmatprep.subr.mxu0 0.0
        %799 = vmatpush1.msra.mxu0 %v641
        %800 = vmatprep.subr.mxu0 0.0
        %801 = vmatpush1.msra.mxu0 0.0
        %802 = vmatprep.subr.mxu0 0.0
        %803 = vmatpush1.msra.mxu0 0.0
        %804 = vmatprep.subr.mxu0 0.0
        %805 = vmatpush1.msra.mxu0 0.0
        %806 = vmatprep.subr.mxu0 0.0
        %807 = vmatpush1.msra.mxu0 0.0
        %808 = vmatprep.subr.mxu0 0.0
        %809 = vmatpush1.msra.mxu0 0.0
        %810 = vmatprep.subr.mxu0 0.0
        %811 = vmatpush1.msra.mxu0 0.0
        %812 = vmatprep.subr.mxu0 0.0
        %813 = vmatpush1.msra.mxu0 0.0
        %814 = vmatprep.subr.mxu0 0.0
        %815 = vmatpush1.msra.mxu0 0.0
        %816 = vmatprep.subr.mxu0 0.0
        %817 = vmatpush1.msra.mxu0 0.0
        %818 = vmatprep.subr.mxu0 0.0
        %819 = vmatpush1.msra.mxu0 0.0
        %820 = vmatprep.subr.mxu0 0.0
        %821 = vmatpush1.msra.mxu0 0.0
        %822 = vmatprep.subr.mxu0 0.0
        %823 = vmatpush1.msra.mxu0 0.0
        %824 = vmatprep.subr.mxu0 0.0
        %825 = vmatpush1.msra.mxu0 0.0
        %826 = vmatprep.subr.mxu0 0.0
        %827 = vmatpush1.msra.mxu0 0.0
        %828 = vmatprep.subr.mxu0 0.0
        %829 = vmatpush1.msra.mxu0 0.0
        %830 = vmatprep.subr.mxu0 0.0
        %831 = vmatpush1.msra.mxu0 0.0
        %832 = vmatprep.subr.mxu0 0.0
        %833 = vmatpush1.msra.mxu0 0.0
        %834 = vmatprep.subr.mxu0 0.0
        %835 = vmatpush1.msra.mxu0 0.0
        %836 = vmatprep.subr.mxu0 0.0
        %837 = vmatpush1.msra.mxu0 0.0
        %838 = vmatprep.subr.mxu0 0.0
        %839 = vmatpush1.msra.mxu0 0.0
        %840 = vmatprep.subr.mxu0 0.0
        %841 = vmatpush1.msra.mxu0 0.0
        %842 = vmatprep.subr.mxu0 0.0
        %843 = vmatpush1.msra.mxu0 0.0
        %844 = vmatprep.subr.mxu0 0.0
        %845 = vmatpush1.msra.mxu0 0.0
        %846 = vmatprep.subr.mxu0 0.0
        %847 = vmatpush1.msra.mxu0 0.0
        %848 = vmatprep.subr.mxu0 0.0
        %849 = vmatpush1.msra.mxu0 0.0
        %850 = vmatprep.subr.mxu0 0.0
        %851 = vmatpush1.msra.mxu0 0.0
        %852 = vmatprep.subr.mxu0 0.0
        %853 = vmatpush1.msra.mxu0 0.0
        %854 = vmatprep.subr.mxu0 0.0
        %855 = vmatpush1.msra.mxu0 0.0
        %856 = vmatprep.subr.mxu0 0.0
        %857 = vmatpush1.msra.mxu0 0.0
        %858 = vmatprep.subr.mxu0 0.0
        %859 = vmatpush1.msra.mxu0 0.0
        %860 = vmatprep.mubr.f32.mxu0 0.0
        %861 = vmatmul.mubr.f32.gmra.mrb[0].mxu0 %v794
        %v862 = vpop.f32.mrb[0].mxu0
        %v863 = vadd.f32 0.0, %v862
        %v864 = vpop.f32.mrb[0].mxu0
        %865 = vdwg.mxu0
        %v867 = vrot.slane %v863, 1
        %v868 = vrot.slane %v863, 2
        %v871 = vadd.f32 %v630, %v867
        %v872 = vadd.f32 %v635, %v868
        %v873 = vxor.u32 %v871, 2147483648
        %v874 = vxor.u32 %v872, 2147483648
        %v875 = vmul.f32 %v873, 1.442695
        %v876 = vpow.pop %v875
        %v877 = vmul.f32 %v874, 1.442695
        %v878 = vpow.pop %v877
        %v879 = vadd.f32 %v876, 1.0
        %v880 = vadd.f32 %v878, 1.0
        %v881 = vrcp.pop %v879
        %v882 = vmul.f32 1.0, %v881
        %v883 = vrcp.pop %v880
        %v884 = vmul.f32 1.0, %v883
        %v885 = vtanh.pop %v871
        %v886 = vtanh.pop %v872
        %v889 = vrot.slane %v648, 1
        %v890 = vrot.slane %v649, 1
        %891 = vrot.lane.b32.xlu0 %v889, 16
        %v892 = vpop.permute.xlu0 %891
        %893 = vrot.lane.b32.xlu0 %v890, 16
        %v894 = vpop.permute.xlu0 %893
        %v897 = vmul.f32 %v882, %v892
        %v898 = vmul.f32 %v884, %v894
        %901 = vrot.lane.b32.xlu0 %v885, 80
        %v902 = vpop.permute.xlu0 %901
        %903 = vrot.lane.b32.xlu0 %v886, 80
        %v904 = vpop.permute.xlu0 %903
        %v907 = vmul.f32 %v882, %v902
        %v908 = vmul.f32 %v884, %v904
        %911 = vrot.lane.b32.xlu0 %v907, 16
        %v912 = vpop.permute.xlu0 %911
        %913 = vrot.lane.b32.xlu0 %v908, 16
        %v914 = vpop.permute.xlu0 %913
        %v917 = vadd.f32 %v897, %v912
        %v918 = vadd.f32 %v898, %v914
        %v919 = vtanh.pop %v917
        %v920 = vtanh.pop %v918
        %923 = vrot.lane.b32.xlu0 %v919, 16
        %v924 = vpop.permute.xlu0 %923
        %925 = vrot.lane.b32.xlu0 %v920, 16
        %v926 = vpop.permute.xlu0 %925
        %v929 = vmul.f32 %v882, %v924
        %v930 = vmul.f32 %v884, %v926
        %933 = vrot.lane.b32.xlu0 %v788, 96
        %v934 = vpop.permute.xlu0 %933
        %935 = vrot.lane.b32.xlu0 %v789, 96
        %v936 = vpop.permute.xlu0 %935
        %vm939 = vcmask 122880
        %940 = vst.msk [vmem:[%s447] sm:$0x1] %vm939, %v934
        %941 = vst.msk [vmem:[%s447 + $0x8] sm:$0x1] %vm939, %v936
        %944 = vrot.lane.b32.xlu0 %v929, 112
        %v945 = vpop.permute.xlu0 %944
        %946 = vrot.lane.b32.xlu0 %v930, 112
        %v947 = vpop.permute.xlu0 %946
        %vm950 = vcmask 261255
        %951 = vst.msk [vmem:[%s447] sm:$0x80] %vm950, %v945
        %952 = vst.msk [vmem:[%s447 + $0x8] sm:$0x80] %vm950, %v947
        %v953 = vrot.slane %v789, 7
        %v954 = vsel %vm653, %v953, %v788
        %955 = vrot.lane.b32.xlu0 %v954, 96
        %v956 = vpop.permute.xlu0 %955
        %v957 = vsel %vm655, %v956, 0
        %959 = vmatprep.subr.mxu0 0.0
        %960 = vmatpush1.msra.mxu0 %v638
        %961 = vmatprep.subr.mxu0 0.0
        %962 = vmatpush1.msra.mxu0 %v639
        %963 = vmatprep.subr.mxu0 0.0
        %964 = vmatpush1.msra.mxu0 0.0
        %965 = vmatprep.subr.mxu0 0.0
        %966 = vmatpush1.msra.mxu0 0.0
        %967 = vmatprep.subr.mxu0 0.0
        %968 = vmatpush1.msra.mxu0 0.0
        %969 = vmatprep.subr.mxu0 0.0
        %970 = vmatpush1.msra.mxu0 0.0
        %971 = vmatprep.subr.mxu0 0.0
        %972 = vmatpush1.msra.mxu0 0.0
        %973 = vmatprep.subr.mxu0 0.0
        %974 = vmatpush1.msra.mxu0 0.0
        %975 = vmatprep.subr.mxu0 0.0
        %976 = vmatpush1.msra.mxu0 0.0
        %977 = vmatprep.subr.mxu0 0.0
        %978 = vmatpush1.msra.mxu0 0.0
        %979 = vmatprep.subr.mxu0 0.0
        %980 = vmatpush1.msra.mxu0 0.0
        %981 = vmatprep.subr.mxu0 0.0
        %982 = vmatpush1.msra.mxu0 0.0
        %983 = vmatprep.subr.mxu0 0.0
        %984 = vmatpush1.msra.mxu0 0.0
        %985 = vmatprep.subr.mxu0 0.0
        %986 = vmatpush1.msra.mxu0 0.0
        %987 = vmatprep.subr.mxu0 0.0
        %988 = vmatpush1.msra.mxu0 0.0
        %989 = vmatprep.subr.mxu0 0.0
        %990 = vmatpush1.msra.mxu0 0.0
        %991 = vmatprep.subr.mxu0 0.0
        %992 = vmatpush1.msra.mxu0 0.0
        %993 = vmatprep.subr.mxu0 0.0
        %994 = vmatpush1.msra.mxu0 0.0
        %995 = vmatprep.subr.mxu0 0.0
        %996 = vmatpush1.msra.mxu0 0.0
        %997 = vmatprep.subr.mxu0 0.0
        %998 = vmatpush1.msra.mxu0 0.0
        %999 = vmatprep.subr.mxu0 0.0
        %1000 = vmatpush1.msra.mxu0 0.0
        %1001 = vmatprep.subr.mxu0 0.0
        %1002 = vmatpush1.msra.mxu0 0.0
        %1003 = vmatprep.subr.mxu0 0.0
        %1004 = vmatpush1.msra.mxu0 0.0
        %1005 = vmatprep.subr.mxu0 0.0
        %1006 = vmatpush1.msra.mxu0 0.0
        %1007 = vmatprep.subr.mxu0 0.0
        %1008 = vmatpush1.msra.mxu0 0.0
        %1009 = vmatprep.subr.mxu0 0.0
        %1010 = vmatpush1.msra.mxu0 0.0
        %1011 = vmatprep.subr.mxu0 0.0
        %1012 = vmatpush1.msra.mxu0 0.0
        %1013 = vmatprep.subr.mxu0 0.0
        %1014 = vmatpush1.msra.mxu0 0.0
        %1015 = vmatprep.subr.mxu0 0.0
        %1016 = vmatpush1.msra.mxu0 0.0
        %1017 = vmatprep.subr.mxu0 0.0
        %1018 = vmatpush1.msra.mxu0 0.0
        %1019 = vmatprep.subr.mxu0 0.0
        %1020 = vmatpush1.msra.mxu0 0.0
        %1021 = vmatprep.subr.mxu0 0.0
        %1022 = vmatpush1.msra.mxu0 0.0
        %1023 = vmatprep.mubr.f32.mxu0 0.0
        %1024 = vmatmul.mubr.f32.gmra.mrb[0].mxu0 %v957
        %v1025 = vpop.f32.mrb[0].mxu0
        %v1026 = vadd.f32 0.0, %v1025
        %v1027 = vpop.f32.mrb[0].mxu0
        %1028 = vdwg.mxu0
        %v1030 = vrot.slane %v1026, 7
        %v1033 = vadd.f32 %v544, %v1030
        %v1034 = vadd.f32 %v549, %v1026
        %v1035 = vxor.u32 %v1033, 2147483648
        %v1036 = vxor.u32 %v1034, 2147483648
        %v1037 = vmul.f32 %v1035, 1.442695
        %v1038 = vpow.pop %v1037
        %v1039 = vmul.f32 %v1036, 1.442695
        %v1040 = vpow.pop %v1039
        %v1041 = vadd.f32 %v1038, 1.0
        %v1042 = vadd.f32 %v1040, 1.0
        %v1043 = vrcp.pop %v1041
        %v1044 = vmul.f32 1.0, %v1043
        %v1045 = vrcp.pop %v1042
        %v1046 = vmul.f32 1.0, %v1045
        %v1047 = vtanh.pop %v1033
        %v1048 = vtanh.pop %v1034
        %v1051 = vrot.slane %v776, 7
        %v1052 = vrot.slane %v777, 7
        %v1055 = vmul.f32 %v1044, %v1051
        %v1056 = vmul.f32 %v1046, %v1052
        %1059 = vrot.lane.b32.xlu0 %v1047, 80
        %v1060 = vpop.permute.xlu0 %1059
        %1061 = vrot.lane.b32.xlu0 %v1048, 80
        %v1062 = vpop.permute.xlu0 %1061
        %v1065 = vmul.f32 %v1044, %v1060
        %v1066 = vmul.f32 %v1046, %v1062
        %1069 = vrot.lane.b32.xlu0 %v1065, 16
        %v1070 = vpop.permute.xlu0 %1069
        %1071 = vrot.lane.b32.xlu0 %v1066, 16
        %v1072 = vpop.permute.xlu0 %1071
        %v1075 = vadd.f32 %v1055, %v1070
        %v1076 = vadd.f32 %v1056, %v1072
        %v1077 = vtanh.pop %v1075
        %v1078 = vtanh.pop %v1076
        %1081 = vrot.lane.b32.xlu0 %v1077, 16
        %v1082 = vpop.permute.xlu0 %1081
        %1083 = vrot.lane.b32.xlu0 %v1078, 16
        %v1084 = vpop.permute.xlu0 %1083
        %v1087 = vmul.f32 %v1044, %v1082
        %v1088 = vmul.f32 %v1046, %v1084
        %v1089 = vrot.slane %v929, 7
        %v1090 = vrot.slane %v930, 6
        %v1091 = vsel %vm653, %v1090, %v1089
        %1092 = vrot.lane.b32.xlu0 %v1091, 96
        %v1093 = vpop.permute.xlu0 %1092
        %v1094 = vsel %vm655, %v1093, 0
        %1096 = vmatprep.subr.mxu0 0.0
        %1097 = vmatpush1.msra.mxu0 %v640
        %1098 = vmatprep.subr.mxu0 0.0
        %1099 = vmatpush1.msra.mxu0 %v641
        %1100 = vmatprep.subr.mxu0 0.0
        %1101 = vmatpush1.msra.mxu0 0.0
        %1102 = vmatprep.subr.mxu0 0.0
        %1103 = vmatpush1.msra.mxu0 0.0
        %1104 = vmatprep.subr.mxu0 0.0
        %1105 = vmatpush1.msra.mxu0 0.0
        %1106 = vmatprep.subr.mxu0 0.0
        %1107 = vmatpush1.msra.mxu0 0.0
        %1108 = vmatprep.subr.mxu0 0.0
        %1109 = vmatpush1.msra.mxu0 0.0
        %1110 = vmatprep.subr.mxu0 0.0
        %1111 = vmatpush1.msra.mxu0 0.0
        %1112 = vmatprep.subr.mxu0 0.0
        %1113 = vmatpush1.msra.mxu0 0.0
        %1114 = vmatprep.subr.mxu0 0.0
        %1115 = vmatpush1.msra.mxu0 0.0
        %1116 = vmatprep.subr.mxu0 0.0
        %1117 = vmatpush1.msra.mxu0 0.0
        %1118 = vmatprep.subr.mxu0 0.0
        %1119 = vmatpush1.msra.mxu0 0.0
        %1120 = vmatprep.subr.mxu0 0.0
        %1121 = vmatpush1.msra.mxu0 0.0
        %1122 = vmatprep.subr.mxu0 0.0
        %1123 = vmatpush1.msra.mxu0 0.0
        %1124 = vmatprep.subr.mxu0 0.0
        %1125 = vmatpush1.msra.mxu0 0.0
        %1126 = vmatprep.subr.mxu0 0.0
        %1127 = vmatpush1.msra.mxu0 0.0
        %1128 = vmatprep.subr.mxu0 0.0
        %1129 = vmatpush1.msra.mxu0 0.0
        %1130 = vmatprep.subr.mxu0 0.0
        %1131 = vmatpush1.msra.mxu0 0.0
        %1132 = vmatprep.subr.mxu0 0.0
        %1133 = vmatpush1.msra.mxu0 0.0
        %1134 = vmatprep.subr.mxu0 0.0
        %1135 = vmatpush1.msra.mxu0 0.0
        %1136 = vmatprep.subr.mxu0 0.0
        %1137 = vmatpush1.msra.mxu0 0.0
        %1138 = vmatprep.subr.mxu0 0.0
        %1139 = vmatpush1.msra.mxu0 0.0
        %1140 = vmatprep.subr.mxu0 0.0
        %1141 = vmatpush1.msra.mxu0 0.0
        %1142 = vmatprep.subr.mxu0 0.0
        %1143 = vmatpush1.msra.mxu0 0.0
        %1144 = vmatprep.subr.mxu0 0.0
        %1145 = vmatpush1.msra.mxu0 0.0
        %1146 = vmatprep.subr.mxu0 0.0
        %1147 = vmatpush1.msra.mxu0 0.0
        %1148 = vmatprep.subr.mxu0 0.0
        %1149 = vmatpush1.msra.mxu0 0.0
        %1150 = vmatprep.subr.mxu0 0.0
        %1151 = vmatpush1.msra.mxu0 0.0
        %1152 = vmatprep.subr.mxu0 0.0
        %1153 = vmatpush1.msra.mxu0 0.0
        %1154 = vmatprep.subr.mxu0 0.0
        %1155 = vmatpush1.msra.mxu0 0.0
        %1156 = vmatprep.subr.mxu0 0.0
        %1157 = vmatpush1.msra.mxu0 0.0
        %1158 = vmatprep.subr.mxu0 0.0
        %1159 = vmatpush1.msra.mxu0 0.0
        %1160 = vmatprep.mubr.f32.mxu0 0.0
        %1161 = vmatmul.mubr.f32.gmra.mrb[0].mxu0 %v1094
        %v1162 = vpop.f32.mrb[0].mxu0
        %v1163 = vadd.f32 0.0, %v1162
        %v1164 = vpop.f32.mrb[0].mxu0
        %1165 = vdwg.mxu0
        %v1167 = vrot.slane %v1163, 2
        %v1168 = vrot.slane %v1163, 3
        %v1171 = vadd.f32 %v630, %v1167
        %v1172 = vadd.f32 %v635, %v1168
        %v1173 = vxor.u32 %v1171, 2147483648
        %v1174 = vxor.u32 %v1172, 2147483648
        %v1175 = vmul.f32 %v1173, 1.442695
        %v1176 = vpow.pop %v1175
        %v1177 = vmul.f32 %v1174, 1.442695
        %v1178 = vpow.pop %v1177
        %v1179 = vadd.f32 %v1176, 1.0
        %v1180 = vadd.f32 %v1178, 1.0
        %v1181 = vrcp.pop %v1179
        %v1182 = vmul.f32 1.0, %v1181
        %v1183 = vrcp.pop %v1180
        %v1184 = vmul.f32 1.0, %v1183
        %v1185 = vtanh.pop %v1171
        %v1186 = vtanh.pop %v1172
        %v1189 = vrot.slane %v917, 1
        %v1190 = vrot.slane %v918, 1
        %v1193 = vmul.f32 %v1182, %v1189
        %v1194 = vmul.f32 %v1184, %v1190
        %1197 = vrot.lane.b32.xlu0 %v1185, 80
        %v1198 = vpop.permute.xlu0 %1197
        %1199 = vrot.lane.b32.xlu0 %v1186, 80
        %v1200 = vpop.permute.xlu0 %1199
        %v1203 = vmul.f32 %v1182, %v1198
        %v1204 = vmul.f32 %v1184, %v1200
        %1207 = vrot.lane.b32.xlu0 %v1203, 16
        %v1208 = vpop.permute.xlu0 %1207
        %1209 = vrot.lane.b32.xlu0 %v1204, 16
        %v1210 = vpop.permute.xlu0 %1209
        %v1213 = vadd.f32 %v1193, %v1208
        %v1214 = vadd.f32 %v1194, %v1210
        %v1215 = vtanh.pop %v1213
        %v1216 = vtanh.pop %v1214
        %1219 = vrot.lane.b32.xlu0 %v1215, 16
        %v1220 = vpop.permute.xlu0 %1219
        %1221 = vrot.lane.b32.xlu0 %v1216, 16
        %v1222 = vpop.permute.xlu0 %1221
        %v1225 = vmul.f32 %v1182, %v1220
        %v1226 = vmul.f32 %v1184, %v1222
        %1229 = vrot.lane.b32.xlu0 %v1087, 96
        %v1230 = vpop.permute.xlu0 %1229
        %1231 = vrot.lane.b32.xlu0 %v1088, 96
        %v1232 = vpop.permute.xlu0 %1231
        %vm1235 = vcmask 123905
        %1236 = vst.msk [vmem:[%s447] sm:$0x2] %vm1235, %v1230
        %1237 = vst.msk [vmem:[%s447 + $0x8] sm:$0x2] %vm1235, %v1232
        %1240 = vrot.lane.b32.xlu0 %v1225, 112
        %v1241 = vpop.permute.xlu0 %1240
        %1242 = vrot.lane.b32.xlu0 %v1226, 112
        %v1243 = vpop.permute.xlu0 %1242
        %vm1246 = vcmask 260230
        %1247 = vst.msk [vmem:[%s447] sm:$0x40] %vm1246, %v1241
        %1248 = vst.msk [vmem:[%s447 + $0x8] sm:$0x40] %vm1246, %v1243
        %v1249 = vrot.slane %v1087, 1
        %v1250 = vsel %vm653, %v1088, %v1249
        %1251 = vrot.lane.b32.xlu0 %v1250, 96
        %v1252 = vpop.permute.xlu0 %1251
        %v1253 = vsel %vm655, %v1252, 0
        %1255 = vmatprep.subr.mxu0 0.0
        %1256 = vmatpush1.msra.mxu0 %v638
        %1257 = vmatprep.subr.mxu0 0.0
        %1258 = vmatpush1.msra.mxu0 %v639
        %1259 = vmatprep.subr.mxu0 0.0
        %1260 = vmatpush1.msra.mxu0 0.0
        %1261 = vmatprep.subr.mxu0 0.0
        %1262 = vmatpush1.msra.mxu0 0.0
        %1263 = vmatprep.subr.mxu0 0.0
        %1264 = vmatpush1.msra.mxu0 0.0
        %1265 = vmatprep.subr.mxu0 0.0
        %1266 = vmatpush1.msra.mxu0 0.0
        %1267 = vmatprep.subr.mxu0 0.0
        %1268 = vmatpush1.msra.mxu0 0.0
        %1269 = vmatprep.subr.mxu0 0.0
        %1270 = vmatpush1.msra.mxu0 0.0
        %1271 = vmatprep.subr.mxu0 0.0
        %1272 = vmatpush1.msra.mxu0 0.0
        %1273 = vmatprep.subr.mxu0 0.0
        %1274 = vmatpush1.msra.mxu0 0.0
        %1275 = vmatprep.subr.mxu0 0.0
        %1276 = vmatpush1.msra.mxu0 0.0
        %1277 = vmatprep.subr.mxu0 0.0
        %1278 = vmatpush1.msra.mxu0 0.0
        %1279 = vmatprep.subr.mxu0 0.0
        %1280 = vmatpush1.msra.mxu0 0.0
        %1281 = vmatprep.subr.mxu0 0.0
        %1282 = vmatpush1.msra.mxu0 0.0
        %1283 = vmatprep.subr.mxu0 0.0
        %1284 = vmatpush1.msra.mxu0 0.0
        %1285 = vmatprep.subr.mxu0 0.0
        %1286 = vmatpush1.msra.mxu0 0.0
        %1287 = vmatprep.subr.mxu0 0.0
        %1288 = vmatpush1.msra.mxu0 0.0
        %1289 = vmatprep.subr.mxu0 0.0
        %1290 = vmatpush1.msra.mxu0 0.0
        %1291 = vmatprep.subr.mxu0 0.0
        %1292 = vmatpush1.msra.mxu0 0.0
        %1293 = vmatprep.subr.mxu0 0.0
        %1294 = vmatpush1.msra.mxu0 0.0
        %1295 = vmatprep.subr.mxu0 0.0
        %1296 = vmatpush1.msra.mxu0 0.0
        %1297 = vmatprep.subr.mxu0 0.0
        %1298 = vmatpush1.msra.mxu0 0.0
        %1299 = vmatprep.subr.mxu0 0.0
        %1300 = vmatpush1.msra.mxu0 0.0
        %1301 = vmatprep.subr.mxu0 0.0
        %1302 = vmatpush1.msra.mxu0 0.0
        %1303 = vmatprep.subr.mxu0 0.0
        %1304 = vmatpush1.msra.mxu0 0.0
        %1305 = vmatprep.subr.mxu0 0.0
        %1306 = vmatpush1.msra.mxu0 0.0
        %1307 = vmatprep.subr.mxu0 0.0
        %1308 = vmatpush1.msra.mxu0 0.0
        %1309 = vmatprep.subr.mxu0 0.0
        %1310 = vmatpush1.msra.mxu0 0.0
        %1311 = vmatprep.subr.mxu0 0.0
        %1312 = vmatpush1.msra.mxu0 0.0
        %1313 = vmatprep.subr.mxu0 0.0
        %1314 = vmatpush1.msra.mxu0 0.0
        %1315 = vmatprep.subr.mxu0 0.0
        %1316 = vmatpush1.msra.mxu0 0.0
        %1317 = vmatprep.subr.mxu0 0.0
        %1318 = vmatpush1.msra.mxu0 0.0
        %1319 = vmatprep.mubr.f32.mxu0 0.0
        %1320 = vmatmul.mubr.f32.gmra.mrb[0].mxu0 %v1253
        %v1321 = vpop.f32.mrb[0].mxu0
        %v1322 = vadd.f32 0.0, %v1321
        %v1323 = vpop.f32.mrb[0].mxu0
        %1324 = vdwg.mxu0
        %v1326 = vrot.slane %v1322, 6
        %v1327 = vrot.slane %v1322, 7
        %v1330 = vadd.f32 %v544, %v1326
        %v1331 = vadd.f32 %v549, %v1327
        %v1332 = vxor.u32 %v1330, 2147483648
        %v1333 = vxor.u32 %v1331, 2147483648
        %v1334 = vmul.f32 %v1332, 1.442695
        %v1335 = vpow.pop %v1334
        %v1336 = vmul.f32 %v1333, 1.442695
        %v1337 = vpow.pop %v1336
        %v1338 = vadd.f32 %v1335, 1.0
        %v1339 = vadd.f32 %v1337, 1.0
        %v1340 = vrcp.pop %v1338
        %v1341 = vmul.f32 1.0, %v1340
        %v1342 = vrcp.pop %v1339
        %v1343 = vmul.f32 1.0, %v1342
        %v1344 = vtanh.pop %v1330
        %v1345 = vtanh.pop %v1331
        %v1348 = vrot.slane %v1075, 7
        %v1349 = vrot.slane %v1076, 7
        %v1352 = vmul.f32 %v1341, %v1348
        %v1353 = vmul.f32 %v1343, %v1349
        %1356 = vrot.lane.b32.xlu0 %v1344, 80
        %v1357 = vpop.permute.xlu0 %1356
        %1358 = vrot.lane.b32.xlu0 %v1345, 80
        %v1359 = vpop.permute.xlu0 %1358
        %v1362 = vmul.f32 %v1341, %v1357
        %v1363 = vmul.f32 %v1343, %v1359
        %1366 = vrot.lane.b32.xlu0 %v1362, 16
        %v1367 = vpop.permute.xlu0 %1366
        %1368 = vrot.lane.b32.xlu0 %v1363, 16
        %v1369 = vpop.permute.xlu0 %1368
        %v1372 = vadd.f32 %v1352, %v1367
        %v1373 = vadd.f32 %v1353, %v1369
        %v1374 = vtanh.pop %v1372
        %v1375 = vtanh.pop %v1373
        %1378 = vrot.lane.b32.xlu0 %v1374, 16
        %v1379 = vpop.permute.xlu0 %1378
        %1380 = vrot.lane.b32.xlu0 %v1375, 16
        %v1381 = vpop.permute.xlu0 %1380
        %v1384 = vmul.f32 %v1341, %v1379
        %v1385 = vmul.f32 %v1343, %v1381
        %v1386 = vrot.slane %v1225, 6
        %v1387 = vrot.slane %v1226, 5
        %v1388 = vsel %vm653, %v1387, %v1386
        %1389 = vrot.lane.b32.xlu0 %v1388, 96
        %v1390 = vpop.permute.xlu0 %1389
        %v1391 = vsel %vm655, %v1390, 0
        %1393 = vmatprep.subr.mxu0 0.0
        %1394 = vmatpush1.msra.mxu0 %v640
        %1395 = vmatprep.subr.mxu0 0.0
        %1396 = vmatpush1.msra.mxu0 %v641
        %1397 = vmatprep.subr.mxu0 0.0
        %1398 = vmatpush1.msra.mxu0 0.0
        %1399 = vmatprep.subr.mxu0 0.0
        %1400 = vmatpush1.msra.mxu0 0.0
        %1401 = vmatprep.subr.mxu0 0.0
        %1402 = vmatpush1.msra.mxu0 0.0
        %1403 = vmatprep.subr.mxu0 0.0
        %1404 = vmatpush1.msra.mxu0 0.0
        %1405 = vmatprep.subr.mxu0 0.0
        %1406 = vmatpush1.msra.mxu0 0.0
        %1407 = vmatprep.subr.mxu0 0.0
        %1408 = vmatpush1.msra.mxu0 0.0
        %1409 = vmatprep.subr.mxu0 0.0
        %1410 = vmatpush1.msra.mxu0 0.0
        %1411 = vmatprep.subr.mxu0 0.0
        %1412 = vmatpush1.msra.mxu0 0.0
        %1413 = vmatprep.subr.mxu0 0.0
        %1414 = vmatpush1.msra.mxu0 0.0
        %1415 = vmatprep.subr.mxu0 0.0
        %1416 = vmatpush1.msra.mxu0 0.0
        %1417 = vmatprep.subr.mxu0 0.0
        %1418 = vmatpush1.msra.mxu0 0.0
        %1419 = vmatprep.subr.mxu0 0.0
        %1420 = vmatpush1.msra.mxu0 0.0
        %1421 = vmatprep.subr.mxu0 0.0
        %1422 = vmatpush1.msra.mxu0 0.0
        %1423 = vmatprep.subr.mxu0 0.0
        %1424 = vmatpush1.msra.mxu0 0.0
        %1425 = vmatprep.subr.mxu0 0.0
        %1426 = vmatpush1.msra.mxu0 0.0
        %1427 = vmatprep.subr.mxu0 0.0
        %1428 = vmatpush1.msra.mxu0 0.0
        %1429 = vmatprep.subr.mxu0 0.0
        %1430 = vmatpush1.msra.mxu0 0.0
        %1431 = vmatprep.subr.mxu0 0.0
        %1432 = vmatpush1.msra.mxu0 0.0
        %1433 = vmatprep.subr.mxu0 0.0
        %1434 = vmatpush1.msra.mxu0 0.0
        %1435 = vmatprep.subr.mxu0 0.0
        %1436 = vmatpush1.msra.mxu0 0.0
        %1437 = vmatprep.subr.mxu0 0.0
        %1438 = vmatpush1.msra.mxu0 0.0
        %1439 = vmatprep.subr.mxu0 0.0
        %1440 = vmatpush1.msra.mxu0 0.0
        %1441 = vmatprep.subr.mxu0 0.0
        %1442 = vmatpush1.msra.mxu0 0.0
        %1443 = vmatprep.subr.mxu0 0.0
        %1444 = vmatpush1.msra.mxu0 0.0
        %1445 = vmatprep.subr.mxu0 0.0
        %1446 = vmatpush1.msra.mxu0 0.0
        %1447 = vmatprep.subr.mxu0 0.0
        %1448 = vmatpush1.msra.mxu0 0.0
        %1449 = vmatprep.subr.mxu0 0.0
        %1450 = vmatpush1.msra.mxu0 0.0
        %1451 = vmatprep.subr.mxu0 0.0
        %1452 = vmatpush1.msra.mxu0 0.0
        %1453 = vmatprep.subr.mxu0 0.0
        %1454 = vmatpush1.msra.mxu0 0.0
        %1455 = vmatprep.subr.mxu0 0.0
        %1456 = vmatpush1.msra.mxu0 0.0
        %1457 = vmatprep.mubr.f32.mxu0 0.0
        %1458 = vmatmul.mubr.f32.gmra.mrb[0].mxu0 %v1391
        %v1459 = vpop.f32.mrb[0].mxu0
        %v1460 = vadd.f32 0.0, %v1459
        %v1461 = vpop.f32.mrb[0].mxu0
        %1462 = vdwg.mxu0
        %v1464 = vrot.slane %v1460, 3
        %v1465 = vrot.slane %v1460, 4
        %v1468 = vadd.f32 %v630, %v1464
        %v1469 = vadd.f32 %v635, %v1465
        %v1470 = vxor.u32 %v1468, 2147483648
        %v1471 = vxor.u32 %v1469, 2147483648
        %v1472 = vmul.f32 %v1470, 1.442695
        %v1473 = vpow.pop %v1472
        %v1474 = vmul.f32 %v1471, 1.442695
        %v1475 = vpow.pop %v1474
        %v1476 = vadd.f32 %v1473, 1.0
        %v1477 = vadd.f32 %v1475, 1.0
        %v1478 = vrcp.pop %v1476
        %v1479 = vmul.f32 1.0, %v1478
        %v1480 = vrcp.pop %v1477
        %v1481 = vmul.f32 1.0, %v1480
        %v1482 = vtanh.pop %v1468
        %v1483 = vtanh.pop %v1469
        %v1486 = vrot.slane %v1213, 1
        %v1487 = vrot.slane %v1214, 1
        %v1490 = vmul.f32 %v1479, %v1486
        %v1491 = vmul.f32 %v1481, %v1487
        %1494 = vrot.lane.b32.xlu0 %v1482, 80
        %v1495 = vpop.permute.xlu0 %1494
        %1496 = vrot.lane.b32.xlu0 %v1483, 80
        %v1497 = vpop.permute.xlu0 %1496
        %v1500 = vmul.f32 %v1479, %v1495
        %v1501 = vmul.f32 %v1481, %v1497
        %1504 = vrot.lane.b32.xlu0 %v1500, 16
        %v1505 = vpop.permute.xlu0 %1504
        %1506 = vrot.lane.b32.xlu0 %v1501, 16
        %v1507 = vpop.permute.xlu0 %1506
        %v1510 = vadd.f32 %v1490, %v1505
        %v1511 = vadd.f32 %v1491, %v1507
        %v1512 = vtanh.pop %v1510
        %v1513 = vtanh.pop %v1511
        %1516 = vrot.lane.b32.xlu0 %v1512, 16
        %v1517 = vpop.permute.xlu0 %1516
        %1518 = vrot.lane.b32.xlu0 %v1513, 16
        %v1519 = vpop.permute.xlu0 %1518
        %v1522 = vmul.f32 %v1479, %v1517
        %v1523 = vmul.f32 %v1481, %v1519
        %1526 = vrot.lane.b32.xlu0 %v1384, 96
        %v1527 = vpop.permute.xlu0 %1526
        %1528 = vrot.lane.b32.xlu0 %v1385, 96
        %v1529 = vpop.permute.xlu0 %1528
        %vm1532 = vcmask 124930
        %1533 = vst.msk [vmem:[%s447] sm:$0x4] %vm1532, %v1527
        %1534 = vst.msk [vmem:[%s447 + $0x8] sm:$0x4] %vm1532, %v1529
        %1537 = vrot.lane.b32.xlu0 %v1522, 112
        %v1538 = vpop.permute.xlu0 %1537
        %1539 = vrot.lane.b32.xlu0 %v1523, 112
        %v1540 = vpop.permute.xlu0 %1539
        %vm1543 = vcmask 259205
        %1544 = vst.msk [vmem:[%s447] sm:$0x20] %vm1543, %v1538
        %1545 = vst.msk [vmem:[%s447 + $0x8] sm:$0x20] %vm1543, %v1540
        %v1546 = vrot.slane %v1384, 2
        %v1547 = vrot.slane %v1385, 1
        %v1548 = vsel %vm653, %v1547, %v1546
        %1549 = vrot.lane.b32.xlu0 %v1548, 96
        %v1550 = vpop.permute.xlu0 %1549
        %v1551 = vsel %vm655, %v1550, 0
        %1553 = vmatprep.subr.mxu0 0.0
        %1554 = vmatpush1.msra.mxu0 %v638
        %1555 = vmatprep.subr.mxu0 0.0
        %1556 = vmatpush1.msra.mxu0 %v639
        %1557 = vmatprep.subr.mxu0 0.0
        %1558 = vmatpush1.msra.mxu0 0.0
        %1559 = vmatprep.subr.mxu0 0.0
        %1560 = vmatpush1.msra.mxu0 0.0
        %1561 = vmatprep.subr.mxu0 0.0
        %1562 = vmatpush1.msra.mxu0 0.0
        %1563 = vmatprep.subr.mxu0 0.0
        %1564 = vmatpush1.msra.mxu0 0.0
        %1565 = vmatprep.subr.mxu0 0.0
        %1566 = vmatpush1.msra.mxu0 0.0
        %1567 = vmatprep.subr.mxu0 0.0
        %1568 = vmatpush1.msra.mxu0 0.0
        %1569 = vmatprep.subr.mxu0 0.0
        %1570 = vmatpush1.msra.mxu0 0.0
        %1571 = vmatprep.subr.mxu0 0.0
        %1572 = vmatpush1.msra.mxu0 0.0
        %1573 = vmatprep.subr.mxu0 0.0
        %1574 = vmatpush1.msra.mxu0 0.0
        %1575 = vmatprep.subr.mxu0 0.0
        %1576 = vmatpush1.msra.mxu0 0.0
        %1577 = vmatprep.subr.mxu0 0.0
        %1578 = vmatpush1.msra.mxu0 0.0
        %1579 = vmatprep.subr.mxu0 0.0
        %1580 = vmatpush1.msra.mxu0 0.0
        %1581 = vmatprep.subr.mxu0 0.0
        %1582 = vmatpush1.msra.mxu0 0.0
        %1583 = vmatprep.subr.mxu0 0.0
        %1584 = vmatpush1.msra.mxu0 0.0
        %1585 = vmatprep.subr.mxu0 0.0
        %1586 = vmatpush1.msra.mxu0 0.0
        %1587 = vmatprep.subr.mxu0 0.0
        %1588 = vmatpush1.msra.mxu0 0.0
        %1589 = vmatprep.subr.mxu0 0.0
        %1590 = vmatpush1.msra.mxu0 0.0
        %1591 = vmatprep.subr.mxu0 0.0
        %1592 = vmatpush1.msra.mxu0 0.0
        %1593 = vmatprep.subr.mxu0 0.0
        %1594 = vmatpush1.msra.mxu0 0.0
        %1595 = vmatprep.subr.mxu0 0.0
        %1596 = vmatpush1.msra.mxu0 0.0
        %1597 = vmatprep.subr.mxu0 0.0
        %1598 = vmatpush1.msra.mxu0 0.0
        %1599 = vmatprep.subr.mxu0 0.0
        %1600 = vmatpush1.msra.mxu0 0.0
        %1601 = vmatprep.subr.mxu0 0.0
        %1602 = vmatpush1.msra.mxu0 0.0
        %1603 = vmatprep.subr.mxu0 0.0
        %1604 = vmatpush1.msra.mxu0 0.0
        %1605 = vmatprep.subr.mxu0 0.0
        %1606 = vmatpush1.msra.mxu0 0.0
        %1607 = vmatprep.subr.mxu0 0.0
        %1608 = vmatpush1.msra.mxu0 0.0
        %1609 = vmatprep.subr.mxu0 0.0
        %1610 = vmatpush1.msra.mxu0 0.0
        %1611 = vmatprep.subr.mxu0 0.0
        %1612 = vmatpush1.msra.mxu0 0.0
        %1613 = vmatprep.subr.mxu0 0.0
        %1614 = vmatpush1.msra.mxu0 0.0
        %1615 = vmatprep.subr.mxu0 0.0
        %1616 = vmatpush1.msra.mxu0 0.0
        %1617 = vmatprep.mubr.f32.mxu0 0.0
        %1618 = vmatmul.mubr.f32.gmra.mrb[0].mxu0 %v1551
        %v1619 = vpop.f32.mrb[0].mxu0
        %v1620 = vadd.f32 0.0, %v1619
        %v1621 = vpop.f32.mrb[0].mxu0
        %1622 = vdwg.mxu0
        %v1624 = vrot.slane %v1620, 5
        %v1625 = vrot.slane %v1620, 6
        %v1628 = vadd.f32 %v544, %v1624
        %v1629 = vadd.f32 %v549, %v1625
        %v1630 = vxor.u32 %v1628, 2147483648
        %v1631 = vxor.u32 %v1629, 2147483648
        %v1632 = vmul.f32 %v1630, 1.442695
        %v1633 = vpow.pop %v1632
        %v1634 = vmul.f32 %v1631, 1.442695
        %v1635 = vpow.pop %v1634
        %v1636 = vadd.f32 %v1633, 1.0
        %v1637 = vadd.f32 %v1635, 1.0
        %v1638 = vrcp.pop %v1636
        %v1639 = vmul.f32 1.0, %v1638
        %v1640 = vrcp.pop %v1637
        %v1641 = vmul.f32 1.0, %v1640
        %v1642 = vtanh.pop %v1628
        %v1643 = vtanh.pop %v1629
        %v1646 = vrot.slane %v1372, 7
        %v1647 = vrot.slane %v1373, 7
        %v1650 = vmul.f32 %v1639, %v1646
        %v1651 = vmul.f32 %v1641, %v1647
        %1654 = vrot.lane.b32.xlu0 %v1642, 80
        %v1655 = vpop.permute.xlu0 %1654
        %1656 = vrot.lane.b32.xlu0 %v1643, 80
        %v1657 = vpop.permute.xlu0 %1656
        %v1660 = vmul.f32 %v1639, %v1655
        %v1661 = vmul.f32 %v1641, %v1657
        %1664 = vrot.lane.b32.xlu0 %v1660, 16
        %v1665 = vpop.permute.xlu0 %1664
        %1666 = vrot.lane.b32.xlu0 %v1661, 16
        %v1667 = vpop.permute.xlu0 %1666
        %v1670 = vadd.f32 %v1650, %v1665
        %v1671 = vadd.f32 %v1651, %v1667
        %v1672 = vtanh.pop %v1670
        %v1673 = vtanh.pop %v1671
        %1676 = vrot.lane.b32.xlu0 %v1672, 16
        %v1677 = vpop.permute.xlu0 %1676
        %1678 = vrot.lane.b32.xlu0 %v1673, 16
        %v1679 = vpop.permute.xlu0 %1678
        %v1682 = vmul.f32 %v1639, %v1677
        %v1683 = vmul.f32 %v1641, %v1679
        %v1684 = vrot.slane %v1522, 5
        %v1685 = vrot.slane %v1523, 4
        %v1686 = vsel %vm653, %v1685, %v1684
        %1687 = vrot.lane.b32.xlu0 %v1686, 96
        %v1688 = vpop.permute.xlu0 %1687
        %v1689 = vsel %vm655, %v1688, 0
        %1691 = vmatprep.subr.mxu0 0.0
        %1692 = vmatpush1.msra.mxu0 %v640
        %1693 = vmatprep.subr.mxu0 0.0
        %1694 = vmatpush1.msra.mxu0 %v641
        %1695 = vmatprep.subr.mxu0 0.0
        %1696 = vmatpush1.msra.mxu0 0.0
        %1697 = vmatprep.subr.mxu0 0.0
        %1698 = vmatpush1.msra.mxu0 0.0
        %1699 = vmatprep.subr.mxu0 0.0
        %1700 = vmatpush1.msra.mxu0 0.0
        %1701 = vmatprep.subr.mxu0 0.0
        %1702 = vmatpush1.msra.mxu0 0.0
        %1703 = vmatprep.subr.mxu0 0.0
        %1704 = vmatpush1.msra.mxu0 0.0
        %1705 = vmatprep.subr.mxu0 0.0
        %1706 = vmatpush1.msra.mxu0 0.0
        %1707 = vmatprep.subr.mxu0 0.0
        %1708 = vmatpush1.msra.mxu0 0.0
        %1709 = vmatprep.subr.mxu0 0.0
        %1710 = vmatpush1.msra.mxu0 0.0
        %1711 = vmatprep.subr.mxu0 0.0
        %1712 = vmatpush1.msra.mxu0 0.0
        %1713 = vmatprep.subr.mxu0 0.0
        %1714 = vmatpush1.msra.mxu0 0.0
        %1715 = vmatprep.subr.mxu0 0.0
        %1716 = vmatpush1.msra.mxu0 0.0
        %1717 = vmatprep.subr.mxu0 0.0
        %1718 = vmatpush1.msra.mxu0 0.0
        %1719 = vmatprep.subr.mxu0 0.0
        %1720 = vmatpush1.msra.mxu0 0.0
        %1721 = vmatprep.subr.mxu0 0.0
        %1722 = vmatpush1.msra.mxu0 0.0
        %1723 = vmatprep.subr.mxu0 0.0
        %1724 = vmatpush1.msra.mxu0 0.0
        %1725 = vmatprep.subr.mxu0 0.0
        %1726 = vmatpush1.msra.mxu0 0.0
        %1727 = vmatprep.subr.mxu0 0.0
        %1728 = vmatpush1.msra.mxu0 0.0
        %1729 = vmatprep.subr.mxu0 0.0
        %1730 = vmatpush1.msra.mxu0 0.0
        %1731 = vmatprep.subr.mxu0 0.0
        %1732 = vmatpush1.msra.mxu0 0.0
        %1733 = vmatprep.subr.mxu0 0.0
        %1734 = vmatpush1.msra.mxu0 0.0
        %1735 = vmatprep.subr.mxu0 0.0
        %1736 = vmatpush1.msra.mxu0 0.0
        %1737 = vmatprep.subr.mxu0 0.0
        %1738 = vmatpush1.msra.mxu0 0.0
        %1739 = vmatprep.subr.mxu0 0.0
        %1740 = vmatpush1.msra.mxu0 0.0
        %1741 = vmatprep.subr.mxu0 0.0
        %1742 = vmatpush1.msra.mxu0 0.0
        %1743 = vmatprep.subr.mxu0 0.0
        %1744 = vmatpush1.msra.mxu0 0.0
        %1745 = vmatprep.subr.mxu0 0.0
        %1746 = vmatpush1.msra.mxu0 0.0
        %1747 = vmatprep.subr.mxu0 0.0
        %1748 = vmatpush1.msra.mxu0 0.0
        %1749 = vmatprep.subr.mxu0 0.0
        %1750 = vmatpush1.msra.mxu0 0.0
        %1751 = vmatprep.subr.mxu0 0.0
        %1752 = vmatpush1.msra.mxu0 0.0
        %1753 = vmatprep.subr.mxu0 0.0
        %1754 = vmatpush1.msra.mxu0 0.0
        %1755 = vmatprep.mubr.f32.mxu0 0.0
        %1756 = vmatmul.mubr.f32.gmra.mrb[0].mxu0 %v1689
        %v1757 = vpop.f32.mrb[0].mxu0
        %v1758 = vadd.f32 0.0, %v1757
        %v1759 = vpop.f32.mrb[0].mxu0
        %1760 = vdwg.mxu0
        %v1762 = vrot.slane %v1758, 4
        %v1763 = vrot.slane %v1758, 5
        %v1766 = vadd.f32 %v630, %v1762
        %v1767 = vadd.f32 %v635, %v1763
        %v1768 = vxor.u32 %v1766, 2147483648
        %v1769 = vxor.u32 %v1767, 2147483648
        %v1770 = vmul.f32 %v1768, 1.442695
        %v1771 = vpow.pop %v1770
        %v1772 = vmul.f32 %v1769, 1.442695
        %v1773 = vpow.pop %v1772
        %v1774 = vadd.f32 %v1771, 1.0
        %v1775 = vadd.f32 %v1773, 1.0
        %v1776 = vrcp.pop %v1774
        %v1777 = vmul.f32 1.0, %v1776
        %v1778 = vrcp.pop %v1775
        %v1779 = vmul.f32 1.0, %v1778
        %v1780 = vtanh.pop %v1766
        %v1781 = vtanh.pop %v1767
        %v1784 = vrot.slane %v1510, 1
        %v1785 = vrot.slane %v1511, 1
        %v1788 = vmul.f32 %v1777, %v1784
        %v1789 = vmul.f32 %v1779, %v1785
        %1792 = vrot.lane.b32.xlu0 %v1780, 80
        %v1793 = vpop.permute.xlu0 %1792
        %1794 = vrot.lane.b32.xlu0 %v1781, 80
        %v1795 = vpop.permute.xlu0 %1794
        %v1798 = vmul.f32 %v1777, %v1793
        %v1799 = vmul.f32 %v1779, %v1795
        %1802 = vrot.lane.b32.xlu0 %v1798, 16
        %v1803 = vpop.permute.xlu0 %1802
        %1804 = vrot.lane.b32.xlu0 %v1799, 16
        %v1805 = vpop.permute.xlu0 %1804
        %v1808 = vadd.f32 %v1788, %v1803
        %v1809 = vadd.f32 %v1789, %v1805
        %v1810 = vtanh.pop %v1808
        %v1811 = vtanh.pop %v1809
        %1814 = vrot.lane.b32.xlu0 %v1810, 16
        %v1815 = vpop.permute.xlu0 %1814
        %1816 = vrot.lane.b32.xlu0 %v1811, 16
        %v1817 = vpop.permute.xlu0 %1816
        %v1820 = vmul.f32 %v1777, %v1815
        %v1821 = vmul.f32 %v1779, %v1817
        %1824 = vrot.lane.b32.xlu0 %v1682, 96
        %v1825 = vpop.permute.xlu0 %1824
        %1826 = vrot.lane.b32.xlu0 %v1683, 96
        %v1827 = vpop.permute.xlu0 %1826
        %vm1830 = vcmask 125955
        %1831 = vst.msk [vmem:[%s447] sm:$0x8] %vm1830, %v1825
        %1832 = vst.msk [vmem:[%s447 + $0x8] sm:$0x8] %vm1830, %v1827
        %1835 = vrot.lane.b32.xlu0 %v1820, 112
        %v1836 = vpop.permute.xlu0 %1835
        %1837 = vrot.lane.b32.xlu0 %v1821, 112
        %v1838 = vpop.permute.xlu0 %1837
        %vm1841 = vcmask 258180
        %1842 = vst.msk [vmem:[%s447] sm:$0x10] %vm1841, %v1836
        %1843 = vst.msk [vmem:[%s447 + $0x8] sm:$0x10] %vm1841, %v1838
        %v1844 = vrot.slane %v1682, 3
        %v1845 = vrot.slane %v1683, 2
        %v1846 = vsel %vm653, %v1845, %v1844
        %1847 = vrot.lane.b32.xlu0 %v1846, 96
        %v1848 = vpop.permute.xlu0 %1847
        %v1849 = vsel %vm655, %v1848, 0
        %1851 = vmatprep.subr.mxu0 0.0
        %1852 = vmatpush1.msra.mxu0 %v638
        %1853 = vmatprep.subr.mxu0 0.0
        %1854 = vmatpush1.msra.mxu0 %v639
        %1855 = vmatprep.subr.mxu0 0.0
        %1856 = vmatpush1.msra.mxu0 0.0
        %1857 = vmatprep.subr.mxu0 0.0
        %1858 = vmatpush1.msra.mxu0 0.0
        %1859 = vmatprep.subr.mxu0 0.0
        %1860 = vmatpush1.msra.mxu0 0.0
        %1861 = vmatprep.subr.mxu0 0.0
        %1862 = vmatpush1.msra.mxu0 0.0
        %1863 = vmatprep.subr.mxu0 0.0
        %1864 = vmatpush1.msra.mxu0 0.0
        %1865 = vmatprep.subr.mxu0 0.0
        %1866 = vmatpush1.msra.mxu0 0.0
        %1867 = vmatprep.subr.mxu0 0.0
        %1868 = vmatpush1.msra.mxu0 0.0
        %1869 = vmatprep.subr.mxu0 0.0
        %1870 = vmatpush1.msra.mxu0 0.0
        %1871 = vmatprep.subr.mxu0 0.0
        %1872 = vmatpush1.msra.mxu0 0.0
        %1873 = vmatprep.subr.mxu0 0.0
        %1874 = vmatpush1.msra.mxu0 0.0
        %1875 = vmatprep.subr.mxu0 0.0
        %1876 = vmatpush1.msra.mxu0 0.0
        %1877 = vmatprep.subr.mxu0 0.0
        %1878 = vmatpush1.msra.mxu0 0.0
        %1879 = vmatprep.subr.mxu0 0.0
        %1880 = vmatpush1.msra.mxu0 0.0
        %1881 = vmatprep.subr.mxu0 0.0
        %1882 = vmatpush1.msra.mxu0 0.0
        %1883 = vmatprep.subr.mxu0 0.0
        %1884 = vmatpush1.msra.mxu0 0.0
        %1885 = vmatprep.subr.mxu0 0.0
        %1886 = vmatpush1.msra.mxu0 0.0
        %1887 = vmatprep.subr.mxu0 0.0
        %1888 = vmatpush1.msra.mxu0 0.0
        %1889 = vmatprep.subr.mxu0 0.0
        %1890 = vmatpush1.msra.mxu0 0.0
        %1891 = vmatprep.subr.mxu0 0.0
        %1892 = vmatpush1.msra.mxu0 0.0
        %1893 = vmatprep.subr.mxu0 0.0
        %1894 = vmatpush1.msra.mxu0 0.0
        %1895 = vmatprep.subr.mxu0 0.0
        %1896 = vmatpush1.msra.mxu0 0.0
        %1897 = vmatprep.subr.mxu0 0.0
        %1898 = vmatpush1.msra.mxu0 0.0
        %1899 = vmatprep.subr.mxu0 0.0
        %1900 = vmatpush1.msra.mxu0 0.0
        %1901 = vmatprep.subr.mxu0 0.0
        %1902 = vmatpush1.msra.mxu0 0.0
        %1903 = vmatprep.subr.mxu0 0.0
        %1904 = vmatpush1.msra.mxu0 0.0
        %1905 = vmatprep.subr.mxu0 0.0
        %1906 = vmatpush1.msra.mxu0 0.0
        %1907 = vmatprep.subr.mxu0 0.0
        %1908 = vmatpush1.msra.mxu0 0.0
        %1909 = vmatprep.subr.mxu0 0.0
        %1910 = vmatpush1.msra.mxu0 0.0
        %1911 = vmatprep.subr.mxu0 0.0
        %1912 = vmatpush1.msra.mxu0 0.0
        %1913 = vmatprep.subr.mxu0 0.0
        %1914 = vmatpush1.msra.mxu0 0.0
        %1915 = vmatprep.mubr.f32.mxu0 0.0
        %1916 = vmatmul.mubr.f32.gmra.mrb[0].mxu0 %v1849
        %v1917 = vpop.f32.mrb[0].mxu0
        %v1918 = vadd.f32 0.0, %v1917
        %v1919 = vpop.f32.mrb[0].mxu0
        %1920 = vdwg.mxu0
        %v1922 = vrot.slane %v1918, 4
        %v1923 = vrot.slane %v1918, 5
        %v1926 = vadd.f32 %v544, %v1922
        %v1927 = vadd.f32 %v549, %v1923
        %v1928 = vxor.u32 %v1926, 2147483648
        %v1929 = vxor.u32 %v1927, 2147483648
        %v1930 = vmul.f32 %v1928, 1.442695
        %v1931 = vpow.pop %v1930
        %v1932 = vmul.f32 %v1929, 1.442695
        %v1933 = vpow.pop %v1932
        %v1934 = vadd.f32 %v1931, 1.0
        %v1935 = vadd.f32 %v1933, 1.0
        %v1936 = vrcp.pop %v1934
        %v1937 = vmul.f32 1.0, %v1936
        %v1938 = vrcp.pop %v1935
        %v1939 = vmul.f32 1.0, %v1938
        %v1940 = vtanh.pop %v1926
        %v1941 = vtanh.pop %v1927
        %v1944 = vrot.slane %v1670, 7
        %v1945 = vrot.slane %v1671, 7
        %v1948 = vmul.f32 %v1937, %v1944
        %v1949 = vmul.f32 %v1939, %v1945
        %1952 = vrot.lane.b32.xlu0 %v1940, 80
        %v1953 = vpop.permute.xlu0 %1952
        %1954 = vrot.lane.b32.xlu0 %v1941, 80
        %v1955 = vpop.permute.xlu0 %1954
        %v1958 = vmul.f32 %v1937, %v1953
        %v1959 = vmul.f32 %v1939, %v1955
        %1962 = vrot.lane.b32.xlu0 %v1958, 16
        %v1963 = vpop.permute.xlu0 %1962
        %1964 = vrot.lane.b32.xlu0 %v1959, 16
        %v1965 = vpop.permute.xlu0 %1964
        %v1968 = vadd.f32 %v1948, %v1963
        %v1969 = vadd.f32 %v1949, %v1965
        %v1970 = vtanh.pop %v1968
        %v1971 = vtanh.pop %v1969
        %1974 = vrot.lane.b32.xlu0 %v1970, 16
        %v1975 = vpop.permute.xlu0 %1974
        %1976 = vrot.lane.b32.xlu0 %v1971, 16
        %v1977 = vpop.permute.xlu0 %1976
        %v1980 = vmul.f32 %v1937, %v1975
        %v1981 = vmul.f32 %v1939, %v1977
        %v1982 = vrot.slane %v1820, 4
        %v1983 = vrot.slane %v1821, 3
        %v1984 = vsel %vm653, %v1983, %v1982
        %1985 = vrot.lane.b32.xlu0 %v1984, 96
        %v1986 = vpop.permute.xlu0 %1985
        %v1987 = vsel %vm655, %v1986, 0
        %1989 = vmatprep.subr.mxu0 0.0
        %1990 = vmatpush1.msra.mxu0 %v640
        %1991 = vmatprep.subr.mxu0 0.0
        %1992 = vmatpush1.msra.mxu0 %v641
        %1993 = vmatprep.subr.mxu0 0.0
        %1994 = vmatpush1.msra.mxu0 0.0
        %1995 = vmatprep.subr.mxu0 0.0
        %1996 = vmatpush1.msra.mxu0 0.0
        %1997 = vmatprep.subr.mxu0 0.0
        %1998 = vmatpush1.msra.mxu0 0.0
        %1999 = vmatprep.subr.mxu0 0.0
        %2000 = vmatpush1.msra.mxu0 0.0
        %2001 = vmatprep.subr.mxu0 0.0
        %2002 = vmatpush1.msra.mxu0 0.0
        %2003 = vmatprep.subr.mxu0 0.0
        %2004 = vmatpush1.msra.mxu0 0.0
        %2005 = vmatprep.subr.mxu0 0.0
        %2006 = vmatpush1.msra.mxu0 0.0
        %2007 = vmatprep.subr.mxu0 0.0
        %2008 = vmatpush1.msra.mxu0 0.0
        %2009 = vmatprep.subr.mxu0 0.0
        %2010 = vmatpush1.msra.mxu0 0.0
        %2011 = vmatprep.subr.mxu0 0.0
        %2012 = vmatpush1.msra.mxu0 0.0
        %2013 = vmatprep.subr.mxu0 0.0
        %2014 = vmatpush1.msra.mxu0 0.0
        %2015 = vmatprep.subr.mxu0 0.0
        %2016 = vmatpush1.msra.mxu0 0.0
        %2017 = vmatprep.subr.mxu0 0.0
        %2018 = vmatpush1.msra.mxu0 0.0
        %2019 = vmatprep.subr.mxu0 0.0
        %2020 = vmatpush1.msra.mxu0 0.0
        %2021 = vmatprep.subr.mxu0 0.0
        %2022 = vmatpush1.msra.mxu0 0.0
        %2023 = vmatprep.subr.mxu0 0.0
        %2024 = vmatpush1.msra.mxu0 0.0
        %2025 = vmatprep.subr.mxu0 0.0
        %2026 = vmatpush1.msra.mxu0 0.0
        %2027 = vmatprep.subr.mxu0 0.0
        %2028 = vmatpush1.msra.mxu0 0.0
        %2029 = vmatprep.subr.mxu0 0.0
        %2030 = vmatpush1.msra.mxu0 0.0
        %2031 = vmatprep.subr.mxu0 0.0
        %2032 = vmatpush1.msra.mxu0 0.0
        %2033 = vmatprep.subr.mxu0 0.0
        %2034 = vmatpush1.msra.mxu0 0.0
        %2035 = vmatprep.subr.mxu0 0.0
        %2036 = vmatpush1.msra.mxu0 0.0
        %2037 = vmatprep.subr.mxu0 0.0
        %2038 = vmatpush1.msra.mxu0 0.0
        %2039 = vmatprep.subr.mxu0 0.0
        %2040 = vmatpush1.msra.mxu0 0.0
        %2041 = vmatprep.subr.mxu0 0.0
        %2042 = vmatpush1.msra.mxu0 0.0
        %2043 = vmatprep.subr.mxu0 0.0
        %2044 = vmatpush1.msra.mxu0 0.0
        %2045 = vmatprep.subr.mxu0 0.0
        %2046 = vmatpush1.msra.mxu0 0.0
        %2047 = vmatprep.subr.mxu0 0.0
        %2048 = vmatpush1.msra.mxu0 0.0
        %2049 = vmatprep.subr.mxu0 0.0
        %2050 = vmatpush1.msra.mxu0 0.0
        %2051 = vmatprep.subr.mxu0 0.0
        %2052 = vmatpush1.msra.mxu0 0.0
        %2053 = vmatprep.mubr.f32.mxu0 0.0
        %2054 = vmatmul.mubr.f32.gmra.mrb[0].mxu0 %v1987
        %v2055 = vpop.f32.mrb[0].mxu0
        %v2056 = vadd.f32 0.0, %v2055
        %v2057 = vpop.f32.mrb[0].mxu0
        %2058 = vdwg.mxu0
        %v2060 = vrot.slane %v2056, 5
        %v2061 = vrot.slane %v2056, 6
        %v2064 = vadd.f32 %v630, %v2060
        %v2065 = vadd.f32 %v635, %v2061
        %v2066 = vxor.u32 %v2064, 2147483648
        %v2067 = vxor.u32 %v2065, 2147483648
        %v2068 = vmul.f32 %v2066, 1.442695
        %v2069 = vpow.pop %v2068
        %v2070 = vmul.f32 %v2067, 1.442695
        %v2071 = vpow.pop %v2070
        %v2072 = vadd.f32 %v2069, 1.0
        %v2073 = vadd.f32 %v2071, 1.0
        %v2074 = vrcp.pop %v2072
        %v2075 = vmul.f32 1.0, %v2074
        %v2076 = vrcp.pop %v2073
        %v2077 = vmul.f32 1.0, %v2076
        %v2078 = vtanh.pop %v2064
        %v2079 = vtanh.pop %v2065
        %v2082 = vrot.slane %v1808, 1
        %v2083 = vrot.slane %v1809, 1
        %v2086 = vmul.f32 %v2075, %v2082
        %v2087 = vmul.f32 %v2077, %v2083
        %2090 = vrot.lane.b32.xlu0 %v2078, 80
        %v2091 = vpop.permute.xlu0 %2090
        %2092 = vrot.lane.b32.xlu0 %v2079, 80
        %v2093 = vpop.permute.xlu0 %2092
        %v2096 = vmul.f32 %v2075, %v2091
        %v2097 = vmul.f32 %v2077, %v2093
        %2100 = vrot.lane.b32.xlu0 %v2096, 16
        %v2101 = vpop.permute.xlu0 %2100
        %2102 = vrot.lane.b32.xlu0 %v2097, 16
        %v2103 = vpop.permute.xlu0 %2102
        %v2106 = vadd.f32 %v2086, %v2101
        %v2107 = vadd.f32 %v2087, %v2103
        %v2108 = vtanh.pop %v2106
        %v2109 = vtanh.pop %v2107
        %2112 = vrot.lane.b32.xlu0 %v2108, 16
        %v2113 = vpop.permute.xlu0 %2112
        %2114 = vrot.lane.b32.xlu0 %v2109, 16
        %v2115 = vpop.permute.xlu0 %2114
        %v2118 = vmul.f32 %v2075, %v2113
        %v2119 = vmul.f32 %v2077, %v2115
        %2122 = vrot.lane.b32.xlu0 %v1980, 96
        %v2123 = vpop.permute.xlu0 %2122
        %2124 = vrot.lane.b32.xlu0 %v1981, 96
        %v2125 = vpop.permute.xlu0 %2124
        %vm2128 = vcmask 126980
        %2129 = vst.msk [vmem:[%s447] sm:$0x10] %vm2128, %v2123
        %2130 = vst.msk [vmem:[%s447 + $0x8] sm:$0x10] %vm2128, %v2125
        %2133 = vrot.lane.b32.xlu0 %v2118, 112
        %v2134 = vpop.permute.xlu0 %2133
        %2135 = vrot.lane.b32.xlu0 %v2119, 112
        %v2136 = vpop.permute.xlu0 %2135
        %vm2139 = vcmask 257155
        %2140 = vst.msk [vmem:[%s447] sm:$0x8] %vm2139, %v2134
        %2141 = vst.msk [vmem:[%s447 + $0x8] sm:$0x8] %vm2139, %v2136
        %v2142 = vrot.slane %v1980, 4
        %v2143 = vrot.slane %v1981, 3
        %v2144 = vsel %vm653, %v2143, %v2142
        %2145 = vrot.lane.b32.xlu0 %v2144, 96
        %v2146 = vpop.permute.xlu0 %2145
        %v2147 = vsel %vm655, %v2146, 0
        %2149 = vmatprep.subr.mxu0 0.0
        %2150 = vmatpush1.msra.mxu0 %v638
        %2151 = vmatprep.subr.mxu0 0.0
        %2152 = vmatpush1.msra.mxu0 %v639
        %2153 = vmatprep.subr.mxu0 0.0
        %2154 = vmatpush1.msra.mxu0 0.0
        %2155 = vmatprep.subr.mxu0 0.0
        %2156 = vmatpush1.msra.mxu0 0.0
        %2157 = vmatprep.subr.mxu0 0.0
        %2158 = vmatpush1.msra.mxu0 0.0
        %2159 = vmatprep.subr.mxu0 0.0
        %2160 = vmatpush1.msra.mxu0 0.0
        %2161 = vmatprep.subr.mxu0 0.0
        %2162 = vmatpush1.msra.mxu0 0.0
        %2163 = vmatprep.subr.mxu0 0.0
        %2164 = vmatpush1.msra.mxu0 0.0
        %2165 = vmatprep.subr.mxu0 0.0
        %2166 = vmatpush1.msra.mxu0 0.0
        %2167 = vmatprep.subr.mxu0 0.0
        %2168 = vmatpush1.msra.mxu0 0.0
        %2169 = vmatprep.subr.mxu0 0.0
        %2170 = vmatpush1.msra.mxu0 0.0
        %2171 = vmatprep.subr.mxu0 0.0
        %2172 = vmatpush1.msra.mxu0 0.0
        %2173 = vmatprep.subr.mxu0 0.0
        %2174 = vmatpush1.msra.mxu0 0.0
        %2175 = vmatprep.subr.mxu0 0.0
        %2176 = vmatpush1.msra.mxu0 0.0
        %2177 = vmatprep.subr.mxu0 0.0
        %2178 = vmatpush1.msra.mxu0 0.0
        %2179 = vmatprep.subr.mxu0 0.0
        %2180 = vmatpush1.msra.mxu0 0.0
        %2181 = vmatprep.subr.mxu0 0.0
        %2182 = vmatpush1.msra.mxu0 0.0
        %2183 = vmatprep.subr.mxu0 0.0
        %2184 = vmatpush1.msra.mxu0 0.0
        %2185 = vmatprep.subr.mxu0 0.0
        %2186 = vmatpush1.msra.mxu0 0.0
        %2187 = vmatprep.subr.mxu0 0.0
        %2188 = vmatpush1.msra.mxu0 0.0
        %2189 = vmatprep.subr.mxu0 0.0
        %2190 = vmatpush1.msra.mxu0 0.0
        %2191 = vmatprep.subr.mxu0 0.0
        %2192 = vmatpush1.msra.mxu0 0.0
        %2193 = vmatprep.subr.mxu0 0.0
        %2194 = vmatpush1.msra.mxu0 0.0
        %2195 = vmatprep.subr.mxu0 0.0
        %2196 = vmatpush1.msra.mxu0 0.0
        %2197 = vmatprep.subr.mxu0 0.0
        %2198 = vmatpush1.msra.mxu0 0.0
        %2199 = vmatprep.subr.mxu0 0.0
        %2200 = vmatpush1.msra.mxu0 0.0
        %2201 = vmatprep.subr.mxu0 0.0
        %2202 = vmatpush1.msra.mxu0 0.0
        %2203 = vmatprep.subr.mxu0 0.0
        %2204 = vmatpush1.msra.mxu0 0.0
        %2205 = vmatprep.subr.mxu0 0.0
        %2206 = vmatpush1.msra.mxu0 0.0
        %2207 = vmatprep.subr.mxu0 0.0
        %2208 = vmatpush1.msra.mxu0 0.0
        %2209 = vmatprep.subr.mxu0 0.0
        %2210 = vmatpush1.msra.mxu0 0.0
        %2211 = vmatprep.subr.mxu0 0.0
        %2212 = vmatpush1.msra.mxu0 0.0
        %2213 = vmatprep.mubr.f32.mxu0 0.0
        %2214 = vmatmul.mubr.f32.gmra.mrb[0].mxu0 %v2147
        %v2215 = vpop.f32.mrb[0].mxu0
        %v2216 = vadd.f32 0.0, %v2215
        %v2217 = vpop.f32.mrb[0].mxu0
        %2218 = vdwg.mxu0
        %v2220 = vrot.slane %v2216, 3
        %v2221 = vrot.slane %v2216, 4
        %v2224 = vadd.f32 %v544, %v2220
        %v2225 = vadd.f32 %v549, %v2221
        %v2226 = vxor.u32 %v2224, 2147483648
        %v2227 = vxor.u32 %v2225, 2147483648
        %v2228 = vmul.f32 %v2226, 1.442695
        %v2229 = vpow.pop %v2228
        %v2230 = vmul.f32 %v2227, 1.442695
        %v2231 = vpow.pop %v2230
        %v2232 = vadd.f32 %v2229, 1.0
        %v2233 = vadd.f32 %v2231, 1.0
        %v2234 = vrcp.pop %v2232
        %v2235 = vmul.f32 1.0, %v2234
        %v2236 = vrcp.pop %v2233
        %v2237 = vmul.f32 1.0, %v2236
        %v2238 = vtanh.pop %v2224
        %v2239 = vtanh.pop %v2225
        %v2242 = vrot.slane %v1968, 7
        %v2243 = vrot.slane %v1969, 7
        %v2246 = vmul.f32 %v2235, %v2242
        %v2247 = vmul.f32 %v2237, %v2243
        %2250 = vrot.lane.b32.xlu0 %v2238, 80
        %v2251 = vpop.permute.xlu0 %2250
        %2252 = vrot.lane.b32.xlu0 %v2239, 80
        %v2253 = vpop.permute.xlu0 %2252
        %v2256 = vmul.f32 %v2235, %v2251
        %v2257 = vmul.f32 %v2237, %v2253
        %2260 = vrot.lane.b32.xlu0 %v2256, 16
        %v2261 = vpop.permute.xlu0 %2260
        %2262 = vrot.lane.b32.xlu0 %v2257, 16
        %v2263 = vpop.permute.xlu0 %2262
        %v2266 = vadd.f32 %v2246, %v2261
        %v2267 = vadd.f32 %v2247, %v2263
        %v2268 = vtanh.pop %v2266
        %v2269 = vtanh.pop %v2267
        %2272 = vrot.lane.b32.xlu0 %v2268, 16
        %v2273 = vpop.permute.xlu0 %2272
        %2274 = vrot.lane.b32.xlu0 %v2269, 16
        %v2275 = vpop.permute.xlu0 %2274
        %v2278 = vmul.f32 %v2235, %v2273
        %v2279 = vmul.f32 %v2237, %v2275
        %v2280 = vrot.slane %v2118, 3
        %v2281 = vrot.slane %v2119, 2
        %v2282 = vsel %vm653, %v2281, %v2280
        %2283 = vrot.lane.b32.xlu0 %v2282, 96
        %v2284 = vpop.permute.xlu0 %2283
        %v2285 = vsel %vm655, %v2284, 0
        %2287 = vmatprep.subr.mxu0 0.0
        %2288 = vmatpush1.msra.mxu0 %v640
        %2289 = vmatprep.subr.mxu0 0.0
        %2290 = vmatpush1.msra.mxu0 %v641
        %2291 = vmatprep.subr.mxu0 0.0
        %2292 = vmatpush1.msra.mxu0 0.0
        %2293 = vmatprep.subr.mxu0 0.0
        %2294 = vmatpush1.msra.mxu0 0.0
        %2295 = vmatprep.subr.mxu0 0.0
        %2296 = vmatpush1.msra.mxu0 0.0
        %2297 = vmatprep.subr.mxu0 0.0
        %2298 = vmatpush1.msra.mxu0 0.0
        %2299 = vmatprep.subr.mxu0 0.0
        %2300 = vmatpush1.msra.mxu0 0.0
        %2301 = vmatprep.subr.mxu0 0.0
        %2302 = vmatpush1.msra.mxu0 0.0
        %2303 = vmatprep.subr.mxu0 0.0
        %2304 = vmatpush1.msra.mxu0 0.0
        %2305 = vmatprep.subr.mxu0 0.0
        %2306 = vmatpush1.msra.mxu0 0.0
        %2307 = vmatprep.subr.mxu0 0.0
        %2308 = vmatpush1.msra.mxu0 0.0
        %2309 = vmatprep.subr.mxu0 0.0
        %2310 = vmatpush1.msra.mxu0 0.0
        %2311 = vmatprep.subr.mxu0 0.0
        %2312 = vmatpush1.msra.mxu0 0.0
        %2313 = vmatprep.subr.mxu0 0.0
        %2314 = vmatpush1.msra.mxu0 0.0
        %2315 = vmatprep.subr.mxu0 0.0
        %2316 = vmatpush1.msra.mxu0 0.0
        %2317 = vmatprep.subr.mxu0 0.0
        %2318 = vmatpush1.msra.mxu0 0.0
        %2319 = vmatprep.subr.mxu0 0.0
        %2320 = vmatpush1.msra.mxu0 0.0
        %2321 = vmatprep.subr.mxu0 0.0
        %2322 = vmatpush1.msra.mxu0 0.0
        %2323 = vmatprep.subr.mxu0 0.0
        %2324 = vmatpush1.msra.mxu0 0.0
        %2325 = vmatprep.subr.mxu0 0.0
        %2326 = vmatpush1.msra.mxu0 0.0
        %2327 = vmatprep.subr.mxu0 0.0
        %2328 = vmatpush1.msra.mxu0 0.0
        %2329 = vmatprep.subr.mxu0 0.0
        %2330 = vmatpush1.msra.mxu0 0.0
        %2331 = vmatprep.subr.mxu0 0.0
        %2332 = vmatpush1.msra.mxu0 0.0
        %2333 = vmatprep.subr.mxu0 0.0
        %2334 = vmatpush1.msra.mxu0 0.0
        %2335 = vmatprep.subr.mxu0 0.0
        %2336 = vmatpush1.msra.mxu0 0.0
        %2337 = vmatprep.subr.mxu0 0.0
        %2338 = vmatpush1.msra.mxu0 0.0
        %2339 = vmatprep.subr.mxu0 0.0
        %2340 = vmatpush1.msra.mxu0 0.0
        %2341 = vmatprep.subr.mxu0 0.0
        %2342 = vmatpush1.msra.mxu0 0.0
        %2343 = vmatprep.subr.mxu0 0.0
        %2344 = vmatpush1.msra.mxu0 0.0
        %2345 = vmatprep.subr.mxu0 0.0
        %2346 = vmatpush1.msra.mxu0 0.0
        %2347 = vmatprep.subr.mxu0 0.0
        %2348 = vmatpush1.msra.mxu0 0.0
        %2349 = vmatprep.subr.mxu0 0.0
        %2350 = vmatpush1.msra.mxu0 0.0
        %2351 = vmatprep.mubr.f32.mxu0 0.0
        %2352 = vmatmul.mubr.f32.gmra.mrb[0].mxu0 %v2285
        %v2353 = vpop.f32.mrb[0].mxu0
        %v2354 = vadd.f32 0.0, %v2353
        %v2355 = vpop.f32.mrb[0].mxu0
        %2356 = vdwg.mxu0
        %v2358 = vrot.slane %v2354, 6
        %v2359 = vrot.slane %v2354, 7
        %v2362 = vadd.f32 %v630, %v2358
        %v2363 = vadd.f32 %v635, %v2359
        %v2364 = vxor.u32 %v2362, 2147483648
        %v2365 = vxor.u32 %v2363, 2147483648
        %v2366 = vmul.f32 %v2364, 1.442695
        %v2367 = vpow.pop %v2366
        %v2368 = vmul.f32 %v2365, 1.442695
        %v2369 = vpow.pop %v2368
        %v2370 = vadd.f32 %v2367, 1.0
        %v2371 = vadd.f32 %v2369, 1.0
        %v2372 = vrcp.pop %v2370
        %v2373 = vmul.f32 1.0, %v2372
        %v2374 = vrcp.pop %v2371
        %v2375 = vmul.f32 1.0, %v2374
        %v2376 = vtanh.pop %v2362
        %v2377 = vtanh.pop %v2363
        %v2380 = vrot.slane %v2106, 1
        %v2381 = vrot.slane %v2107, 1
        %v2384 = vmul.f32 %v2373, %v2380
        %v2385 = vmul.f32 %v2375, %v2381
        %2388 = vrot.lane.b32.xlu0 %v2376, 80
        %v2389 = vpop.permute.xlu0 %2388
        %2390 = vrot.lane.b32.xlu0 %v2377, 80
        %v2391 = vpop.permute.xlu0 %2390
        %v2394 = vmul.f32 %v2373, %v2389
        %v2395 = vmul.f32 %v2375, %v2391
        %2398 = vrot.lane.b32.xlu0 %v2394, 16
        %v2399 = vpop.permute.xlu0 %2398
        %2400 = vrot.lane.b32.xlu0 %v2395, 16
        %v2401 = vpop.permute.xlu0 %2400
        %v2404 = vadd.f32 %v2384, %v2399
        %v2405 = vadd.f32 %v2385, %v2401
        %v2406 = vtanh.pop %v2404
        %v2407 = vtanh.pop %v2405
        %2410 = vrot.lane.b32.xlu0 %v2406, 16
        %v2411 = vpop.permute.xlu0 %2410
        %2412 = vrot.lane.b32.xlu0 %v2407, 16
        %v2413 = vpop.permute.xlu0 %2412
        %v2416 = vmul.f32 %v2373, %v2411
        %v2417 = vmul.f32 %v2375, %v2413
        %2420 = vrot.lane.b32.xlu0 %v2278, 96
        %v2421 = vpop.permute.xlu0 %2420
        %2422 = vrot.lane.b32.xlu0 %v2279, 96
        %v2423 = vpop.permute.xlu0 %2422
        %vm2426 = vcmask 128005
        %2427 = vst.msk [vmem:[%s447] sm:$0x20] %vm2426, %v2421
        %2428 = vst.msk [vmem:[%s447 + $0x8] sm:$0x20] %vm2426, %v2423
        %2431 = vrot.lane.b32.xlu0 %v2416, 112
        %v2432 = vpop.permute.xlu0 %2431
        %2433 = vrot.lane.b32.xlu0 %v2417, 112
        %v2434 = vpop.permute.xlu0 %2433
        %vm2437 = vcmask 256130
        %2438 = vst.msk [vmem:[%s447] sm:$0x4] %vm2437, %v2432
        %2439 = vst.msk [vmem:[%s447 + $0x8] sm:$0x4] %vm2437, %v2434
        %v2440 = vrot.slane %v2278, 5
        %v2441 = vrot.slane %v2279, 4
        %v2442 = vsel %vm653, %v2441, %v2440
        %2443 = vrot.lane.b32.xlu0 %v2442, 96
        %v2444 = vpop.permute.xlu0 %2443
        %v2445 = vsel %vm655, %v2444, 0
        %2447 = vmatprep.subr.mxu0 0.0
        %2448 = vmatpush1.msra.mxu0 %v638
        %2449 = vmatprep.subr.mxu0 0.0
        %2450 = vmatpush1.msra.mxu0 %v639
        %2451 = vmatprep.subr.mxu0 0.0
        %2452 = vmatpush1.msra.mxu0 0.0
        %2453 = vmatprep.subr.mxu0 0.0
        %2454 = vmatpush1.msra.mxu0 0.0
        %2455 = vmatprep.subr.mxu0 0.0
        %2456 = vmatpush1.msra.mxu0 0.0
        %2457 = vmatprep.subr.mxu0 0.0
        %2458 = vmatpush1.msra.mxu0 0.0
        %2459 = vmatprep.subr.mxu0 0.0
        %2460 = vmatpush1.msra.mxu0 0.0
        %2461 = vmatprep.subr.mxu0 0.0
        %2462 = vmatpush1.msra.mxu0 0.0
        %2463 = vmatprep.subr.mxu0 0.0
        %2464 = vmatpush1.msra.mxu0 0.0
        %2465 = vmatprep.subr.mxu0 0.0
        %2466 = vmatpush1.msra.mxu0 0.0
        %2467 = vmatprep.subr.mxu0 0.0
        %2468 = vmatpush1.msra.mxu0 0.0
        %2469 = vmatprep.subr.mxu0 0.0
        %2470 = vmatpush1.msra.mxu0 0.0
        %2471 = vmatprep.subr.mxu0 0.0
        %2472 = vmatpush1.msra.mxu0 0.0
        %2473 = vmatprep.subr.mxu0 0.0
        %2474 = vmatpush1.msra.mxu0 0.0
        %2475 = vmatprep.subr.mxu0 0.0
        %2476 = vmatpush1.msra.mxu0 0.0
        %2477 = vmatprep.subr.mxu0 0.0
        %2478 = vmatpush1.msra.mxu0 0.0
        %2479 = vmatprep.subr.mxu0 0.0
        %2480 = vmatpush1.msra.mxu0 0.0
        %2481 = vmatprep.subr.mxu0 0.0
        %2482 = vmatpush1.msra.mxu0 0.0
        %2483 = vmatprep.subr.mxu0 0.0
        %2484 = vmatpush1.msra.mxu0 0.0
        %2485 = vmatprep.subr.mxu0 0.0
        %2486 = vmatpush1.msra.mxu0 0.0
        %2487 = vmatprep.subr.mxu0 0.0
        %2488 = vmatpush1.msra.mxu0 0.0
        %2489 = vmatprep.subr.mxu0 0.0
        %2490 = vmatpush1.msra.mxu0 0.0
        %2491 = vmatprep.subr.mxu0 0.0
        %2492 = vmatpush1.msra.mxu0 0.0
        %2493 = vmatprep.subr.mxu0 0.0
        %2494 = vmatpush1.msra.mxu0 0.0
        %2495 = vmatprep.subr.mxu0 0.0
        %2496 = vmatpush1.msra.mxu0 0.0
        %2497 = vmatprep.subr.mxu0 0.0
        %2498 = vmatpush1.msra.mxu0 0.0
        %2499 = vmatprep.subr.mxu0 0.0
        %2500 = vmatpush1.msra.mxu0 0.0
        %2501 = vmatprep.subr.mxu0 0.0
        %2502 = vmatpush1.msra.mxu0 0.0
        %2503 = vmatprep.subr.mxu0 0.0
        %2504 = vmatpush1.msra.mxu0 0.0
        %2505 = vmatprep.subr.mxu0 0.0
        %2506 = vmatpush1.msra.mxu0 0.0
        %2507 = vmatprep.subr.mxu0 0.0
        %2508 = vmatpush1.msra.mxu0 0.0
        %2509 = vmatprep.subr.mxu0 0.0
        %2510 = vmatpush1.msra.mxu0 0.0
        %2511 = vmatprep.mubr.f32.mxu0 0.0
        %2512 = vmatmul.mubr.f32.gmra.mrb[0].mxu0 %v2445
        %v2513 = vpop.f32.mrb[0].mxu0
        %v2514 = vadd.f32 0.0, %v2513
        %v2515 = vpop.f32.mrb[0].mxu0
        %2516 = vdwg.mxu0
        %v2518 = vrot.slane %v2514, 2
        %v2519 = vrot.slane %v2514, 3
        %v2522 = vadd.f32 %v544, %v2518
        %v2523 = vadd.f32 %v549, %v2519
        %v2524 = vxor.u32 %v2522, 2147483648
        %v2525 = vxor.u32 %v2523, 2147483648
        %v2526 = vmul.f32 %v2524, 1.442695
        %v2527 = vpow.pop %v2526
        %v2528 = vmul.f32 %v2525, 1.442695
        %v2529 = vpow.pop %v2528
        %v2530 = vadd.f32 %v2527, 1.0
        %v2531 = vadd.f32 %v2529, 1.0
        %v2532 = vrcp.pop %v2530
        %v2533 = vmul.f32 1.0, %v2532
        %v2534 = vrcp.pop %v2531
        %v2535 = vmul.f32 1.0, %v2534
        %v2536 = vtanh.pop %v2522
        %v2537 = vtanh.pop %v2523
        %v2540 = vrot.slane %v2266, 7
        %v2541 = vrot.slane %v2267, 7
        %v2544 = vmul.f32 %v2533, %v2540
        %v2545 = vmul.f32 %v2535, %v2541
        %2548 = vrot.lane.b32.xlu0 %v2536, 80
        %v2549 = vpop.permute.xlu0 %2548
        %2550 = vrot.lane.b32.xlu0 %v2537, 80
        %v2551 = vpop.permute.xlu0 %2550
        %v2554 = vmul.f32 %v2533, %v2549
        %v2555 = vmul.f32 %v2535, %v2551
        %2558 = vrot.lane.b32.xlu0 %v2554, 16
        %v2559 = vpop.permute.xlu0 %2558
        %2560 = vrot.lane.b32.xlu0 %v2555, 16
        %v2561 = vpop.permute.xlu0 %2560
        %v2564 = vadd.f32 %v2544, %v2559
        %v2565 = vadd.f32 %v2545, %v2561
        %v2566 = vtanh.pop %v2564
        %v2567 = vtanh.pop %v2565
        %2570 = vrot.lane.b32.xlu0 %v2566, 16
        %v2571 = vpop.permute.xlu0 %2570
        %2572 = vrot.lane.b32.xlu0 %v2567, 16
        %v2573 = vpop.permute.xlu0 %2572
        %v2576 = vmul.f32 %v2533, %v2571
        %v2577 = vmul.f32 %v2535, %v2573
        %v2578 = vrot.slane %v2416, 2
        %v2579 = vrot.slane %v2417, 1
        %v2580 = vsel %vm653, %v2579, %v2578
        %2581 = vrot.lane.b32.xlu0 %v2580, 96
        %v2582 = vpop.permute.xlu0 %2581
        %v2583 = vsel %vm655, %v2582, 0
        %2585 = vmatprep.subr.mxu0 0.0
        %2586 = vmatpush1.msra.mxu0 %v640
        %2587 = vmatprep.subr.mxu0 0.0
        %2588 = vmatpush1.msra.mxu0 %v641
        %2589 = vmatprep.subr.mxu0 0.0
        %2590 = vmatpush1.msra.mxu0 0.0
        %2591 = vmatprep.subr.mxu0 0.0
        %2592 = vmatpush1.msra.mxu0 0.0
        %2593 = vmatprep.subr.mxu0 0.0
        %2594 = vmatpush1.msra.mxu0 0.0
        %2595 = vmatprep.subr.mxu0 0.0
        %2596 = vmatpush1.msra.mxu0 0.0
        %2597 = vmatprep.subr.mxu0 0.0
        %2598 = vmatpush1.msra.mxu0 0.0
        %2599 = vmatprep.subr.mxu0 0.0
        %2600 = vmatpush1.msra.mxu0 0.0
        %2601 = vmatprep.subr.mxu0 0.0
        %2602 = vmatpush1.msra.mxu0 0.0
        %2603 = vmatprep.subr.mxu0 0.0
        %2604 = vmatpush1.msra.mxu0 0.0
        %2605 = vmatprep.subr.mxu0 0.0
        %2606 = vmatpush1.msra.mxu0 0.0
        %2607 = vmatprep.subr.mxu0 0.0
        %2608 = vmatpush1.msra.mxu0 0.0
        %2609 = vmatprep.subr.mxu0 0.0
        %2610 = vmatpush1.msra.mxu0 0.0
        %2611 = vmatprep.subr.mxu0 0.0
        %2612 = vmatpush1.msra.mxu0 0.0
        %2613 = vmatprep.subr.mxu0 0.0
        %2614 = vmatpush1.msra.mxu0 0.0
        %2615 = vmatprep.subr.mxu0 0.0
        %2616 = vmatpush1.msra.mxu0 0.0
        %2617 = vmatprep.subr.mxu0 0.0
        %2618 = vmatpush1.msra.mxu0 0.0
        %2619 = vmatprep.subr.mxu0 0.0
        %2620 = vmatpush1.msra.mxu0 0.0
        %2621 = vmatprep.subr.mxu0 0.0
        %2622 = vmatpush1.msra.mxu0 0.0
        %2623 = vmatprep.subr.mxu0 0.0
        %2624 = vmatpush1.msra.mxu0 0.0
        %2625 = vmatprep.subr.mxu0 0.0
        %2626 = vmatpush1.msra.mxu0 0.0
        %2627 = vmatprep.subr.mxu0 0.0
        %2628 = vmatpush1.msra.mxu0 0.0
        %2629 = vmatprep.subr.mxu0 0.0
        %2630 = vmatpush1.msra.mxu0 0.0
        %2631 = vmatprep.subr.mxu0 0.0
        %2632 = vmatpush1.msra.mxu0 0.0
        %2633 = vmatprep.subr.mxu0 0.0
        %2634 = vmatpush1.msra.mxu0 0.0
        %2635 = vmatprep.subr.mxu0 0.0
        %2636 = vmatpush1.msra.mxu0 0.0
        %2637 = vmatprep.subr.mxu0 0.0
        %2638 = vmatpush1.msra.mxu0 0.0
        %2639 = vmatprep.subr.mxu0 0.0
        %2640 = vmatpush1.msra.mxu0 0.0
        %2641 = vmatprep.subr.mxu0 0.0
        %2642 = vmatpush1.msra.mxu0 0.0
        %2643 = vmatprep.subr.mxu0 0.0
        %2644 = vmatpush1.msra.mxu0 0.0
        %2645 = vmatprep.subr.mxu0 0.0
        %2646 = vmatpush1.msra.mxu0 0.0
        %2647 = vmatprep.subr.mxu0 0.0
        %2648 = vmatpush1.msra.mxu0 0.0
        %2649 = vmatprep.mubr.f32.mxu0 0.0
        %2650 = vmatmul.mubr.f32.gmra.mrb[0].mxu0 %v2583
        %v2651 = vpop.f32.mrb[0].mxu0
        %v2652 = vadd.f32 0.0, %v2651
        %v2653 = vpop.f32.mrb[0].mxu0
        %2654 = vdwg.mxu0
        %v2656 = vrot.slane %v2652, 7
        %v2659 = vadd.f32 %v630, %v2656
        %v2660 = vadd.f32 %v635, %v2652
        %v2661 = vxor.u32 %v2659, 2147483648
        %v2662 = vxor.u32 %v2660, 2147483648
        %v2663 = vmul.f32 %v2661, 1.442695
        %v2664 = vpow.pop %v2663
        %v2665 = vmul.f32 %v2662, 1.442695
        %v2666 = vpow.pop %v2665
        %v2667 = vadd.f32 %v2664, 1.0
        %v2668 = vadd.f32 %v2666, 1.0
        %v2669 = vrcp.pop %v2667
        %v2670 = vmul.f32 1.0, %v2669
        %v2671 = vrcp.pop %v2668
        %v2672 = vmul.f32 1.0, %v2671
        %v2673 = vtanh.pop %v2659
        %v2674 = vtanh.pop %v2660
        %v2677 = vrot.slane %v2404, 1
        %v2678 = vrot.slane %v2405, 1
        %v2681 = vmul.f32 %v2670, %v2677
        %v2682 = vmul.f32 %v2672, %v2678
        %2685 = vrot.lane.b32.xlu0 %v2673, 80
        %v2686 = vpop.permute.xlu0 %2685
        %2687 = vrot.lane.b32.xlu0 %v2674, 80
        %v2688 = vpop.permute.xlu0 %2687
        %v2691 = vmul.f32 %v2670, %v2686
        %v2692 = vmul.f32 %v2672, %v2688
        %2695 = vrot.lane.b32.xlu0 %v2691, 16
        %v2696 = vpop.permute.xlu0 %2695
        %2697 = vrot.lane.b32.xlu0 %v2692, 16
        %v2698 = vpop.permute.xlu0 %2697
        %v2701 = vadd.f32 %v2681, %v2696
        %v2702 = vadd.f32 %v2682, %v2698
        %v2703 = vtanh.pop %v2701
        %v2704 = vtanh.pop %v2702
        %2707 = vrot.lane.b32.xlu0 %v2703, 16
        %v2708 = vpop.permute.xlu0 %2707
        %2709 = vrot.lane.b32.xlu0 %v2704, 16
        %v2710 = vpop.permute.xlu0 %2709
        %v2713 = vmul.f32 %v2670, %v2708
        %v2714 = vmul.f32 %v2672, %v2710
        %2717 = vrot.lane.b32.xlu0 %v2576, 96
        %v2718 = vpop.permute.xlu0 %2717
        %2719 = vrot.lane.b32.xlu0 %v2577, 96
        %v2720 = vpop.permute.xlu0 %2719
        %vm2723 = vcmask 129030
        %2724 = vst.msk [vmem:[%s447] sm:$0x40] %vm2723, %v2718
        %2725 = vst.msk [vmem:[%s447 + $0x8] sm:$0x40] %vm2723, %v2720
        %2728 = vrot.lane.b32.xlu0 %v2713, 112
        %v2729 = vpop.permute.xlu0 %2728
        %2730 = vrot.lane.b32.xlu0 %v2714, 112
        %v2731 = vpop.permute.xlu0 %2730
        %vm2734 = vcmask 255105
        %2735 = vst.msk [vmem:[%s447] sm:$0x2] %vm2734, %v2729
        %2736 = vst.msk [vmem:[%s447 + $0x8] sm:$0x2] %vm2734, %v2731
        %v2737 = vrot.slane %v2576, 6
        %v2738 = vrot.slane %v2577, 5
        %v2739 = vsel %vm653, %v2738, %v2737
        %2740 = vrot.lane.b32.xlu0 %v2739, 96
        %v2741 = vpop.permute.xlu0 %2740
        %v2742 = vsel %vm655, %v2741, 0
        %2744 = vmatprep.subr.mxu0 0.0
        %2745 = vmatpush1.msra.mxu0 %v638
        %2746 = vmatprep.subr.mxu0 0.0
        %2747 = vmatpush1.msra.mxu0 %v639
        %2748 = vmatprep.subr.mxu0 0.0
        %2749 = vmatpush1.msra.mxu0 0.0
        %2750 = vmatprep.subr.mxu0 0.0
        %2751 = vmatpush1.msra.mxu0 0.0
        %2752 = vmatprep.subr.mxu0 0.0
        %2753 = vmatpush1.msra.mxu0 0.0
        %2754 = vmatprep.subr.mxu0 0.0
        %2755 = vmatpush1.msra.mxu0 0.0
        %2756 = vmatprep.subr.mxu0 0.0
        %2757 = vmatpush1.msra.mxu0 0.0
        %2758 = vmatprep.subr.mxu0 0.0
        %2759 = vmatpush1.msra.mxu0 0.0
        %2760 = vmatprep.subr.mxu0 0.0
        %2761 = vmatpush1.msra.mxu0 0.0
        %2762 = vmatprep.subr.mxu0 0.0
        %2763 = vmatpush1.msra.mxu0 0.0
        %2764 = vmatprep.subr.mxu0 0.0
        %2765 = vmatpush1.msra.mxu0 0.0
        %2766 = vmatprep.subr.mxu0 0.0
        %2767 = vmatpush1.msra.mxu0 0.0
        %2768 = vmatprep.subr.mxu0 0.0
        %2769 = vmatpush1.msra.mxu0 0.0
        %2770 = vmatprep.subr.mxu0 0.0
        %2771 = vmatpush1.msra.mxu0 0.0
        %2772 = vmatprep.subr.mxu0 0.0
        %2773 = vmatpush1.msra.mxu0 0.0
        %2774 = vmatprep.subr.mxu0 0.0
        %2775 = vmatpush1.msra.mxu0 0.0
        %2776 = vmatprep.subr.mxu0 0.0
        %2777 = vmatpush1.msra.mxu0 0.0
        %2778 = vmatprep.subr.mxu0 0.0
        %2779 = vmatpush1.msra.mxu0 0.0
        %2780 = vmatprep.subr.mxu0 0.0
        %2781 = vmatpush1.msra.mxu0 0.0
        %2782 = vmatprep.subr.mxu0 0.0
        %2783 = vmatpush1.msra.mxu0 0.0
        %2784 = vmatprep.subr.mxu0 0.0
        %2785 = vmatpush1.msra.mxu0 0.0
        %2786 = vmatprep.subr.mxu0 0.0
        %2787 = vmatpush1.msra.mxu0 0.0
        %2788 = vmatprep.subr.mxu0 0.0
        %2789 = vmatpush1.msra.mxu0 0.0
        %2790 = vmatprep.subr.mxu0 0.0
        %2791 = vmatpush1.msra.mxu0 0.0
        %2792 = vmatprep.subr.mxu0 0.0
        %2793 = vmatpush1.msra.mxu0 0.0
        %2794 = vmatprep.subr.mxu0 0.0
        %2795 = vmatpush1.msra.mxu0 0.0
        %2796 = vmatprep.subr.mxu0 0.0
        %2797 = vmatpush1.msra.mxu0 0.0
        %2798 = vmatprep.subr.mxu0 0.0
        %2799 = vmatpush1.msra.mxu0 0.0
        %2800 = vmatprep.subr.mxu0 0.0
        %2801 = vmatpush1.msra.mxu0 0.0
        %2802 = vmatprep.subr.mxu0 0.0
        %2803 = vmatpush1.msra.mxu0 0.0
        %2804 = vmatprep.subr.mxu0 0.0
        %2805 = vmatpush1.msra.mxu0 0.0
        %2806 = vmatprep.subr.mxu0 0.0
        %2807 = vmatpush1.msra.mxu0 0.0
        %2808 = vmatprep.mubr.f32.mxu0 0.0
        %2809 = vmatmul.mubr.f32.gmra.mrb[0].mxu0 %v2742
        %v2810 = vpop.f32.mrb[0].mxu0
        %v2811 = vadd.f32 0.0, %v2810
        %v2812 = vpop.f32.mrb[0].mxu0
        %2813 = vdwg.mxu0
        %v2815 = vrot.slane %v2811, 1
        %v2816 = vrot.slane %v2811, 2
        %v2819 = vadd.f32 %v544, %v2815
        %v2820 = vadd.f32 %v549, %v2816
        %v2821 = vxor.u32 %v2819, 2147483648
        %v2822 = vxor.u32 %v2820, 2147483648
        %v2823 = vmul.f32 %v2821, 1.442695
        %v2824 = vpow.pop %v2823
        %v2825 = vmul.f32 %v2822, 1.442695
        %v2826 = vpow.pop %v2825
        %v2827 = vadd.f32 %v2824, 1.0
        %v2828 = vadd.f32 %v2826, 1.0
        %v2829 = vrcp.pop %v2827
        %v2830 = vmul.f32 1.0, %v2829
        %v2831 = vrcp.pop %v2828
        %v2832 = vmul.f32 1.0, %v2831
        %v2833 = vtanh.pop %v2819
        %v2834 = vtanh.pop %v2820
        %v2837 = vrot.slane %v2564, 7
        %v2838 = vrot.slane %v2565, 7
        %v2841 = vmul.f32 %v2830, %v2837
        %v2842 = vmul.f32 %v2832, %v2838
        %2845 = vrot.lane.b32.xlu0 %v2833, 80
        %v2846 = vpop.permute.xlu0 %2845
        %2847 = vrot.lane.b32.xlu0 %v2834, 80
        %v2848 = vpop.permute.xlu0 %2847
        %v2851 = vmul.f32 %v2830, %v2846
        %v2852 = vmul.f32 %v2832, %v2848
        %2855 = vrot.lane.b32.xlu0 %v2851, 16
        %v2856 = vpop.permute.xlu0 %2855
        %2857 = vrot.lane.b32.xlu0 %v2852, 16
        %v2858 = vpop.permute.xlu0 %2857
        %v2861 = vadd.f32 %v2841, %v2856
        %v2862 = vadd.f32 %v2842, %v2858
        %v2863 = vtanh.pop %v2861
        %v2864 = vtanh.pop %v2862
        %2867 = vrot.lane.b32.xlu0 %v2863, 16
        %v2868 = vpop.permute.xlu0 %2867
        %2869 = vrot.lane.b32.xlu0 %v2864, 16
        %v2870 = vpop.permute.xlu0 %2869
        %v2873 = vmul.f32 %v2830, %v2868
        %v2874 = vmul.f32 %v2832, %v2870
        %v2875 = vrot.slane %v2713, 1
        %v2876 = vsel %vm653, %v2714, %v2875
        %2877 = vrot.lane.b32.xlu0 %v2876, 96
        %v2878 = vpop.permute.xlu0 %2877
        %v2879 = vsel %vm655, %v2878, 0
        %2881 = vmatprep.subr.mxu0 0.0
        %2882 = vmatpush1.msra.mxu0 %v640
        %2883 = vmatprep.subr.mxu0 0.0
        %2884 = vmatpush1.msra.mxu0 %v641
        %2885 = vmatprep.subr.mxu0 0.0
        %2886 = vmatpush1.msra.mxu0 0.0
        %2887 = vmatprep.subr.mxu0 0.0
        %2888 = vmatpush1.msra.mxu0 0.0
        %2889 = vmatprep.subr.mxu0 0.0
        %2890 = vmatpush1.msra.mxu0 0.0
        %2891 = vmatprep.subr.mxu0 0.0
        %2892 = vmatpush1.msra.mxu0 0.0
        %2893 = vmatprep.subr.mxu0 0.0
        %2894 = vmatpush1.msra.mxu0 0.0
        %2895 = vmatprep.subr.mxu0 0.0
        %2896 = vmatpush1.msra.mxu0 0.0
        %2897 = vmatprep.subr.mxu0 0.0
        %2898 = vmatpush1.msra.mxu0 0.0
        %2899 = vmatprep.subr.mxu0 0.0
        %2900 = vmatpush1.msra.mxu0 0.0
        %2901 = vmatprep.subr.mxu0 0.0
        %2902 = vmatpush1.msra.mxu0 0.0
        %2903 = vmatprep.subr.mxu0 0.0
        %2904 = vmatpush1.msra.mxu0 0.0
        %2905 = vmatprep.subr.mxu0 0.0
        %2906 = vmatpush1.msra.mxu0 0.0
        %2907 = vmatprep.subr.mxu0 0.0
        %2908 = vmatpush1.msra.mxu0 0.0
        %2909 = vmatprep.subr.mxu0 0.0
        %2910 = vmatpush1.msra.mxu0 0.0
        %2911 = vmatprep.subr.mxu0 0.0
        %2912 = vmatpush1.msra.mxu0 0.0
        %2913 = vmatprep.subr.mxu0 0.0
        %2914 = vmatpush1.msra.mxu0 0.0
        %2915 = vmatprep.subr.mxu0 0.0
        %2916 = vmatpush1.msra.mxu0 0.0
        %2917 = vmatprep.subr.mxu0 0.0
        %2918 = vmatpush1.msra.mxu0 0.0
        %2919 = vmatprep.subr.mxu0 0.0
        %2920 = vmatpush1.msra.mxu0 0.0
        %2921 = vmatprep.subr.mxu0 0.0
        %2922 = vmatpush1.msra.mxu0 0.0
        %2923 = vmatprep.subr.mxu0 0.0
        %2924 = vmatpush1.msra.mxu0 0.0
        %2925 = vmatprep.subr.mxu0 0.0
        %2926 = vmatpush1.msra.mxu0 0.0
        %2927 = vmatprep.subr.mxu0 0.0
        %2928 = vmatpush1.msra.mxu0 0.0
        %2929 = vmatprep.subr.mxu0 0.0
        %2930 = vmatpush1.msra.mxu0 0.0
        %2931 = vmatprep.subr.mxu0 0.0
        %2932 = vmatpush1.msra.mxu0 0.0
        %2933 = vmatprep.subr.mxu0 0.0
        %2934 = vmatpush1.msra.mxu0 0.0
        %2935 = vmatprep.subr.mxu0 0.0
        %2936 = vmatpush1.msra.mxu0 0.0
        %2937 = vmatprep.subr.mxu0 0.0
        %2938 = vmatpush1.msra.mxu0 0.0
        %2939 = vmatprep.subr.mxu0 0.0
        %2940 = vmatpush1.msra.mxu0 0.0
        %2941 = vmatprep.subr.mxu0 0.0
        %2942 = vmatpush1.msra.mxu0 0.0
        %2943 = vmatprep.subr.mxu0 0.0
        %2944 = vmatpush1.msra.mxu0 0.0
        %2945 = vmatprep.mubr.f32.mxu0 0.0
        %2946 = vmatmul.mubr.f32.gmra.mrb[0].mxu0 %v2879
        %v2947 = vpop.f32.mrb[0].mxu0
        %v2948 = vadd.f32 0.0, %v2947
        %v2949 = vpop.f32.mrb[0].mxu0
        %2950 = vdwg.mxu0
        %v2952 = vrot.slane %v2948, 1
        %v2955 = vadd.f32 %v630, %v2948
        %v2956 = vadd.f32 %v635, %v2952
        %v2957 = vxor.u32 %v2955, 2147483648
        %v2958 = vxor.u32 %v2956, 2147483648
        %v2959 = vmul.f32 %v2957, 1.442695
        %v2960 = vpow.pop %v2959
        %v2961 = vmul.f32 %v2958, 1.442695
        %v2962 = vpow.pop %v2961
        %v2963 = vadd.f32 %v2960, 1.0
        %v2964 = vadd.f32 %v2962, 1.0
        %v2965 = vrcp.pop %v2963
        %v2966 = vmul.f32 1.0, %v2965
        %v2967 = vrcp.pop %v2964
        %v2968 = vmul.f32 1.0, %v2967
        %v2969 = vtanh.pop %v2955
        %v2970 = vtanh.pop %v2956
        %v2973 = vrot.slane %v2701, 1
        %v2974 = vrot.slane %v2702, 1
        %v2977 = vmul.f32 %v2966, %v2973
        %v2978 = vmul.f32 %v2968, %v2974
        %2981 = vrot.lane.b32.xlu0 %v2969, 80
        %v2982 = vpop.permute.xlu0 %2981
        %2983 = vrot.lane.b32.xlu0 %v2970, 80
        %v2984 = vpop.permute.xlu0 %2983
        %v2987 = vmul.f32 %v2966, %v2982
        %v2988 = vmul.f32 %v2968, %v2984
        %2991 = vrot.lane.b32.xlu0 %v2987, 16
        %v2992 = vpop.permute.xlu0 %2991
        %2993 = vrot.lane.b32.xlu0 %v2988, 16
        %v2994 = vpop.permute.xlu0 %2993
        %v2997 = vadd.f32 %v2977, %v2992
        %v2998 = vadd.f32 %v2978, %v2994
        %v2999 = vtanh.pop %v2997
        %v3000 = vtanh.pop %v2998
        %3003 = vrot.lane.b32.xlu0 %v2999, 16
        %v3004 = vpop.permute.xlu0 %3003
        %3005 = vrot.lane.b32.xlu0 %v3000, 16
        %v3006 = vpop.permute.xlu0 %3005
        %v3009 = vmul.f32 %v2966, %v3004
        %v3010 = vmul.f32 %v2968, %v3006
        %3013 = vrot.lane.b32.xlu0 %v2873, 96
        %v3014 = vpop.permute.xlu0 %3013
        %3015 = vrot.lane.b32.xlu0 %v2874, 96
        %v3016 = vpop.permute.xlu0 %3015
        %vm3019 = vcmask 130055
        %3020 = vst.msk [vmem:[%s447] sm:$0x80] %vm3019, %v3014
        %3021 = vst.msk [vmem:[%s447 + $0x8] sm:$0x80] %vm3019, %v3016
        %3024 = vrot.lane.b32.xlu0 %v3009, 112
        %v3025 = vpop.permute.xlu0 %3024
        %3026 = vrot.lane.b32.xlu0 %v3010, 112
        %v3027 = vpop.permute.xlu0 %3026
        %vm3030 = vcmask 254080
        %3031 = vst.msk [vmem:[%s447] sm:$0x1] %vm3030, %v3025
        %3032 = vst.msk [vmem:[%s447 + $0x8] sm:$0x1] %vm3030, %v3027
        %s3033 = sand.u32 %s240, 1
        %s3034 = scalar_lea.sflag [#allocation4], %s3033
        %s3035 = sand.u32 %s240, 1
        %s3036 = smul.addr %s3035, 16
        %s3037 = scalar_lea.vmem [#allocation11], %s3036
        // Predicated region
        $region77: #{tpu_custom_call.1} parent=55 // pred_check
          %p3038 = pneg %p250
        $region78: #{tpu_custom_call.1} parent=55 // pred_check_branch
          %3040 = sbr.rel (%p3038) target = $region80
        $region79: #{tpu_custom_call.1} parent=55 // pred_region
          %s3041 = smul.u32 2, %s28
          %s3043 = ssub.s32 256, 256
          %3044 = vsyncadd %s3034, %s3043
          %s3045 = smul.addr %s3041, 128
          %s3046 = scalar_lea.hbm %s9, %s3045
          %s3047 = sshll.u32 %s3037, 4
          %s3048 = int_to_ptr.vmem [resolvable:$true] %s3047
          %3053 = dma.vmem_to_hbm [thread:$0]  %s3048, 256, %s3046, %s3034, 128, 128, 8
        $region80: #{tpu_custom_call.1} parent=55 // pred_fallthru
          _
      $region56: #{tpu_custom_call.1} parent=5 // pred_fallthru
        _
      %p3054 = scmp.le.s32.totalorder 2, %s23
      // Predicated region
      $region81: #{tpu_custom_call.1} parent=5 // pred_check
        %p3055 = pneg %p3054
      $region82: #{tpu_custom_call.1} parent=5 // pred_check_branch
        %3057 = sbr.rel (%p3055) target = $region84
      $region83: #{tpu_custom_call.1} parent=5 // pred_region
        %s3058 = ssub.s32 %s23, 2
        // Predicated region
        $region85: #{tpu_custom_call.1} parent=83 // pred_check
          %p3059 = pneg %p256
        $region86: #{tpu_custom_call.1} parent=83 // pred_check_branch
          %3061 = sbr.rel (%p3059) target = $region88
        $region87: #{tpu_custom_call.1} parent=83 // pred_region
          %s3062 = sand.u32 %s241, 1
          %s3063 = scalar_lea.sflag [#allocation4], %s3062
          %s3064 = sand.u32 %s241, 1
          %s3065 = smul.addr %s3064, 16
          %s3066 = scalar_lea.vmem [#allocation11], %s3065
          %3067 = dma.done %s3063, 256
        $region88: #{tpu_custom_call.1} parent=83 // pred_fallthru
          _
      $region84: #{tpu_custom_call.1} parent=5 // pred_fallthru
        _
    $region6: #{tpu_custom_call.1} parent=1 // loop_footer
      %s27 = sadd.s32 1, %s23
    $region7: #{tpu_custom_call.1} parent=1 // loop_footer_branch
      %22 = sbr.rel target = $region3
    $region8: #{tpu_custom_call.1} parent=1 // loop_exit
      _
    %3068 = vsyncpa [#allocation3], 1
    %s3069 = scalar_lea.sflag [#allocation3], 1
    %3070 = vsyncpa %s3069, 1
    %3071 = vsyncpa [#allocation6], 1
    %3072 = vsyncpa [#allocation9], 1
    %3073 = vsyncpa [#allocation4], 1
    %s3074 = scalar_lea.sflag [#allocation4], 1
    %3075 = vsyncpa %s3074, 1

</llo_original>
